<compile_context>
chip_gen: v7x
topology: tpu7x:2x2x1
jax: 0.10.0
libtpu: 0.0.40
codegen_flags: <defaults>
</compile_context>

<pallas_src>
import functools

import jax
import jax.numpy as jnp
from jax.experimental import pallas as pl
from jax.experimental.pallas import tpu as pltpu

C_FEAT = 2560            # EfficientNet-b7 feature channels (b4 -> 1792, b2 -> 1408)
C_STEM = 64              # logical stem conv output channels
C_STEM_PAD = 128         # padded for MXU / lane alignment
CSV_HIDDEN = 250
CSV_PAD = 256            # lane-aligned csv hidden width
OUTPUT_SIZE = 1
OUT_PAD = 128            # lane-dense classifier output width (column 0 is the real logit)
BN_EPS = 1e-5
N_SPLIT = 2              # HW-reduction split (keeps both v7x TensorCores busy at B == 1)


def _round_up(x, m):
    return (x + m - 1) // m * m


# --------------------------------------------------------------------------------------
# Kernel 1: fused stem + global average pool.
#   grid = (B, N_SPLIT, n_r_half); each (b, split) accumulates its half of the HW sum
#   of the 2560-channel stem output into a resident (1,1,1,C_FEAT) block; the per-half
#   sums are scaled by 1/HW at the last step and added in the head kernel.
# --------------------------------------------------------------------------------------
def _stem_pool_kernel(patches_ref, w0_ref, b0_ref, w1_ref, b1_ref, out_ref,
                      *, hw_valid, tile_hw, n_r_half, inv_hw, need_mask):
    c = pl.program_id(1)
    r = pl.program_id(2)

    @pl.when(r == 0)
    def _():
        out_ref[...] = jnp.zeros_like(out_ref)

    x = patches_ref[0]                                                        # (TILE_HW, Kpad) bf16
    h = jnp.dot(x, w0_ref[...], preferred_element_type=jnp.float32) + b0_ref[...]
    h = h * jax.nn.sigmoid(h)                                                 # SiLU #1 (narrow) in f32

    y = jnp.dot(h.astype(w1_ref.dtype), w1_ref[...],
                preferred_element_type=jnp.float32) + b1_ref[...]
    y = y.astype(jnp.bfloat16)
    act = y * jax.nn.sigmoid(y)                                               # SiLU #2 in bf16 (EUP bf16 path)

    # Row-sum on the MXU (ones matvec); padded rows masked via the tiny ones vector.
    if need_mask:
        row0 = (c * n_r_half + r) * tile_hw
        rows = row0 + jax.lax.broadcasted_iota(jnp.int32, (1, tile_hw), 1)
        ones = jnp.where(rows < hw_valid, 1.0, 0.0).astype(jnp.bfloat16)
    else:
        ones = jnp.ones((1, tile_hw), jnp.bfloat16)
    psum = jnp.dot(ones, act, preferred_element_type=jnp.float32)             # (1, C_FEAT) f32
    out_ref[...] = out_ref[...] + psum[None, None]

    @pl.when(r == pl.num_programs(2) - 1)
    def _():
        out_ref[...] = out_ref[...] * inv_hw


# --------------------------------------------------------------------------------------
# Kernel 2: head — sum the two pooled halves, csv MLP (Linear+BN+ReLU x2, eval-mode BN
# folded, Dropout = identity) + classifier as a split matmul (identical to concat).
# --------------------------------------------------------------------------------------
def _head_kernel(pooled_ref, csv_ref,
                 w1_ref, b1_ref, s1_ref, t1_ref,
                 w2_ref, b2_ref, s2_ref, t2_ref,
                 wc_img_ref, wc_csv_ref, bc_ref,
                 out_ref):
    ph = pooled_ref[...]                                         # (N_SPLIT, B, C_FEAT)
    pooled = ph[0] + ph[1]                                       # (B, C_FEAT)
    c = csv_ref[...]                                             # (B, NCOL_PAD)
    h1 = jnp.dot(c, w1_ref[...], preferred_element_type=jnp.float32) + b1_ref[...]
    h1 = jnp.maximum(h1 * s1_ref[...] + t1_ref[...], 0.0)        # BN (folded) + ReLU
    h2 = jnp.dot(h1, w2_ref[...], preferred_element_type=jnp.float32) + b2_ref[...]
    h2 = jnp.maximum(h2 * s2_ref[...] + t2_ref[...], 0.0)
    out = (jnp.dot(pooled, wc_img_ref[...], preferred_element_type=jnp.float32)
           + jnp.dot(h2, wc_csv_ref[...], preferred_element_type=jnp.float32)
           + bc_ref[...])
    out_ref[...] = out                                           # (B, OUT_PAD); col 0 is the logit


def _full_block(shape):
    nd = len(shape)
    return pl.BlockSpec(shape, lambda i, _nd=nd: (0,) * _nd)


# --------------------------------------------------------------------------------------
# Parameter init (logical shapes follow the module's __init__ for b4=b2=False)
# --------------------------------------------------------------------------------------
def init_params(key, no_columns, in_ch=3):
    ks = jax.random.split(key, 12)

    def dense(k, fan_in, shape):
        return jax.random.normal(k, shape, jnp.float32) / jnp.sqrt(jnp.float32(fan_in))

    return {
        # synthetic stem (stands in for extract_features)
        "stem_w0": dense(ks[0], 9 * in_ch, (9 * in_ch, C_STEM)),
        "stem_b0": jnp.zeros((1, C_STEM), jnp.float32),
        "stem_w1": dense(ks[1], C_STEM, (C_STEM, C_FEAT)),
        "stem_b1": jnp.zeros((1, C_FEAT), jnp.float32),
        # csv branch: Linear(no_columns,250)+BN+ReLU+Dropout + Linear(250,250)+BN+ReLU+Dropout
        "csv_w1": dense(ks[2], no_columns, (no_columns, CSV_HIDDEN)),
        "csv_b1": dense(ks[3], no_columns, (1, CSV_HIDDEN)),
        "bn1_gamma": 1.0 + 0.1 * jax.random.normal(ks[4], (1, CSV_HIDDEN), jnp.float32),
        "bn1_beta": 0.1 * jax.random.normal(ks[5], (1, CSV_HIDDEN), jnp.float32),
        "bn1_mean": 0.1 * jax.random.normal(ks[6], (1, CSV_HIDDEN), jnp.float32),
        "bn1_var": jnp.abs(1.0 + 0.1 * jax.random.normal(ks[7], (1, CSV_HIDDEN), jnp.float32)),
        "csv_w2": dense(ks[8], CSV_HIDDEN, (CSV_HIDDEN, CSV_HIDDEN)),
        "csv_b2": dense(ks[9], CSV_HIDDEN, (1, CSV_HIDDEN)),
        "bn2_gamma": jnp.ones((1, CSV_HIDDEN), jnp.float32),
        "bn2_beta": jnp.zeros((1, CSV_HIDDEN), jnp.float32),
        "bn2_mean": jnp.zeros((1, CSV_HIDDEN), jnp.float32),
        "bn2_var": jnp.ones((1, CSV_HIDDEN), jnp.float32),
        # classification: Linear(2560 + 250, output_size) split into image / csv halves
        "cls_w_img": dense(ks[10], C_FEAT + CSV_HIDDEN, (C_FEAT, OUTPUT_SIZE)),
        "cls_w_csv": dense(ks[11], C_FEAT + CSV_HIDDEN, (CSV_HIDDEN, OUTPUT_SIZE)),
        "cls_b": jnp.zeros((1, OUTPUT_SIZE), jnp.float32),
    }


def _fold_bn(gamma, beta, mean, var):
    scale = gamma / jnp.sqrt(var + BN_EPS)
    shift = beta - mean * scale
    return scale, shift


def prepare_params(params, no_columns, in_ch):
    """Zero-pad to lane/MXU-aligned shapes, fold eval-mode BN, cast heavy weights to bf16."""
    k = 9 * in_ch
    k_pad = _round_up(k, 32)       # deliberately NOT padded to 128 (would 4x the patch stream)
    ncol_pad = _round_up(no_columns, 128)

    w0 = jnp.zeros((k_pad, C_STEM_PAD), jnp.float32).at[:k, :C_STEM].set(params["stem_w0"])
    b0 = jnp.zeros((1, C_STEM_PAD), jnp.float32).at[:, :C_STEM].set(params["stem_b0"])
    w1 = jnp.zeros((C_STEM_PAD, C_FEAT), jnp.float32).at[:C_STEM, :].set(params["stem_w1"])
    b1 = params["stem_b1"]

    s1, t1 = _fold_bn(params["bn1_gamma"], params["bn1_beta"], params["bn1_mean"], params["bn1_var"])
    s2, t2 = _fold_bn(params["bn2_gamma"], params["bn2_beta"], params["bn2_mean"], params["bn2_var"])

    def pad2(a, r, c):
        out = jnp.zeros((r, c), jnp.float32)
        return out.at[:a.shape[0], :a.shape[1]].set(a)

    return {
        "stem_w0": w0.astype(jnp.bfloat16),
        "stem_b0": b0,
        "stem_w1": w1.astype(jnp.bfloat16),
        "stem_b1": b1,
        "csv_w1": pad2(params["csv_w1"], ncol_pad, CSV_PAD),
        "csv_b1": pad2(params["csv_b1"], 1, CSV_PAD),
        "s1": pad2(s1, 1, CSV_PAD),
        "t1": pad2(t1, 1, CSV_PAD),
        "csv_w2": pad2(params["csv_w2"], CSV_PAD, CSV_PAD),
        "csv_b2": pad2(params["csv_b2"], 1, CSV_PAD),
        "s2": pad2(s2, 1, CSV_PAD),
        "t2": pad2(t2, 1, CSV_PAD),
        "cls_w_img": pad2(params["cls_w_img"], C_FEAT, OUT_PAD),
        "cls_w_csv": pad2(params["cls_w_csv"], CSV_PAD, OUT_PAD),
        "cls_b": pad2(params["cls_b"], 1, OUT_PAD),
    }


# --------------------------------------------------------------------------------------
# Forward wrapper (glue: layout conversion + im2col in bf16; all hot compute in Pallas)
# --------------------------------------------------------------------------------------
@jax.jit
def efficient_network_forward(image, csv_data, prepared):
    B, Cin, H, W = image.shape
    Ho, Wo = H // 2, W // 2
    HW = Ho * Wo
    K = 9 * Cin
    K_pad = prepared["stem_w0"].shape[0]
    ncol_pad = prepared["csv_w1"].shape[0]

    # NCHW -> NHWC (bf16 dominant stream); im2col for the 3x3 / stride-2 / pad-1 stem
    # conv built directly at the K-padded width (zero block inside the same concat).
    x = jnp.transpose(image, (0, 2, 3, 1)).astype(jnp.bfloat16)      # (B, H, W, Cin)
    xp = jnp.pad(x, ((0, 0), (1, 1), (1, 1), (0, 0)))
    cols = [xp[:, dh:dh + 2 * Ho:2, dw:dw + 2 * Wo:2, :]
            for dh in range(3) for dw in range(3)]
    if K_pad > K:
        cols.append(jnp.zeros((B, Ho, Wo, K_pad - K), jnp.bfloat16))
    patches = jnp.concatenate(cols, axis=-1).reshape(B, HW, K_pad)   # (B, HW, K_pad) bf16

    # Row-tile over HW; 2-way split of the reduction for v7x megacore at small B.
    tile_hw = min(1024, _round_up(HW, 8))
    n_r = _round_up(HW, tile_hw) // tile_hw
    n_r_total = _round_up(n_r, N_SPLIT)
    n_r_half = n_r_total // N_SPLIT
    hw_pad = n_r_total * tile_hw
    if hw_pad > HW:
        patches = jnp.pad(patches, ((0, 0), (0, hw_pad - HW), (0, 0)))

    stem_kernel = functools.partial(
        _stem_pool_kernel, hw_valid=HW, tile_hw=tile_hw, n_r_half=n_r_half,
        inv_hw=1.0 / HW, need_mask=(hw_pad != HW))

    cost = pl.CostEstimate(
        flops=int(2 * B * hw_pad * (K_pad * C_STEM_PAD + C_STEM_PAD * C_FEAT + C_FEAT)),
        transcendentals=int(B * hw_pad * (C_STEM_PAD + C_FEAT)),
        bytes_accessed=int(B * hw_pad * K_pad * 2
                           + K_pad * C_STEM_PAD * 2 + C_STEM_PAD * C_FEAT * 2
                           + (C_STEM_PAD + C_FEAT) * 4
                           + N_SPLIT * B * C_FEAT * 4))

    pooled_halves = pl.pallas_call(
        stem_kernel,
        out_shape=jax.ShapeDtypeStruct((N_SPLIT, B, 1, C_FEAT), jnp.float32),
        grid=(B, N_SPLIT, n_r_half),
        in_specs=[
            pl.BlockSpec((1, tile_hw, K_pad),
                         lambda b, c, r, _h=n_r_half: (b, c * _h + r, 0)),
            pl.BlockSpec((K_pad, C_STEM_PAD), lambda b, c, r: (0, 0)),
            pl.BlockSpec((1, C_STEM_PAD), lambda b, c, r: (0, 0)),
            pl.BlockSpec((C_STEM_PAD, C_FEAT), lambda b, c, r: (0, 0)),
            pl.BlockSpec((1, C_FEAT), lambda b, c, r: (0, 0)),
        ],
        out_specs=pl.BlockSpec((1, 1, 1, C_FEAT), lambda b, c, r: (c, b, 0, 0)),
        compiler_params=pltpu.CompilerParams(
            dimension_semantics=("parallel", "parallel", "arbitrary"),
            vmem_limit_bytes=40 * 1024 * 1024),
        cost_estimate=cost,
    )(patches, prepared["stem_w0"], prepared["stem_b0"],
      prepared["stem_w1"], prepared["stem_b1"])
    pooled_halves = pooled_halves.reshape(N_SPLIT, B, C_FEAT)        # two scaled half-sums

    # csv features, lane-padded with zeros (padded columns hit zero weight rows)
    csv = jnp.pad(csv_data.astype(jnp.float32),
                  ((0, 0), (0, ncol_pad - csv_data.shape[1])))

    head_args = (pooled_halves, csv,
                 prepared["csv_w1"], prepared["csv_b1"], prepared["s1"], prepared["t1"],
                 prepared["csv_w2"], prepared["csv_b2"], prepared["s2"], prepared["t2"],
                 prepared["cls_w_img"], prepared["cls_w_csv"], prepared["cls_b"])
    out = pl.pallas_call(
        _head_kernel,
        out_shape=jax.ShapeDtypeStruct((B, OUT_PAD), jnp.float32),
        grid=(1,),
        in_specs=[_full_block(a.shape) for a in head_args],
        out_specs=_full_block((B, OUT_PAD)),
        compiler_params=pltpu.CompilerParams(dimension_semantics=("arbitrary",)),
    )(*head_args)
    return out[:, :OUTPUT_SIZE]


# --------------------------------------------------------------------------------------
# Pure-JAX reference (mirrors the bf16 stream / bf16 second SiLU; everything else f32)
# --------------------------------------------------------------------------------------
def _reference(image, csv_data, params):
    HI = jax.lax.Precision.HIGHEST
    B, Cin, H, W = image.shape
    Ho, Wo = H // 2, W // 2
    x = jnp.transpose(image, (0, 2, 3, 1)).astype(jnp.bfloat16).astype(jnp.float32)
    xp = jnp.pad(x, ((0, 0), (1, 1), (1, 1), (0, 0)))
    cols = [xp[:, dh:dh + 2 * Ho:2, dw:dw + 2 * Wo:2, :] for dh in range(3) for dw in range(3)]
    patches = jnp.concatenate(cols, axis=-1).reshape(B * Ho * Wo, 9 * Cin)

    w0 = params["stem_w0"].astype(jnp.bfloat16).astype(jnp.float32)
    w1 = params["stem_w1"].astype(jnp.bfloat16).astype(jnp.float32)
    h = jnp.dot(patches, w0, precision=HI) + params["stem_b0"]
    h = h * jax.nn.sigmoid(h)
    h = h.astype(jnp.bfloat16).astype(jnp.float32)
    f = jnp.dot(h, w1, precision=HI) + params["stem_b1"]
    f_bf = f.astype(jnp.bfloat16)
    f = (f_bf * jax.nn.sigmoid(f_bf)).astype(jnp.float32)            # bf16 SiLU, as in-kernel
    pooled = f.reshape(B, Ho * Wo, C_FEAT).mean(axis=1)

    s1, t1 = _fold_bn(params["bn1_gamma"], params["bn1_beta"], params["bn1_mean"], params["bn1_var"])
    s2, t2 = _fold_bn(params["bn2_gamma"], params["bn2_beta"], params["bn2_mean"], params["bn2_var"])
    c = csv_data.astype(jnp.float32)
    c = jnp.maximum((jnp.dot(c, params["csv_w1"], precision=HI) + params["csv_b1"]) * s1 + t1, 0.0)
    c = jnp.maximum((jnp.dot(c, params["csv_w2"], precision=HI) + params["csv_b2"]) * s2 + t2, 0.0)
    cat = jnp.concatenate([pooled, c], axis=1)
    wc = jnp.concatenate([params["cls_w_img"], params["cls_w_csv"]], axis=0)
    return jnp.dot(cat, wc, precision=HI) + params["cls_b"]


if __name__ == "__main__":
    key = jax.random.PRNGKey(0)
    k_img, k_csv, k_par = jax.random.split(key, 3)

    B, Cin, H, W = 2, 3, 16, 16
    no_columns = 9                     # len(dataframe.columns) - 2 after preprocessing

    image = jax.random.normal(k_img, (B, Cin, H, W), jnp.float32)
    csv_data = jax.random.normal(k_csv, (B, no_columns), jnp.float32)
    params = init_params(k_par, no_columns, in_ch=Cin)
    prepared = prepare_params(params, no_columns, in_ch=Cin)

    out = efficient_network_forward(image, csv_data, prepared)
    out = jax.block_until_ready(out)

    ref = _reference(image, csv_data, params)
    assert out.shape == (B, OUTPUT_SIZE), out.shape
    assert jnp.allclose(out, ref, atol=2e-2, rtol=2e-2), (out, ref)

    print("KERNEL_OK")
</pallas_src>

<mosaic_0001>
module attributes {stable_mosaic.version = 11 : i64} {
  func.func @_stem_pool_kernel(%arg0: i32, %arg1: i32, %arg2: i32, %arg3: memref<1x64x32xbf16, #tpu.memory_space<vmem>>, %arg4: memref<32x128xbf16, #tpu.memory_space<vmem>>, %arg5: memref<1x128xf32, #tpu.memory_space<vmem>>, %arg6: memref<128x2560xbf16, #tpu.memory_space<vmem>>, %arg7: memref<1x2560xf32, #tpu.memory_space<vmem>>, %arg8: memref<1x1x1x2560xf32, #tpu.memory_space<vmem>>) attributes {dimension_semantics = [#tpu.dimension_semantics<parallel>, #tpu.dimension_semantics<parallel>, #tpu.dimension_semantics<arbitrary>], iteration_bounds = array<i64: 2, 2, 1>, scalar_prefetch = 0 : i64, scratch_operands = 0 : i64, tpu.core_type = #tpu.core_type<tc>, window_params = [{transform_indices = @transform_0, window_bounds = array<i64: 1, 64, 32>}, {pipeline_mode = #tpu.pipeline_mode<synchronous>, transform_indices = @transform_1, window_bounds = array<i64: 32, 128>}, {pipeline_mode = #tpu.pipeline_mode<synchronous>, transform_indices = @transform_2, window_bounds = array<i64: 1, 128>}, {pipeline_mode = #tpu.pipeline_mode<synchronous>, transform_indices = @transform_3, window_bounds = array<i64: 128, 2560>}, {pipeline_mode = #tpu.pipeline_mode<synchronous>, transform_indices = @transform_4, window_bounds = array<i64: 1, 2560>}, {transform_indices = @transform_5, window_bounds = array<i64: 1, 1, 1, 2560>}]} {
    %c0_i32 = arith.constant 0 : i32
    %0 = arith.cmpi eq, %arg2, %c0_i32 : i32
    %1 = arith.extui %0 : i1 to i32
    %c0_i32_0 = arith.constant 0 : i32
    %2 = arith.cmpi ne, %1, %c0_i32_0 : i32
    scf.if %2 {
      %cst_28 = arith.constant 0.000000e+00 : f32
      %49 = vector.broadcast %cst_28 : f32 to vector<1x1x1x2560xf32>
      %c0_29 = arith.constant 0 : index
      %c0_30 = arith.constant 0 : index
      %c0_31 = arith.constant 0 : index
      %c0_32 = arith.constant 0 : index
      %50 = vector.load %arg8[%c0_29, %c0_30, %c0_31, %c0_32] : memref<1x1x1x2560xf32, #tpu.memory_space<vmem>>, vector<1x1x1x2560xf32>
      tpu.vector_store %arg8[%c0_29, %c0_30, %c0_31, %c0_32], %49 {strides = array<i32>} : memref<1x1x1x2560xf32, #tpu.memory_space<vmem>>, vector<1x1x1x2560xf32>,
    } else {
    }
    %c0 = arith.constant 0 : index
    %c0_1 = arith.constant 0 : index
    %c0_2 = arith.constant 0 : index
    %3 = vector.load %arg3[%c0, %c0_1, %c0_2] : memref<1x64x32xbf16, #tpu.memory_space<vmem>>, vector<1x64x32xbf16>
    %4 = vector.shape_cast %3 : vector<1x64x32xbf16> to vector<64x32xbf16>
    %c0_3 = arith.constant 0 : index
    %c0_4 = arith.constant 0 : index
    %5 = vector.load %arg4[%c0_3, %c0_4] : memref<32x128xbf16, #tpu.memory_space<vmem>>, vector<32x128xbf16>
    %cst = arith.constant dense<0.000000e+00> : vector<64x128xf32>
    %6 = tpu.matmul %4, %5, %cst {dimension_numbers = #tpu.dot_dimension_numbers<[1], [0], [0], [1], [0, 0, 1, 1], [], []>} : vector<64x32xbf16>, vector<32x128xbf16>, vector<64x128xf32> -> vector<64x128xf32>
    %c0_5 = arith.constant 0 : index
    %c0_6 = arith.constant 0 : index
    %7 = vector.load %arg5[%c0_5, %c0_6] : memref<1x128xf32, #tpu.memory_space<vmem>>, vector<1x128xf32>
    %8 = vector.broadcast %7 : vector<1x128xf32> to vector<64x128xf32>
    %9 = arith.addf %6, %8 : vector<64x128xf32>
    %10 = arith.negf %9 : vector<64x128xf32>
    %11 = math.exp %10 : vector<64x128xf32>
    %cst_7 = arith.constant 1.000000e+00 : f32
    %12 = vector.broadcast %cst_7 : f32 to vector<64x128xf32>
    %13 = arith.addf %12, %11 : vector<64x128xf32>
    %14 = arith.divf %12, %13 : vector<64x128xf32>
    %15 = arith.mulf %9, %14 : vector<64x128xf32>
    %16 = arith.truncf %15 : vector<64x128xf32> to vector<64x128xbf16>
    %c0_8 = arith.constant 0 : index
    %c0_9 = arith.constant 0 : index
    %17 = vector.load %arg6[%c0_8, %c0_9] : memref<128x2560xbf16, #tpu.memory_space<vmem>>, vector<128x2560xbf16>
    %cst_10 = arith.constant dense<0.000000e+00> : vector<64x2560xf32>
    %18 = tpu.matmul %16, %17, %cst_10 {dimension_numbers = #tpu.dot_dimension_numbers<[1], [0], [0], [1], [0, 0, 1, 1], [], []>} : vector<64x128xbf16>, vector<128x2560xbf16>, vector<64x2560xf32> -> vector<64x2560xf32>
    %c0_11 = arith.constant 0 : index
    %c0_12 = arith.constant 0 : index
    %19 = vector.load %arg7[%c0_11, %c0_12] : memref<1x2560xf32, #tpu.memory_space<vmem>>, vector<1x2560xf32>
    %20 = vector.broadcast %19 : vector<1x2560xf32> to vector<64x2560xf32>
    %21 = arith.addf %18, %20 : vector<64x2560xf32>
    %22 = arith.truncf %21 : vector<64x2560xf32> to vector<64x2560xbf16>
    %23 = arith.negf %22 : vector<64x2560xbf16>
    %24 = math.exp %23 : vector<64x2560xbf16>
    %cst_13 = arith.constant 1.000000e+00 : bf16
    %25 = vector.broadcast %cst_13 : bf16 to vector<64x2560xbf16>
    %26 = arith.addf %25, %24 : vector<64x2560xbf16>
    %27 = arith.divf %25, %26 : vector<64x2560xbf16>
    %28 = arith.mulf %22, %27 : vector<64x2560xbf16>
    %c1_i32 = arith.constant 1 : i32
    %29 = arith.muli %arg1, %c1_i32 : i32
    %30 = arith.addi %29, %arg2 : i32
    %c64_i32 = arith.constant 64 : i32
    %31 = arith.muli %30, %c64_i32 : i32
    %32 = tpu.iota {dimensions = array<i32: 1>} : vector<1x64xi32>
    %33 = vector.broadcast %31 : i32 to vector<1x64xi32>
    %34 = arith.addi %33, %32 : vector<1x64xi32>
    %c64_i32_14 = arith.constant 64 : i32
    %35 = vector.broadcast %c64_i32_14 : i32 to vector<1x64xi32>
    %36 = arith.cmpi slt, %34, %35 : vector<1x64xi32>
    %cst_15 = arith.constant 1.000000e+00 : f32
    %cst_16 = arith.constant 0.000000e+00 : f32
    %37 = vector.broadcast %cst_15 : f32 to vector<1x64xf32>
    %38 = vector.broadcast %cst_16 : f32 to vector<1x64xf32>
    %39 = arith.select %36, %37, %38 : vector<1x64xi1>, vector<1x64xf32>
    %40 = arith.truncf %39 : vector<1x64xf32> to vector<1x64xbf16>
    %cst_17 = arith.constant dense<0.000000e+00> : vector<1x2560xf32>
    %41 = tpu.matmul %40, %28, %cst_17 {dimension_numbers = #tpu.dot_dimension_numbers<[1], [0], [0], [1], [0, 0, 1, 1], [], []>} : vector<1x64xbf16>, vector<64x2560xbf16>, vector<1x2560xf32> -> vector<1x2560xf32>
    %c0_18 = arith.constant 0 : index
    %c0_19 = arith.constant 0 : index
    %c0_20 = arith.constant 0 : index
    %c0_21 = arith.constant 0 : index
    %42 = vector.load %arg8[%c0_18, %c0_19, %c0_20, %c0_21] : memref<1x1x1x2560xf32, #tpu.memory_space<vmem>>, vector<1x1x1x2560xf32>
    %43 = vector.shape_cast %41 : vector<1x2560xf32> to vector<1x1x1x2560xf32>
    %44 = arith.addf %42, %43 : vector<1x1x1x2560xf32>
    %c0_22 = arith.constant 0 : index
    %c0_23 = arith.constant 0 : index
    %c0_24 = arith.constant 0 : index
    %c0_25 = arith.constant 0 : index
    %45 = vector.load %arg8[%c0_22, %c0_23, %c0_24, %c0_25] : memref<1x1x1x2560xf32, #tpu.memory_space<vmem>>, vector<1x1x1x2560xf32>
    tpu.vector_store %arg8[%c0_22, %c0_23, %c0_24, %c0_25], %44 {strides = array<i32>} : memref<1x1x1x2560xf32, #tpu.memory_space<vmem>>, vector<1x1x1x2560xf32>,
    %c0_i32_26 = arith.constant 0 : i32
    %46 = arith.cmpi eq, %arg2, %c0_i32_26 : i32
    %47 = arith.extui %46 : i1 to i32
    %c0_i32_27 = arith.constant 0 : i32
    %48 = arith.cmpi ne, %47, %c0_i32_27 : i32
    scf.if %48 {
      %c0_28 = arith.constant 0 : index
      %c0_29 = arith.constant 0 : index
      %c0_30 = arith.constant 0 : index
      %c0_31 = arith.constant 0 : index
      %49 = vector.load %arg8[%c0_28, %c0_29, %c0_30, %c0_31] : memref<1x1x1x2560xf32, #tpu.memory_space<vmem>>, vector<1x1x1x2560xf32>
      %cst_32 = arith.constant 1.562500e-02 : f32
      %50 = vector.broadcast %cst_32 : f32 to vector<1x1x1x2560xf32>
      %51 = arith.mulf %49, %50 : vector<1x1x1x2560xf32>
      %c0_33 = arith.constant 0 : index
      %c0_34 = arith.constant 0 : index
      %c0_35 = arith.constant 0 : index
      %c0_36 = arith.constant 0 : index
      %52 = vector.load %arg8[%c0_33, %c0_34, %c0_35, %c0_36] : memref<1x1x1x2560xf32, #tpu.memory_space<vmem>>, vector<1x1x1x2560xf32>
      tpu.vector_store %arg8[%c0_33, %c0_34, %c0_35, %c0_36], %51 {strides = array<i32>} : memref<1x1x1x2560xf32, #tpu.memory_space<vmem>>, vector<1x1x1x2560xf32>,
    } else {
    }
    return
  }
  func.func @transform_0(%arg0: i32, %arg1: i32, %arg2: i32) -> (i32, i32, i32) {
    %c1_i32 = arith.constant 1 : i32
    %0 = arith.muli %arg1, %c1_i32 : i32
    %1 = arith.addi %0, %arg2 : i32
    %c0_i32 = arith.constant 0 : i32
    %c0_i32_0 = arith.constant 0 : i32
    return %arg0, %1, %c0_i32 : i32, i32, i32
  }
  func.func @transform_1(%arg0: i32, %arg1: i32, %arg2: i32) -> (i32, i32) {
    %c0_i32 = arith.constant 0 : i32
    %c0_i32_0 = arith.constant 0 : i32
    %c0_i32_1 = arith.constant 0 : i32
    return %c0_i32, %c0_i32_0 : i32, i32
  }
  func.func @transform_2(%arg0: i32, %arg1: i32, %arg2: i32) -> (i32, i32) {
    %c0_i32 = arith.constant 0 : i32
    %c0_i32_0 = arith.constant 0 : i32
    %c0_i32_1 = arith.constant 0 : i32
    return %c0_i32, %c0_i32_0 : i32, i32
  }
  func.func @transform_3(%arg0: i32, %arg1: i32, %arg2: i32) -> (i32, i32) {
    %c0_i32 = arith.constant 0 : i32
    %c0_i32_0 = arith.constant 0 : i32
    %c0_i32_1 = arith.constant 0 : i32
    return %c0_i32, %c0_i32_0 : i32, i32
  }
  func.func @transform_4(%arg0: i32, %arg1: i32, %arg2: i32) -> (i32, i32) {
    %c0_i32 = arith.constant 0 : i32
    %c0_i32_0 = arith.constant 0 : i32
    %c0_i32_1 = arith.constant 0 : i32
    return %c0_i32, %c0_i32_0 : i32, i32
  }
  func.func @transform_5(%arg0: i32, %arg1: i32, %arg2: i32) -> (i32, i32, i32, i32) {
    %c0_i32 = arith.constant 0 : i32
    %c0_i32_0 = arith.constant 0 : i32
    %c0_i32_1 = arith.constant 0 : i32
    return %arg1, %arg0, %c0_i32, %c0_i32_0 : i32, i32, i32, i32
  }
}

module attributes {stable_mosaic.version = 11 : i64} {
  func.func @_head_kernel(%arg0: i32, %arg1: memref<2x2x2560xf32, #tpu.memory_space<vmem>>, %arg2: memref<2x128xf32, #tpu.memory_space<vmem>>, %arg3: memref<128x256xf32, #tpu.memory_space<vmem>>, %arg4: memref<1x256xf32, #tpu.memory_space<vmem>>, %arg5: memref<1x256xf32, #tpu.memory_space<vmem>>, %arg6: memref<1x256xf32, #tpu.memory_space<vmem>>, %arg7: memref<256x256xf32, #tpu.memory_space<vmem>>, %arg8: memref<1x256xf32, #tpu.memory_space<vmem>>, %arg9: memref<1x256xf32, #tpu.memory_space<vmem>>, %arg10: memref<1x256xf32, #tpu.memory_space<vmem>>, %arg11: memref<2560x128xf32, #tpu.memory_space<vmem>>, %arg12: memref<256x128xf32, #tpu.memory_space<vmem>>, %arg13: memref<1x128xf32, #tpu.memory_space<vmem>>, %arg14: memref<2x128xf32, #tpu.memory_space<vmem>>) attributes {dimension_semantics = [#tpu.dimension_semantics<arbitrary>], iteration_bounds = array<i64: 1>, scalar_prefetch = 0 : i64, scratch_operands = 0 : i64, tpu.core_type = #tpu.core_type<tc>, window_params = [{pipeline_mode = #tpu.pipeline_mode<synchronous>, transform_indices = @transform_0, window_bounds = array<i64: 2, 2, 2560>}, {pipeline_mode = #tpu.pipeline_mode<synchronous>, transform_indices = @transform_1, window_bounds = array<i64: 2, 128>}, {pipeline_mode = #tpu.pipeline_mode<synchronous>, transform_indices = @transform_2, window_bounds = array<i64: 128, 256>}, {pipeline_mode = #tpu.pipeline_mode<synchronous>, transform_indices = @transform_3, window_bounds = array<i64: 1, 256>}, {pipeline_mode = #tpu.pipeline_mode<synchronous>, transform_indices = @transform_4, window_bounds = array<i64: 1, 256>}, {pipeline_mode = #tpu.pipeline_mode<synchronous>, transform_indices = @transform_5, window_bounds = array<i64: 1, 256>}, {pipeline_mode = #tpu.pipeline_mode<synchronous>, transform_indices = @transform_6, window_bounds = array<i64: 256, 256>}, {pipeline_mode = #tpu.pipeline_mode<synchronous>, transform_indices = @transform_7, window_bounds = array<i64: 1, 256>}, {pipeline_mode = #tpu.pipeline_mode<synchronous>, transform_indices = @transform_8, window_bounds = array<i64: 1, 256>}, {pipeline_mode = #tpu.pipeline_mode<synchronous>, transform_indices = @transform_9, window_bounds = array<i64: 1, 256>}, {pipeline_mode = #tpu.pipeline_mode<synchronous>, transform_indices = @transform_10, window_bounds = array<i64: 2560, 128>}, {pipeline_mode = #tpu.pipeline_mode<synchronous>, transform_indices = @transform_11, window_bounds = array<i64: 256, 128>}, {pipeline_mode = #tpu.pipeline_mode<synchronous>, transform_indices = @transform_12, window_bounds = array<i64: 1, 128>}, {pipeline_mode = #tpu.pipeline_mode<synchronous>, transform_indices = @transform_13, window_bounds = array<i64: 2, 128>}]} {
    %c0 = arith.constant 0 : index
    %c0_0 = arith.constant 0 : index
    %c0_1 = arith.constant 0 : index
    %0 = vector.load %arg1[%c0, %c0_0, %c0_1] : memref<2x2x2560xf32, #tpu.memory_space<vmem>>, vector<2x2x2560xf32>
    %1 = vector.extract_strided_slice %0 {offsets = [0, 0, 0], sizes = [1, 2, 2560], strides = [1, 1, 1]} : vector<2x2x2560xf32> to vector<1x2x2560xf32>
    %2 = vector.shape_cast %1 : vector<1x2x2560xf32> to vector<2x2560xf32>
    %3 = vector.extract_strided_slice %0 {offsets = [1, 0, 0], sizes = [1, 2, 2560], strides = [1, 1, 1]} : vector<2x2x2560xf32> to vector<1x2x2560xf32>
    %4 = vector.shape_cast %3 : vector<1x2x2560xf32> to vector<2x2560xf32>
    %5 = arith.addf %2, %4 : vector<2x2560xf32>
    %c0_2 = arith.constant 0 : index
    %c0_3 = arith.constant 0 : index
    %6 = vector.load %arg2[%c0_2, %c0_3] : memref<2x128xf32, #tpu.memory_space<vmem>>, vector<2x128xf32>
    %c0_4 = arith.constant 0 : index
    %c0_5 = arith.constant 0 : index
    %7 = vector.load %arg3[%c0_4, %c0_5] : memref<128x256xf32, #tpu.memory_space<vmem>>, vector<128x256xf32>
    %cst = arith.constant dense<0.000000e+00> : vector<2x256xf32>
    %8 = tpu.matmul %6, %7, %cst {dimension_numbers = #tpu.dot_dimension_numbers<[1], [0], [0], [1], [0, 0, 1, 1], [], []>} : vector<2x128xf32>, vector<128x256xf32>, vector<2x256xf32> -> vector<2x256xf32>
    %c0_6 = arith.constant 0 : index
    %c0_7 = arith.constant 0 : index
    %9 = vector.load %arg4[%c0_6, %c0_7] : memref<1x256xf32, #tpu.memory_space<vmem>>, vector<1x256xf32>
    %10 = vector.broadcast %9 : vector<1x256xf32> to vector<2x256xf32>
    %11 = arith.addf %8, %10 : vector<2x256xf32>
    %c0_8 = arith.constant 0 : index
    %c0_9 = arith.constant 0 : index
    %12 = vector.load %arg5[%c0_8, %c0_9] : memref<1x256xf32, #tpu.memory_space<vmem>>, vector<1x256xf32>
    %13 = vector.broadcast %12 : vector<1x256xf32> to vector<2x256xf32>
    %14 = arith.mulf %11, %13 : vector<2x256xf32>
    %c0_10 = arith.constant 0 : index
    %c0_11 = arith.constant 0 : index
    %15 = vector.load %arg6[%c0_10, %c0_11] : memref<1x256xf32, #tpu.memory_space<vmem>>, vector<1x256xf32>
    %16 = vector.broadcast %15 : vector<1x256xf32> to vector<2x256xf32>
    %17 = arith.addf %14, %16 : vector<2x256xf32>
    %cst_12 = arith.constant 0.000000e+00 : f32
    %18 = vector.broadcast %cst_12 : f32 to vector<2x256xf32>
    %19 = arith.maximumf %17, %18 : vector<2x256xf32>
    %c0_13 = arith.constant 0 : index
    %c0_14 = arith.constant 0 : index
    %20 = vector.load %arg7[%c0_13, %c0_14] : memref<256x256xf32, #tpu.memory_space<vmem>>, vector<256x256xf32>
    %cst_15 = arith.constant dense<0.000000e+00> : vector<2x256xf32>
    %21 = tpu.matmul %19, %20, %cst_15 {dimension_numbers = #tpu.dot_dimension_numbers<[1], [0], [0], [1], [0, 0, 1, 1], [], []>} : vector<2x256xf32>, vector<256x256xf32>, vector<2x256xf32> -> vector<2x256xf32>
    %c0_16 = arith.constant 0 : index
    %c0_17 = arith.constant 0 : index
    %22 = vector.load %arg8[%c0_16, %c0_17] : memref<1x256xf32, #tpu.memory_space<vmem>>, vector<1x256xf32>
    %23 = vector.broadcast %22 : vector<1x256xf32> to vector<2x256xf32>
    %24 = arith.addf %21, %23 : vector<2x256xf32>
    %c0_18 = arith.constant 0 : index
    %c0_19 = arith.constant 0 : index
    %25 = vector.load %arg9[%c0_18, %c0_19] : memref<1x256xf32, #tpu.memory_space<vmem>>, vector<1x256xf32>
    %26 = vector.broadcast %25 : vector<1x256xf32> to vector<2x256xf32>
    %27 = arith.mulf %24, %26 : vector<2x256xf32>
    %c0_20 = arith.constant 0 : index
    %c0_21 = arith.constant 0 : index
    %28 = vector.load %arg10[%c0_20, %c0_21] : memref<1x256xf32, #tpu.memory_space<vmem>>, vector<1x256xf32>
    %29 = vector.broadcast %28 : vector<1x256xf32> to vector<2x256xf32>
    %30 = arith.addf %27, %29 : vector<2x256xf32>
    %cst_22 = arith.constant 0.000000e+00 : f32
    %31 = vector.broadcast %cst_22 : f32 to vector<2x256xf32>
    %32 = arith.maximumf %30, %31 : vector<2x256xf32>
    %c0_23 = arith.constant 0 : index
    %c0_24 = arith.constant 0 : index
    %33 = vector.load %arg11[%c0_23, %c0_24] : memref<2560x128xf32, #tpu.memory_space<vmem>>, vector<2560x128xf32>
    %cst_25 = arith.constant dense<0.000000e+00> : vector<2x128xf32>
    %34 = tpu.matmul %5, %33, %cst_25 {dimension_numbers = #tpu.dot_dimension_numbers<[1], [0], [0], [1], [0, 0, 1, 1], [], []>} : vector<2x2560xf32>, vector<2560x128xf32>, vector<2x128xf32> -> vector<2x128xf32>
    %c0_26 = arith.constant 0 : index
    %c0_27 = arith.constant 0 : index
    %35 = vector.load %arg12[%c0_26, %c0_27] : memref<256x128xf32, #tpu.memory_space<vmem>>, vector<256x128xf32>
    %cst_28 = arith.constant dense<0.000000e+00> : vector<2x128xf32>
    %36 = tpu.matmul %32, %35, %cst_28 {dimension_numbers = #tpu.dot_dimension_numbers<[1], [0], [0], [1], [0, 0, 1, 1], [], []>} : vector<2x256xf32>, vector<256x128xf32>, vector<2x128xf32> -> vector<2x128xf32>
    %37 = arith.addf %34, %36 : vector<2x128xf32>
    %c0_29 = arith.constant 0 : index
    %c0_30 = arith.constant 0 : index
    %38 = vector.load %arg13[%c0_29, %c0_30] : memref<1x128xf32, #tpu.memory_space<vmem>>, vector<1x128xf32>
    %39 = vector.broadcast %38 : vector<1x128xf32> to vector<2x128xf32>
    %40 = arith.addf %37, %39 : vector<2x128xf32>
    %c0_31 = arith.constant 0 : index
    %c0_32 = arith.constant 0 : index
    %41 = vector.load %arg14[%c0_31, %c0_32] : memref<2x128xf32, #tpu.memory_space<vmem>>, vector<2x128xf32>
    tpu.vector_store %arg14[%c0_31, %c0_32], %40 {strides = array<i32>} : memref<2x128xf32, #tpu.memory_space<vmem>>, vector<2x128xf32>,
    return
  }
  func.func @transform_0(%arg0: i32) -> (i32, i32, i32) {
    %c0_i32 = arith.constant 0 : i32
    %c0_i32_0 = arith.constant 0 : i32
    %c0_i32_1 = arith.constant 0 : i32
    %c0_i32_2 = arith.constant 0 : i32
    return %c0_i32, %c0_i32_0, %c0_i32_1 : i32, i32, i32
  }
  func.func @transform_1(%arg0: i32) -> (i32, i32) {
    %c0_i32 = arith.constant 0 : i32
    %c0_i32_0 = arith.constant 0 : i32
    %c0_i32_1 = arith.constant 0 : i32
    return %c0_i32, %c0_i32_0 : i32, i32
  }
  func.func @transform_2(%arg0: i32) -> (i32, i32) {
    %c0_i32 = arith.constant 0 : i32
    %c0_i32_0 = arith.constant 0 : i32
    %c0_i32_1 = arith.constant 0 : i32
    return %c0_i32, %c0_i32_0 : i32, i32
  }
  func.func @transform_3(%arg0: i32) -> (i32, i32) {
    %c0_i32 = arith.constant 0 : i32
    %c0_i32_0 = arith.constant 0 : i32
    %c0_i32_1 = arith.constant 0 : i32
    return %c0_i32, %c0_i32_0 : i32, i32
  }
  func.func @transform_4(%arg0: i32) -> (i32, i32) {
    %c0_i32 = arith.constant 0 : i32
    %c0_i32_0 = arith.constant 0 : i32
    %c0_i32_1 = arith.constant 0 : i32
    return %c0_i32, %c0_i32_0 : i32, i32
  }
  func.func @transform_5(%arg0: i32) -> (i32, i32) {
    %c0_i32 = arith.constant 0 : i32
    %c0_i32_0 = arith.constant 0 : i32
    %c0_i32_1 = arith.constant 0 : i32
    return %c0_i32, %c0_i32_0 : i32, i32
  }
  func.func @transform_6(%arg0: i32) -> (i32, i32) {
    %c0_i32 = arith.constant 0 : i32
    %c0_i32_0 = arith.constant 0 : i32
    %c0_i32_1 = arith.constant 0 : i32
    return %c0_i32, %c0_i32_0 : i32, i32
  }
  func.func @transform_7(%arg0: i32) -> (i32, i32) {
    %c0_i32 = arith.constant 0 : i32
    %c0_i32_0 = arith.constant 0 : i32
    %c0_i32_1 = arith.constant 0 : i32
    return %c0_i32, %c0_i32_0 : i32, i32
  }
  func.func @transform_8(%arg0: i32) -> (i32, i32) {
    %c0_i32 = arith.constant 0 : i32
    %c0_i32_0 = arith.constant 0 : i32
    %c0_i32_1 = arith.constant 0 : i32
    return %c0_i32, %c0_i32_0 : i32, i32
  }
  func.func @transform_9(%arg0: i32) -> (i32, i32) {
    %c0_i32 = arith.constant 0 : i32
    %c0_i32_0 = arith.constant 0 : i32
    %c0_i32_1 = arith.constant 0 : i32
    return %c0_i32, %c0_i32_0 : i32, i32
  }
  func.func @transform_10(%arg0: i32) -> (i32, i32) {
    %c0_i32 = arith.constant 0 : i32
    %c0_i32_0 = arith.constant 0 : i32
    %c0_i32_1 = arith.constant 0 : i32
    return %c0_i32, %c0_i32_0 : i32, i32
  }
  func.func @transform_11(%arg0: i32) -> (i32, i32) {
    %c0_i32 = arith.constant 0 : i32
    %c0_i32_0 = arith.constant 0 : i32
    %c0_i32_1 = arith.constant 0 : i32
    return %c0_i32, %c0_i32_0 : i32, i32
  }
  func.func @transform_12(%arg0: i32) -> (i32, i32) {
    %c0_i32 = arith.constant 0 : i32
    %c0_i32_0 = arith.constant 0 : i32
    %c0_i32_1 = arith.constant 0 : i32
    return %c0_i32, %c0_i32_0 : i32, i32
  }
  func.func @transform_13(%arg0: i32) -> (i32, i32) {
    %c0_i32 = arith.constant 0 : i32
    %c0_i32_0 = arith.constant 0 : i32
    %c0_i32_1 = arith.constant 0 : i32
    return %c0_i32, %c0_i32_0 : i32, i32
  }
}

</mosaic_0001>

<llo_original>
// kernel: efficient_network_forward.3
$region0: #{efficient_network_forward.3}
  #allocation0 [shape = 'u32[]', space=smem, size = 0x4, offset = 0x4, fixed_abs, tag = 'smem constant byte address 0x4 - core index']
  #allocation1 [shape = 'u32[144,128]{1,0:T(1,128)}', space=vmem, size = 0x12000, scoped, tag = 'internal scratch']
  %s0 = inlined_call_operand.vmem [shape: f32[2,2,2560], index: 0, kind: input, shape index: {}]
  %s1 = inlined_call_operand.vmem [shape: f32[2,128], index: 1, kind: input, shape index: {}]
  %s2 = inlined_call_operand.vmem [shape: f32[128,256], index: 2, kind: input, shape index: {}]
  %s3 = inlined_call_operand.vmem [shape: f32[1,256], index: 3, kind: input, shape index: {}]
  %s4 = inlined_call_operand.vmem [shape: f32[1,256], index: 4, kind: input, shape index: {}]
  %s5 = inlined_call_operand.vmem [shape: f32[1,256], index: 5, kind: input, shape index: {}]
  %s6 = inlined_call_operand.vmem [shape: f32[256,256], index: 6, kind: input, shape index: {}]
  %s7 = inlined_call_operand.vmem [shape: f32[1,256], index: 7, kind: input, shape index: {}]
  %s8 = inlined_call_operand.vmem [shape: f32[1,256], index: 8, kind: input, shape index: {}]
  %s9 = inlined_call_operand.vmem [shape: f32[1,256], index: 9, kind: input, shape index: {}]
  %s10 = inlined_call_operand.vmem [shape: f32[2560,128], index: 10, kind: input, shape index: {}]
  %s11 = inlined_call_operand.vmem [shape: f32[256,128], index: 11, kind: input, shape index: {}]
  %s12 = inlined_call_operand.vmem [shape: f32[1,128], index: 12, kind: input, shape index: {}]
  %s13 = inlined_call_operand.vmem [shape: f32[2,128], index: 13, kind: output, shape index: {}]
  %s14 = sld [smem:[#allocation0]]
  $region62: #{efficient_network_forward.3} parent=0
    _
  %s16 = ssub.s32 1, %s14
  %s17 = scalar_select 0, %s16, %s14
  // Predicated region
  $region2: #{efficient_network_forward.3} parent=0 // pred_check
    _
  $region3: #{efficient_network_forward.3} parent=0 // pred_check_branch
    %19 = sbr.rel (0) target = $region5
  $region4: #{efficient_network_forward.3} parent=0 // pred_region
    _
  $region5: #{efficient_network_forward.3} parent=0 // pred_fallthru
    _
  // Predicated region
  $region6: #{efficient_network_forward.3} parent=0 // pred_check
    _
  $region7: #{efficient_network_forward.3} parent=0 // pred_check_branch
    %21 = sbr.rel (0) target = $region9
  $region8: #{efficient_network_forward.3} parent=0 // pred_region
    _
  $region9: #{efficient_network_forward.3} parent=0 // pred_fallthru
    _
  // Predicated region
  $region10: #{efficient_network_forward.3} parent=0 // pred_check
    _
  $region11: #{efficient_network_forward.3} parent=0 // pred_check_branch
    %23 = sbr.rel (0) target = $region13
  $region12: #{efficient_network_forward.3} parent=0 // pred_region
    _
  $region13: #{efficient_network_forward.3} parent=0 // pred_fallthru
    _
  // Predicated region
  $region14: #{efficient_network_forward.3} parent=0 // pred_check
    _
  $region15: #{efficient_network_forward.3} parent=0 // pred_check_branch
    %25 = sbr.rel (0) target = $region17
  $region16: #{efficient_network_forward.3} parent=0 // pred_region
    _
  $region17: #{efficient_network_forward.3} parent=0 // pred_fallthru
    _
  // Predicated region
  $region18: #{efficient_network_forward.3} parent=0 // pred_check
    _
  $region19: #{efficient_network_forward.3} parent=0 // pred_check_branch
    %27 = sbr.rel (0) target = $region21
  $region20: #{efficient_network_forward.3} parent=0 // pred_region
    _
  $region21: #{efficient_network_forward.3} parent=0 // pred_fallthru
    _
  // Predicated region
  $region22: #{efficient_network_forward.3} parent=0 // pred_check
    _
  $region23: #{efficient_network_forward.3} parent=0 // pred_check_branch
    %29 = sbr.rel (0) target = $region25
  $region24: #{efficient_network_forward.3} parent=0 // pred_region
    _
  $region25: #{efficient_network_forward.3} parent=0 // pred_fallthru
    _
  // Predicated region
  $region26: #{efficient_network_forward.3} parent=0 // pred_check
    _
  $region27: #{efficient_network_forward.3} parent=0 // pred_check_branch
    %31 = sbr.rel (0) target = $region29
  $region28: #{efficient_network_forward.3} parent=0 // pred_region
    _
  $region29: #{efficient_network_forward.3} parent=0 // pred_fallthru
    _
  // Predicated region
  $region30: #{efficient_network_forward.3} parent=0 // pred_check
    _
  $region31: #{efficient_network_forward.3} parent=0 // pred_check_branch
    %33 = sbr.rel (0) target = $region33
  $region32: #{efficient_network_forward.3} parent=0 // pred_region
    _
  $region33: #{efficient_network_forward.3} parent=0 // pred_fallthru
    _
  // Predicated region
  $region34: #{efficient_network_forward.3} parent=0 // pred_check
    _
  $region35: #{efficient_network_forward.3} parent=0 // pred_check_branch
    %35 = sbr.rel (0) target = $region37
  $region36: #{efficient_network_forward.3} parent=0 // pred_region
    _
  $region37: #{efficient_network_forward.3} parent=0 // pred_fallthru
    _
  // Predicated region
  $region38: #{efficient_network_forward.3} parent=0 // pred_check
    _
  $region39: #{efficient_network_forward.3} parent=0 // pred_check_branch
    %37 = sbr.rel (0) target = $region41
  $region40: #{efficient_network_forward.3} parent=0 // pred_region
    _
  $region41: #{efficient_network_forward.3} parent=0 // pred_fallthru
    _
  // Predicated region
  $region42: #{efficient_network_forward.3} parent=0 // pred_check
    _
  $region43: #{efficient_network_forward.3} parent=0 // pred_check_branch
    %39 = sbr.rel (0) target = $region45
  $region44: #{efficient_network_forward.3} parent=0 // pred_region
    _
  $region45: #{efficient_network_forward.3} parent=0 // pred_fallthru
    _
  // Predicated region
  $region46: #{efficient_network_forward.3} parent=0 // pred_check
    _
  $region47: #{efficient_network_forward.3} parent=0 // pred_check_branch
    %41 = sbr.rel (0) target = $region49
  $region48: #{efficient_network_forward.3} parent=0 // pred_region
    _
  $region49: #{efficient_network_forward.3} parent=0 // pred_fallthru
    _
  // Predicated region
  $region50: #{efficient_network_forward.3} parent=0 // pred_check
    _
  $region51: #{efficient_network_forward.3} parent=0 // pred_check_branch
    %43 = sbr.rel (0) target = $region53
  $region52: #{efficient_network_forward.3} parent=0 // pred_region
    _
  $region53: #{efficient_network_forward.3} parent=0 // pred_fallthru
    _
  %v44 = vld [vmem:[%s0] sm:$0xff]
  %v45 = vld [vmem:[%s0 + $0x8] sm:$0xff]
  %v46 = vld [vmem:[%s0 + $0x10] sm:$0xff]
  %v47 = vld [vmem:[%s0 + $0x18] sm:$0xff]
  %v48 = vld [vmem:[%s0 + $0x20] sm:$0xff]
  %v49 = vld [vmem:[%s0 + $0x28] sm:$0xff]
  %v50 = vld [vmem:[%s0 + $0x30] sm:$0xff]
  %v51 = vld [vmem:[%s0 + $0x38] sm:$0xff]
  %v52 = vld [vmem:[%s0 + $0x40] sm:$0xff]
  %v53 = vld [vmem:[%s0 + $0x48] sm:$0xff]
  %v54 = vadd.f32 %v44, %v49
  %v55 = vadd.f32 %v45, %v50
  %v56 = vadd.f32 %v46, %v51
  %v57 = vadd.f32 %v47, %v52
  %v58 = vadd.f32 %v48, %v53
  %v59 = vld [vmem:[%s1] sm:$0x3]
  %v60 = vld [vmem:[%s2] sm:$0xff]
  %v61 = vld [vmem:[%s2 + $0x8] sm:$0xff]
  %v62 = vld [vmem:[%s2 + $0x10] sm:$0xff]
  %v63 = vld [vmem:[%s2 + $0x18] sm:$0xff]
  %v64 = vld [vmem:[%s2 + $0x20] sm:$0xff]
  %v65 = vld [vmem:[%s2 + $0x28] sm:$0xff]
  %v66 = vld [vmem:[%s2 + $0x30] sm:$0xff]
  %v67 = vld [vmem:[%s2 + $0x38] sm:$0xff]
  %v68 = vld [vmem:[%s2 + $0x40] sm:$0xff]
  %v69 = vld [vmem:[%s2 + $0x48] sm:$0xff]
  %v70 = vld [vmem:[%s2 + $0x50] sm:$0xff]
  %v71 = vld [vmem:[%s2 + $0x58] sm:$0xff]
  %v72 = vld [vmem:[%s2 + $0x60] sm:$0xff]
  %v73 = vld [vmem:[%s2 + $0x68] sm:$0xff]
  %v74 = vld [vmem:[%s2 + $0x70] sm:$0xff]
  %v75 = vld [vmem:[%s2 + $0x78] sm:$0xff]
  %v76 = vld [vmem:[%s2 + $0x80] sm:$0xff]
  %v77 = vld [vmem:[%s2 + $0x88] sm:$0xff]
  %v78 = vld [vmem:[%s2 + $0x90] sm:$0xff]
  %v79 = vld [vmem:[%s2 + $0x98] sm:$0xff]
  %v80 = vld [vmem:[%s2 + $0xa0] sm:$0xff]
  %v81 = vld [vmem:[%s2 + $0xa8] sm:$0xff]
  %v82 = vld [vmem:[%s2 + $0xb0] sm:$0xff]
  %v83 = vld [vmem:[%s2 + $0xb8] sm:$0xff]
  %v84 = vld [vmem:[%s2 + $0xc0] sm:$0xff]
  %v85 = vld [vmem:[%s2 + $0xc8] sm:$0xff]
  %v86 = vld [vmem:[%s2 + $0xd0] sm:$0xff]
  %v87 = vld [vmem:[%s2 + $0xd8] sm:$0xff]
  %v88 = vld [vmem:[%s2 + $0xe0] sm:$0xff]
  %v89 = vld [vmem:[%s2 + $0xe8] sm:$0xff]
  %v90 = vld [vmem:[%s2 + $0xf0] sm:$0xff]
  %v91 = vld [vmem:[%s2 + $0xf8] sm:$0xff]
  %v92 = vld [vmem:[%s3] sm:$0x3]
  %v94 = vlaneseq
  %v95 = vshrl.u32 %v94, 7
  %v96 = vsub.s32 0, %v95
  %v97 = vrot.slane %v92, %v96
  %v98 = vlaneseq
  %v99 = vshrl.u32 %v98, 7
  %v100 = vsub.s32 1, %v99
  %v101 = vrot.slane %v92, %v100
  %104 = vmatprep.subr.mxu0 %v61
  %105 = vmatpush1.msra.mxu0 %v60
  %106 = vmatprep.subr.mxu0 %v63
  %107 = vmatpush1.msra.mxu0 %v62
  %108 = vmatprep.subr.mxu0 %v65
  %109 = vmatpush1.msra.mxu0 %v64
  %110 = vmatprep.subr.mxu0 %v67
  %111 = vmatpush1.msra.mxu0 %v66
  %112 = vmatprep.subr.mxu0 %v69
  %113 = vmatpush1.msra.mxu0 %v68
  %114 = vmatprep.subr.mxu0 %v71
  %115 = vmatpush1.msra.mxu0 %v70
  %116 = vmatprep.subr.mxu0 %v73
  %117 = vmatpush1.msra.mxu0 %v72
  %118 = vmatprep.subr.mxu0 %v75
  %119 = vmatpush1.msra.mxu0 %v74
  %120 = vmatprep.subr.mxu0 %v77
  %121 = vmatpush1.msra.mxu0 %v76
  %122 = vmatprep.subr.mxu0 %v79
  %123 = vmatpush1.msra.mxu0 %v78
  %124 = vmatprep.subr.mxu0 %v81
  %125 = vmatpush1.msra.mxu0 %v80
  %126 = vmatprep.subr.mxu0 %v83
  %127 = vmatpush1.msra.mxu0 %v82
  %128 = vmatprep.subr.mxu0 %v85
  %129 = vmatpush1.msra.mxu0 %v84
  %130 = vmatprep.subr.mxu0 %v87
  %131 = vmatpush1.msra.mxu0 %v86
  %132 = vmatprep.subr.mxu0 %v89
  %133 = vmatpush1.msra.mxu0 %v88
  %134 = vmatprep.subr.mxu0 %v91
  %135 = vmatpush1.msra.mxu0 %v90
  %136 = vmatprep.subr.mxu0 0.0
  %137 = vmatpush1.msra.mxu0 0.0
  %138 = vmatprep.subr.mxu0 0.0
  %139 = vmatpush1.msra.mxu0 0.0
  %140 = vmatprep.subr.mxu0 0.0
  %141 = vmatpush1.msra.mxu0 0.0
  %142 = vmatprep.subr.mxu0 0.0
  %143 = vmatpush1.msra.mxu0 0.0
  %144 = vmatprep.subr.mxu0 0.0
  %145 = vmatpush1.msra.mxu0 0.0
  %146 = vmatprep.subr.mxu0 0.0
  %147 = vmatpush1.msra.mxu0 0.0
  %148 = vmatprep.subr.mxu0 0.0
  %149 = vmatpush1.msra.mxu0 0.0
  %150 = vmatprep.subr.mxu0 0.0
  %151 = vmatpush1.msra.mxu0 0.0
  %152 = vmatprep.subr.mxu0 0.0
  %153 = vmatpush1.msra.mxu0 0.0
  %154 = vmatprep.subr.mxu0 0.0
  %155 = vmatpush1.msra.mxu0 0.0
  %156 = vmatprep.subr.mxu0 0.0
  %157 = vmatpush1.msra.mxu0 0.0
  %158 = vmatprep.subr.mxu0 0.0
  %159 = vmatpush1.msra.mxu0 0.0
  %160 = vmatprep.subr.mxu0 0.0
  %161 = vmatpush1.msra.mxu0 0.0
  %162 = vmatprep.subr.mxu0 0.0
  %163 = vmatpush1.msra.mxu0 0.0
  %164 = vmatprep.subr.mxu0 0.0
  %165 = vmatpush1.msra.mxu0 0.0
  %166 = vmatprep.subr.mxu0 0.0
  %167 = vmatpush1.msra.mxu0 0.0
  %168 = vmatprep.mubr.f32.mxu0 0.0
  %169 = vmatmul.mubr.f32.gmra.mrb[0].mxu0 %v59
  %v170 = vpop.f32.mrb[0].mxu0
  %v171 = vadd.f32 %v97, %v170
  %v172 = vpop.f32.mrb[0].mxu0
  %v173 = vadd.f32 %v101, %v172
  %174 = vdwg.mxu0
  %v175 = vld [vmem:[%s4] sm:$0x3]
  %v177 = vlaneseq
  %v178 = vshrl.u32 %v177, 7
  %v179 = vsub.s32 0, %v178
  %v180 = vrot.slane %v175, %v179
  %v181 = vlaneseq
  %v182 = vshrl.u32 %v181, 7
  %v183 = vsub.s32 1, %v182
  %v184 = vrot.slane %v175, %v183
  %v187 = vmul.f32 %v171, %v180
  %v188 = vmul.f32 %v173, %v184
  %v189 = vld [vmem:[%s5] sm:$0x3]
  %v191 = vlaneseq
  %v192 = vshrl.u32 %v191, 7
  %v193 = vsub.s32 0, %v192
  %v194 = vrot.slane %v189, %v193
  %v195 = vlaneseq
  %v196 = vshrl.u32 %v195, 7
  %v197 = vsub.s32 1, %v196
  %v198 = vrot.slane %v189, %v197
  %v201 = vadd.f32 %v187, %v194
  %v202 = vadd.f32 %v188, %v198
  %v203 = vmax.f32 %v201, 0.0
  %v204 = vmax.f32 %v202, 0.0
  %v205 = vld [vmem:[%s6] sm:$0xff]
  %v206 = vld [vmem:[%s6 + $0x8] sm:$0xff]
  %v207 = vld [vmem:[%s6 + $0x10] sm:$0xff]
  %v208 = vld [vmem:[%s6 + $0x18] sm:$0xff]
  %v209 = vld [vmem:[%s6 + $0x20] sm:$0xff]
  %v210 = vld [vmem:[%s6 + $0x28] sm:$0xff]
  %v211 = vld [vmem:[%s6 + $0x30] sm:$0xff]
  %v212 = vld [vmem:[%s6 + $0x38] sm:$0xff]
  %v213 = vld [vmem:[%s6 + $0x40] sm:$0xff]
  %v214 = vld [vmem:[%s6 + $0x48] sm:$0xff]
  %v215 = vld [vmem:[%s6 + $0x50] sm:$0xff]
  %v216 = vld [vmem:[%s6 + $0x58] sm:$0xff]
  %v217 = vld [vmem:[%s6 + $0x60] sm:$0xff]
  %v218 = vld [vmem:[%s6 + $0x68] sm:$0xff]
  %v219 = vld [vmem:[%s6 + $0x70] sm:$0xff]
  %v220 = vld [vmem:[%s6 + $0x78] sm:$0xff]
  %v221 = vld [vmem:[%s6 + $0x80] sm:$0xff]
  %v222 = vld [vmem:[%s6 + $0x88] sm:$0xff]
  %v223 = vld [vmem:[%s6 + $0x90] sm:$0xff]
  %v224 = vld [vmem:[%s6 + $0x98] sm:$0xff]
  %v225 = vld [vmem:[%s6 + $0xa0] sm:$0xff]
  %v226 = vld [vmem:[%s6 + $0xa8] sm:$0xff]
  %v227 = vld [vmem:[%s6 + $0xb0] sm:$0xff]
  %v228 = vld [vmem:[%s6 + $0xb8] sm:$0xff]
  %v229 = vld [vmem:[%s6 + $0xc0] sm:$0xff]
  %v230 = vld [vmem:[%s6 + $0xc8] sm:$0xff]
  %v231 = vld [vmem:[%s6 + $0xd0] sm:$0xff]
  %v232 = vld [vmem:[%s6 + $0xd8] sm:$0xff]
  %v233 = vld [vmem:[%s6 + $0xe0] sm:$0xff]
  %v234 = vld [vmem:[%s6 + $0xe8] sm:$0xff]
  %v235 = vld [vmem:[%s6 + $0xf0] sm:$0xff]
  %v236 = vld [vmem:[%s6 + $0xf8] sm:$0xff]
  %v237 = vld [vmem:[%s6 + $0x100] sm:$0xff]
  %v238 = vld [vmem:[%s6 + $0x108] sm:$0xff]
  %v239 = vld [vmem:[%s6 + $0x110] sm:$0xff]
  %v240 = vld [vmem:[%s6 + $0x118] sm:$0xff]
  %v241 = vld [vmem:[%s6 + $0x120] sm:$0xff]
  %v242 = vld [vmem:[%s6 + $0x128] sm:$0xff]
  %v243 = vld [vmem:[%s6 + $0x130] sm:$0xff]
  %v244 = vld [vmem:[%s6 + $0x138] sm:$0xff]
  %v245 = vld [vmem:[%s6 + $0x140] sm:$0xff]
  %v246 = vld [vmem:[%s6 + $0x148] sm:$0xff]
  %v247 = vld [vmem:[%s6 + $0x150] sm:$0xff]
  %v248 = vld [vmem:[%s6 + $0x158] sm:$0xff]
  %v249 = vld [vmem:[%s6 + $0x160] sm:$0xff]
  %v250 = vld [vmem:[%s6 + $0x168] sm:$0xff]
  %v251 = vld [vmem:[%s6 + $0x170] sm:$0xff]
  %v252 = vld [vmem:[%s6 + $0x178] sm:$0xff]
  %v253 = vld [vmem:[%s6 + $0x180] sm:$0xff]
  %v254 = vld [vmem:[%s6 + $0x188] sm:$0xff]
  %v255 = vld [vmem:[%s6 + $0x190] sm:$0xff]
  %v256 = vld [vmem:[%s6 + $0x198] sm:$0xff]
  %v257 = vld [vmem:[%s6 + $0x1a0] sm:$0xff]
  %v258 = vld [vmem:[%s6 + $0x1a8] sm:$0xff]
  %v259 = vld [vmem:[%s6 + $0x1b0] sm:$0xff]
  %v260 = vld [vmem:[%s6 + $0x1b8] sm:$0xff]
  %v261 = vld [vmem:[%s6 + $0x1c0] sm:$0xff]
  %v262 = vld [vmem:[%s6 + $0x1c8] sm:$0xff]
  %v263 = vld [vmem:[%s6 + $0x1d0] sm:$0xff]
  %v264 = vld [vmem:[%s6 + $0x1d8] sm:$0xff]
  %v265 = vld [vmem:[%s6 + $0x1e0] sm:$0xff]
  %v266 = vld [vmem:[%s6 + $0x1e8] sm:$0xff]
  %v267 = vld [vmem:[%s6 + $0x1f0] sm:$0xff]
  %v268 = vld [vmem:[%s6 + $0x1f8] sm:$0xff]
  %v269 = vld [vmem:[%s7] sm:$0x3]
  %v271 = vlaneseq
  %v272 = vshrl.u32 %v271, 7
  %v273 = vsub.s32 0, %v272
  %v274 = vrot.slane %v269, %v273
  %v275 = vlaneseq
  %v276 = vshrl.u32 %v275, 7
  %v277 = vsub.s32 1, %v276
  %v278 = vrot.slane %v269, %v277
  %281 = vmatprep.subr.mxu0 %v206
  %282 = vmatpush1.msra.mxu0 %v205
  %283 = vmatprep.subr.mxu0 %v208
  %284 = vmatpush1.msra.mxu0 %v207
  %285 = vmatprep.subr.mxu0 %v210
  %286 = vmatpush1.msra.mxu0 %v209
  %287 = vmatprep.subr.mxu0 %v212
  %288 = vmatpush1.msra.mxu0 %v211
  %289 = vmatprep.subr.mxu0 %v214
  %290 = vmatpush1.msra.mxu0 %v213
  %291 = vmatprep.subr.mxu0 %v216
  %292 = vmatpush1.msra.mxu0 %v215
  %293 = vmatprep.subr.mxu0 %v218
  %294 = vmatpush1.msra.mxu0 %v217
  %295 = vmatprep.subr.mxu0 %v220
  %296 = vmatpush1.msra.mxu0 %v219
  %297 = vmatprep.subr.mxu0 %v222
  %298 = vmatpush1.msra.mxu0 %v221
  %299 = vmatprep.subr.mxu0 %v224
  %300 = vmatpush1.msra.mxu0 %v223
  %301 = vmatprep.subr.mxu0 %v226
  %302 = vmatpush1.msra.mxu0 %v225
  %303 = vmatprep.subr.mxu0 %v228
  %304 = vmatpush1.msra.mxu0 %v227
  %305 = vmatprep.subr.mxu0 %v230
  %306 = vmatpush1.msra.mxu0 %v229
  %307 = vmatprep.subr.mxu0 %v232
  %308 = vmatpush1.msra.mxu0 %v231
  %309 = vmatprep.subr.mxu0 %v234
  %310 = vmatpush1.msra.mxu0 %v233
  %311 = vmatprep.subr.mxu0 %v236
  %312 = vmatpush1.msra.mxu0 %v235
  %313 = vmatprep.subr.mxu0 %v238
  %314 = vmatpush1.msra.mxu0 %v237
  %315 = vmatprep.subr.mxu0 %v240
  %316 = vmatpush1.msra.mxu0 %v239
  %317 = vmatprep.subr.mxu0 %v242
  %318 = vmatpush1.msra.mxu0 %v241
  %319 = vmatprep.subr.mxu0 %v244
  %320 = vmatpush1.msra.mxu0 %v243
  %321 = vmatprep.subr.mxu0 %v246
  %322 = vmatpush1.msra.mxu0 %v245
  %323 = vmatprep.subr.mxu0 %v248
  %324 = vmatpush1.msra.mxu0 %v247
  %325 = vmatprep.subr.mxu0 %v250
  %326 = vmatpush1.msra.mxu0 %v249
  %327 = vmatprep.subr.mxu0 %v252
  %328 = vmatpush1.msra.mxu0 %v251
  %329 = vmatprep.subr.mxu0 %v254
  %330 = vmatpush1.msra.mxu0 %v253
  %331 = vmatprep.subr.mxu0 %v256
  %332 = vmatpush1.msra.mxu0 %v255
  %333 = vmatprep.subr.mxu0 %v258
  %334 = vmatpush1.msra.mxu0 %v257
  %335 = vmatprep.subr.mxu0 %v260
  %336 = vmatpush1.msra.mxu0 %v259
  %337 = vmatprep.subr.mxu0 %v262
  %338 = vmatpush1.msra.mxu0 %v261
  %339 = vmatprep.subr.mxu0 %v264
  %340 = vmatpush1.msra.mxu0 %v263
  %341 = vmatprep.subr.mxu0 %v266
  %342 = vmatpush1.msra.mxu0 %v265
  %343 = vmatprep.subr.mxu0 %v268
  %344 = vmatpush1.msra.mxu0 %v267
  %345 = vmatprep.mubr.f32.mxu0 %v204
  %346 = vmatmul.mubr.f32.gmra.mrb[0].mxu0 %v203
  %v347 = vpop.f32.mrb[0].mxu0
  %v348 = vadd.f32 %v274, %v347
  %v349 = vpop.f32.mrb[0].mxu0
  %v350 = vadd.f32 %v278, %v349
  %351 = vdwg.mxu0
  %v352 = vld [vmem:[%s8] sm:$0x3]
  %v354 = vlaneseq
  %v355 = vshrl.u32 %v354, 7
  %v356 = vsub.s32 0, %v355
  %v357 = vrot.slane %v352, %v356
  %v358 = vlaneseq
  %v359 = vshrl.u32 %v358, 7
  %v360 = vsub.s32 1, %v359
  %v361 = vrot.slane %v352, %v360
  %v364 = vmul.f32 %v348, %v357
  %v365 = vmul.f32 %v350, %v361
  %v366 = vld [vmem:[%s9] sm:$0x3]
  %v368 = vlaneseq
  %v369 = vshrl.u32 %v368, 7
  %v370 = vsub.s32 0, %v369
  %v371 = vrot.slane %v366, %v370
  %v372 = vlaneseq
  %v373 = vshrl.u32 %v372, 7
  %v374 = vsub.s32 1, %v373
  %v375 = vrot.slane %v366, %v374
  %v378 = vadd.f32 %v364, %v371
  %v379 = vadd.f32 %v365, %v375
  %v380 = vmax.f32 %v378, 0.0
  %v381 = vmax.f32 %v379, 0.0
  %v382 = vld [vmem:[%s10] sm:$0xff]
  %v383 = vld [vmem:[%s10 + $0x8] sm:$0xff]
  %v384 = vld [vmem:[%s10 + $0x10] sm:$0xff]
  %v385 = vld [vmem:[%s10 + $0x18] sm:$0xff]
  %v386 = vld [vmem:[%s10 + $0x20] sm:$0xff]
  %v387 = vld [vmem:[%s10 + $0x28] sm:$0xff]
  %v388 = vld [vmem:[%s10 + $0x30] sm:$0xff]
  %v389 = vld [vmem:[%s10 + $0x38] sm:$0xff]
  %v390 = vld [vmem:[%s10 + $0x40] sm:$0xff]
  %v391 = vld [vmem:[%s10 + $0x48] sm:$0xff]
  %v392 = vld [vmem:[%s10 + $0x50] sm:$0xff]
  %v393 = vld [vmem:[%s10 + $0x58] sm:$0xff]
  %v394 = vld [vmem:[%s10 + $0x60] sm:$0xff]
  %v395 = vld [vmem:[%s10 + $0x68] sm:$0xff]
  %v396 = vld [vmem:[%s10 + $0x70] sm:$0xff]
  %v397 = vld [vmem:[%s10 + $0x78] sm:$0xff]
  %v398 = vld [vmem:[%s10 + $0x80] sm:$0xff]
  %v399 = vld [vmem:[%s10 + $0x88] sm:$0xff]
  %v400 = vld [vmem:[%s10 + $0x90] sm:$0xff]
  %v401 = vld [vmem:[%s10 + $0x98] sm:$0xff]
  %v402 = vld [vmem:[%s10 + $0xa0] sm:$0xff]
  %v403 = vld [vmem:[%s10 + $0xa8] sm:$0xff]
  %v404 = vld [vmem:[%s10 + $0xb0] sm:$0xff]
  %v405 = vld [vmem:[%s10 + $0xb8] sm:$0xff]
  %v406 = vld [vmem:[%s10 + $0xc0] sm:$0xff]
  %v407 = vld [vmem:[%s10 + $0xc8] sm:$0xff]
  %v408 = vld [vmem:[%s10 + $0xd0] sm:$0xff]
  %v409 = vld [vmem:[%s10 + $0xd8] sm:$0xff]
  %v410 = vld [vmem:[%s10 + $0xe0] sm:$0xff]
  %v411 = vld [vmem:[%s10 + $0xe8] sm:$0xff]
  %v412 = vld [vmem:[%s10 + $0xf0] sm:$0xff]
  %v413 = vld [vmem:[%s10 + $0xf8] sm:$0xff]
  %v414 = vld [vmem:[%s10 + $0x100] sm:$0xff]
  %v415 = vld [vmem:[%s10 + $0x108] sm:$0xff]
  %v416 = vld [vmem:[%s10 + $0x110] sm:$0xff]
  %v417 = vld [vmem:[%s10 + $0x118] sm:$0xff]
  %v418 = vld [vmem:[%s10 + $0x120] sm:$0xff]
  %v419 = vld [vmem:[%s10 + $0x128] sm:$0xff]
  %v420 = vld [vmem:[%s10 + $0x130] sm:$0xff]
  %v421 = vld [vmem:[%s10 + $0x138] sm:$0xff]
  %v422 = vld [vmem:[%s10 + $0x140] sm:$0xff]
  %v423 = vld [vmem:[%s10 + $0x148] sm:$0xff]
  %v424 = vld [vmem:[%s10 + $0x150] sm:$0xff]
  %v425 = vld [vmem:[%s10 + $0x158] sm:$0xff]
  %v426 = vld [vmem:[%s10 + $0x160] sm:$0xff]
  %v427 = vld [vmem:[%s10 + $0x168] sm:$0xff]
  %v428 = vld [vmem:[%s10 + $0x170] sm:$0xff]
  %v429 = vld [vmem:[%s10 + $0x178] sm:$0xff]
  %v430 = vld [vmem:[%s10 + $0x180] sm:$0xff]
  %v431 = vld [vmem:[%s10 + $0x188] sm:$0xff]
  %v432 = vld [vmem:[%s10 + $0x190] sm:$0xff]
  %v433 = vld [vmem:[%s10 + $0x198] sm:$0xff]
  %v434 = vld [vmem:[%s10 + $0x1a0] sm:$0xff]
  %v435 = vld [vmem:[%s10 + $0x1a8] sm:$0xff]
  %v436 = vld [vmem:[%s10 + $0x1b0] sm:$0xff]
  %v437 = vld [vmem:[%s10 + $0x1b8] sm:$0xff]
  %v438 = vld [vmem:[%s10 + $0x1c0] sm:$0xff]
  %v439 = vld [vmem:[%s10 + $0x1c8] sm:$0xff]
  %v440 = vld [vmem:[%s10 + $0x1d0] sm:$0xff]
  %v441 = vld [vmem:[%s10 + $0x1d8] sm:$0xff]
  %v442 = vld [vmem:[%s10 + $0x1e0] sm:$0xff]
  %v443 = vld [vmem:[%s10 + $0x1e8] sm:$0xff]
  %v444 = vld [vmem:[%s10 + $0x1f0] sm:$0xff]
  %v445 = vld [vmem:[%s10 + $0x1f8] sm:$0xff]
  %v446 = vld [vmem:[%s10 + $0x200] sm:$0xff]
  %v447 = vld [vmem:[%s10 + $0x208] sm:$0xff]
  %v448 = vld [vmem:[%s10 + $0x210] sm:$0xff]
  %v449 = vld [vmem:[%s10 + $0x218] sm:$0xff]
  %v450 = vld [vmem:[%s10 + $0x220] sm:$0xff]
  %v451 = vld [vmem:[%s10 + $0x228] sm:$0xff]
  %v452 = vld [vmem:[%s10 + $0x230] sm:$0xff]
  %v453 = vld [vmem:[%s10 + $0x238] sm:$0xff]
  %v454 = vld [vmem:[%s10 + $0x240] sm:$0xff]
  %v455 = vld [vmem:[%s10 + $0x248] sm:$0xff]
  %v456 = vld [vmem:[%s10 + $0x250] sm:$0xff]
  %v457 = vld [vmem:[%s10 + $0x258] sm:$0xff]
  %v458 = vld [vmem:[%s10 + $0x260] sm:$0xff]
  %v459 = vld [vmem:[%s10 + $0x268] sm:$0xff]
  %v460 = vld [vmem:[%s10 + $0x270] sm:$0xff]
  %v461 = vld [vmem:[%s10 + $0x278] sm:$0xff]
  %v462 = vld [vmem:[%s10 + $0x280] sm:$0xff]
  %v463 = vld [vmem:[%s10 + $0x288] sm:$0xff]
  %v464 = vld [vmem:[%s10 + $0x290] sm:$0xff]
  %v465 = vld [vmem:[%s10 + $0x298] sm:$0xff]
  %v466 = vld [vmem:[%s10 + $0x2a0] sm:$0xff]
  %v467 = vld [vmem:[%s10 + $0x2a8] sm:$0xff]
  %v468 = vld [vmem:[%s10 + $0x2b0] sm:$0xff]
  %v469 = vld [vmem:[%s10 + $0x2b8] sm:$0xff]
  %v470 = vld [vmem:[%s10 + $0x2c0] sm:$0xff]
  %v471 = vld [vmem:[%s10 + $0x2c8] sm:$0xff]
  %v472 = vld [vmem:[%s10 + $0x2d0] sm:$0xff]
  %v473 = vld [vmem:[%s10 + $0x2d8] sm:$0xff]
  %v474 = vld [vmem:[%s10 + $0x2e0] sm:$0xff]
  %v475 = vld [vmem:[%s10 + $0x2e8] sm:$0xff]
  %v476 = vld [vmem:[%s10 + $0x2f0] sm:$0xff]
  %v477 = vld [vmem:[%s10 + $0x2f8] sm:$0xff]
  %v478 = vld [vmem:[%s10 + $0x300] sm:$0xff]
  %v479 = vld [vmem:[%s10 + $0x308] sm:$0xff]
  %v480 = vld [vmem:[%s10 + $0x310] sm:$0xff]
  %v481 = vld [vmem:[%s10 + $0x318] sm:$0xff]
  %v482 = vld [vmem:[%s10 + $0x320] sm:$0xff]
  %v483 = vld [vmem:[%s10 + $0x328] sm:$0xff]
  %v484 = vld [vmem:[%s10 + $0x330] sm:$0xff]
  %v485 = vld [vmem:[%s10 + $0x338] sm:$0xff]
  %v486 = vld [vmem:[%s10 + $0x340] sm:$0xff]
  %v487 = vld [vmem:[%s10 + $0x348] sm:$0xff]
  %v488 = vld [vmem:[%s10 + $0x350] sm:$0xff]
  %v489 = vld [vmem:[%s10 + $0x358] sm:$0xff]
  %v490 = vld [vmem:[%s10 + $0x360] sm:$0xff]
  %v491 = vld [vmem:[%s10 + $0x368] sm:$0xff]
  %v492 = vld [vmem:[%s10 + $0x370] sm:$0xff]
  %v493 = vld [vmem:[%s10 + $0x378] sm:$0xff]
  %v494 = vld [vmem:[%s10 + $0x380] sm:$0xff]
  %v495 = vld [vmem:[%s10 + $0x388] sm:$0xff]
  %v496 = vld [vmem:[%s10 + $0x390] sm:$0xff]
  %v497 = vld [vmem:[%s10 + $0x398] sm:$0xff]
  %v498 = vld [vmem:[%s10 + $0x3a0] sm:$0xff]
  %v499 = vld [vmem:[%s10 + $0x3a8] sm:$0xff]
  %v500 = vld [vmem:[%s10 + $0x3b0] sm:$0xff]
  %v501 = vld [vmem:[%s10 + $0x3b8] sm:$0xff]
  %v502 = vld [vmem:[%s10 + $0x3c0] sm:$0xff]
  %v503 = vld [vmem:[%s10 + $0x3c8] sm:$0xff]
  %v504 = vld [vmem:[%s10 + $0x3d0] sm:$0xff]
  %v505 = vld [vmem:[%s10 + $0x3d8] sm:$0xff]
  %v506 = vld [vmem:[%s10 + $0x3e0] sm:$0xff]
  %v507 = vld [vmem:[%s10 + $0x3e8] sm:$0xff]
  %v508 = vld [vmem:[%s10 + $0x3f0] sm:$0xff]
  %v509 = vld [vmem:[%s10 + $0x3f8] sm:$0xff]
  %v510 = vld [vmem:[%s10 + $0x400] sm:$0xff]
  %v511 = vld [vmem:[%s10 + $0x408] sm:$0xff]
  %v512 = vld [vmem:[%s10 + $0x410] sm:$0xff]
  %v513 = vld [vmem:[%s10 + $0x418] sm:$0xff]
  %v514 = vld [vmem:[%s10 + $0x420] sm:$0xff]
  %v515 = vld [vmem:[%s10 + $0x428] sm:$0xff]
  %v516 = vld [vmem:[%s10 + $0x430] sm:$0xff]
  %v517 = vld [vmem:[%s10 + $0x438] sm:$0xff]
  %v518 = vld [vmem:[%s10 + $0x440] sm:$0xff]
  %v519 = vld [vmem:[%s10 + $0x448] sm:$0xff]
  %v520 = vld [vmem:[%s10 + $0x450] sm:$0xff]
  %v521 = vld [vmem:[%s10 + $0x458] sm:$0xff]
  %v522 = vld [vmem:[%s10 + $0x460] sm:$0xff]
  %v523 = vld [vmem:[%s10 + $0x468] sm:$0xff]
  %v524 = vld [vmem:[%s10 + $0x470] sm:$0xff]
  %v525 = vld [vmem:[%s10 + $0x478] sm:$0xff]
  %v526 = vld [vmem:[%s10 + $0x480] sm:$0xff]
  %v527 = vld [vmem:[%s10 + $0x488] sm:$0xff]
  %v528 = vld [vmem:[%s10 + $0x490] sm:$0xff]
  %v529 = vld [vmem:[%s10 + $0x498] sm:$0xff]
  %v530 = vld [vmem:[%s10 + $0x4a0] sm:$0xff]
  %v531 = vld [vmem:[%s10 + $0x4a8] sm:$0xff]
  %v532 = vld [vmem:[%s10 + $0x4b0] sm:$0xff]
  %v533 = vld [vmem:[%s10 + $0x4b8] sm:$0xff]
  %v534 = vld [vmem:[%s10 + $0x4c0] sm:$0xff]
  %v535 = vld [vmem:[%s10 + $0x4c8] sm:$0xff]
  %v536 = vld [vmem:[%s10 + $0x4d0] sm:$0xff]
  %v537 = vld [vmem:[%s10 + $0x4d8] sm:$0xff]
  %v538 = vld [vmem:[%s10 + $0x4e0] sm:$0xff]
  %v539 = vld [vmem:[%s10 + $0x4e8] sm:$0xff]
  %v540 = vld [vmem:[%s10 + $0x4f0] sm:$0xff]
  %v541 = vld [vmem:[%s10 + $0x4f8] sm:$0xff]
  %v542 = vld [vmem:[%s10 + $0x500] sm:$0xff]
  %v543 = vld [vmem:[%s10 + $0x508] sm:$0xff]
  %v544 = vld [vmem:[%s10 + $0x510] sm:$0xff]
  %v545 = vld [vmem:[%s10 + $0x518] sm:$0xff]
  %v546 = vld [vmem:[%s10 + $0x520] sm:$0xff]
  %v547 = vld [vmem:[%s10 + $0x528] sm:$0xff]
  %v548 = vld [vmem:[%s10 + $0x530] sm:$0xff]
  %v549 = vld [vmem:[%s10 + $0x538] sm:$0xff]
  %v550 = vld [vmem:[%s10 + $0x540] sm:$0xff]
  %v551 = vld [vmem:[%s10 + $0x548] sm:$0xff]
  %v552 = vld [vmem:[%s10 + $0x550] sm:$0xff]
  %v553 = vld [vmem:[%s10 + $0x558] sm:$0xff]
  %v554 = vld [vmem:[%s10 + $0x560] sm:$0xff]
  %v555 = vld [vmem:[%s10 + $0x568] sm:$0xff]
  %v556 = vld [vmem:[%s10 + $0x570] sm:$0xff]
  %v557 = vld [vmem:[%s10 + $0x578] sm:$0xff]
  %v558 = vld [vmem:[%s10 + $0x580] sm:$0xff]
  %v559 = vld [vmem:[%s10 + $0x588] sm:$0xff]
  %v560 = vld [vmem:[%s10 + $0x590] sm:$0xff]
  %v561 = vld [vmem:[%s10 + $0x598] sm:$0xff]
  %v562 = vld [vmem:[%s10 + $0x5a0] sm:$0xff]
  %v563 = vld [vmem:[%s10 + $0x5a8] sm:$0xff]
  %v564 = vld [vmem:[%s10 + $0x5b0] sm:$0xff]
  %v565 = vld [vmem:[%s10 + $0x5b8] sm:$0xff]
  %v566 = vld [vmem:[%s10 + $0x5c0] sm:$0xff]
  %v567 = vld [vmem:[%s10 + $0x5c8] sm:$0xff]
  %v568 = vld [vmem:[%s10 + $0x5d0] sm:$0xff]
  %v569 = vld [vmem:[%s10 + $0x5d8] sm:$0xff]
  %v570 = vld [vmem:[%s10 + $0x5e0] sm:$0xff]
  %v571 = vld [vmem:[%s10 + $0x5e8] sm:$0xff]
  %v572 = vld [vmem:[%s10 + $0x5f0] sm:$0xff]
  %v573 = vld [vmem:[%s10 + $0x5f8] sm:$0xff]
  %v574 = vld [vmem:[%s10 + $0x600] sm:$0xff]
  %v575 = vld [vmem:[%s10 + $0x608] sm:$0xff]
  %v576 = vld [vmem:[%s10 + $0x610] sm:$0xff]
  %v577 = vld [vmem:[%s10 + $0x618] sm:$0xff]
  %v578 = vld [vmem:[%s10 + $0x620] sm:$0xff]
  %v579 = vld [vmem:[%s10 + $0x628] sm:$0xff]
  %v580 = vld [vmem:[%s10 + $0x630] sm:$0xff]
  %v581 = vld [vmem:[%s10 + $0x638] sm:$0xff]
  %v582 = vld [vmem:[%s10 + $0x640] sm:$0xff]
  %v583 = vld [vmem:[%s10 + $0x648] sm:$0xff]
  %v584 = vld [vmem:[%s10 + $0x650] sm:$0xff]
  %v585 = vld [vmem:[%s10 + $0x658] sm:$0xff]
  %v586 = vld [vmem:[%s10 + $0x660] sm:$0xff]
  %v587 = vld [vmem:[%s10 + $0x668] sm:$0xff]
  %v588 = vld [vmem:[%s10 + $0x670] sm:$0xff]
  %v589 = vld [vmem:[%s10 + $0x678] sm:$0xff]
  %v590 = vld [vmem:[%s10 + $0x680] sm:$0xff]
  %v591 = vld [vmem:[%s10 + $0x688] sm:$0xff]
  %v592 = vld [vmem:[%s10 + $0x690] sm:$0xff]
  %v593 = vld [vmem:[%s10 + $0x698] sm:$0xff]
  %v594 = vld [vmem:[%s10 + $0x6a0] sm:$0xff]
  %v595 = vld [vmem:[%s10 + $0x6a8] sm:$0xff]
  %v596 = vld [vmem:[%s10 + $0x6b0] sm:$0xff]
  %v597 = vld [vmem:[%s10 + $0x6b8] sm:$0xff]
  %v598 = vld [vmem:[%s10 + $0x6c0] sm:$0xff]
  %v599 = vld [vmem:[%s10 + $0x6c8] sm:$0xff]
  %v600 = vld [vmem:[%s10 + $0x6d0] sm:$0xff]
  %v601 = vld [vmem:[%s10 + $0x6d8] sm:$0xff]
  %v602 = vld [vmem:[%s10 + $0x6e0] sm:$0xff]
  %v603 = vld [vmem:[%s10 + $0x6e8] sm:$0xff]
  %v604 = vld [vmem:[%s10 + $0x6f0] sm:$0xff]
  %v605 = vld [vmem:[%s10 + $0x6f8] sm:$0xff]
  %v606 = vld [vmem:[%s10 + $0x700] sm:$0xff]
  %v607 = vld [vmem:[%s10 + $0x708] sm:$0xff]
  %v608 = vld [vmem:[%s10 + $0x710] sm:$0xff]
  %v609 = vld [vmem:[%s10 + $0x718] sm:$0xff]
  %v610 = vld [vmem:[%s10 + $0x720] sm:$0xff]
  %v611 = vld [vmem:[%s10 + $0x728] sm:$0xff]
  %v612 = vld [vmem:[%s10 + $0x730] sm:$0xff]
  %v613 = vld [vmem:[%s10 + $0x738] sm:$0xff]
  %v614 = vld [vmem:[%s10 + $0x740] sm:$0xff]
  %v615 = vld [vmem:[%s10 + $0x748] sm:$0xff]
  %v616 = vld [vmem:[%s10 + $0x750] sm:$0xff]
  %v617 = vld [vmem:[%s10 + $0x758] sm:$0xff]
  %v618 = vld [vmem:[%s10 + $0x760] sm:$0xff]
  %v619 = vld [vmem:[%s10 + $0x768] sm:$0xff]
  %v620 = vld [vmem:[%s10 + $0x770] sm:$0xff]
  %v621 = vld [vmem:[%s10 + $0x778] sm:$0xff]
  %v622 = vld [vmem:[%s10 + $0x780] sm:$0xff]
  %v623 = vld [vmem:[%s10 + $0x788] sm:$0xff]
  %v624 = vld [vmem:[%s10 + $0x790] sm:$0xff]
  %v625 = vld [vmem:[%s10 + $0x798] sm:$0xff]
  %v626 = vld [vmem:[%s10 + $0x7a0] sm:$0xff]
  %v627 = vld [vmem:[%s10 + $0x7a8] sm:$0xff]
  %v628 = vld [vmem:[%s10 + $0x7b0] sm:$0xff]
  %v629 = vld [vmem:[%s10 + $0x7b8] sm:$0xff]
  %v630 = vld [vmem:[%s10 + $0x7c0] sm:$0xff]
  %v631 = vld [vmem:[%s10 + $0x7c8] sm:$0xff]
  %v632 = vld [vmem:[%s10 + $0x7d0] sm:$0xff]
  %v633 = vld [vmem:[%s10 + $0x7d8] sm:$0xff]
  %v634 = vld [vmem:[%s10 + $0x7e0] sm:$0xff]
  %v635 = vld [vmem:[%s10 + $0x7e8] sm:$0xff]
  %v636 = vld [vmem:[%s10 + $0x7f0] sm:$0xff]
  %v637 = vld [vmem:[%s10 + $0x7f8] sm:$0xff]
  %v638 = vld [vmem:[%s10 + $0x800] sm:$0xff]
  %v639 = vld [vmem:[%s10 + $0x808] sm:$0xff]
  %v640 = vld [vmem:[%s10 + $0x810] sm:$0xff]
  %v641 = vld [vmem:[%s10 + $0x818] sm:$0xff]
  %v642 = vld [vmem:[%s10 + $0x820] sm:$0xff]
  %v643 = vld [vmem:[%s10 + $0x828] sm:$0xff]
  %v644 = vld [vmem:[%s10 + $0x830] sm:$0xff]
  %v645 = vld [vmem:[%s10 + $0x838] sm:$0xff]
  %v646 = vld [vmem:[%s10 + $0x840] sm:$0xff]
  %v647 = vld [vmem:[%s10 + $0x848] sm:$0xff]
  %v648 = vld [vmem:[%s10 + $0x850] sm:$0xff]
  %v649 = vld [vmem:[%s10 + $0x858] sm:$0xff]
  %v650 = vld [vmem:[%s10 + $0x860] sm:$0xff]
  %v651 = vld [vmem:[%s10 + $0x868] sm:$0xff]
  %v652 = vld [vmem:[%s10 + $0x870] sm:$0xff]
  %v653 = vld [vmem:[%s10 + $0x878] sm:$0xff]
  %v654 = vld [vmem:[%s10 + $0x880] sm:$0xff]
  %v655 = vld [vmem:[%s10 + $0x888] sm:$0xff]
  %v656 = vld [vmem:[%s10 + $0x890] sm:$0xff]
  %v657 = vld [vmem:[%s10 + $0x898] sm:$0xff]
  %v658 = vld [vmem:[%s10 + $0x8a0] sm:$0xff]
  %v659 = vld [vmem:[%s10 + $0x8a8] sm:$0xff]
  %v660 = vld [vmem:[%s10 + $0x8b0] sm:$0xff]
  %v661 = vld [vmem:[%s10 + $0x8b8] sm:$0xff]
  %v662 = vld [vmem:[%s10 + $0x8c0] sm:$0xff]
  %v663 = vld [vmem:[%s10 + $0x8c8] sm:$0xff]
  %v664 = vld [vmem:[%s10 + $0x8d0] sm:$0xff]
  %v665 = vld [vmem:[%s10 + $0x8d8] sm:$0xff]
  %v666 = vld [vmem:[%s10 + $0x8e0] sm:$0xff]
  %v667 = vld [vmem:[%s10 + $0x8e8] sm:$0xff]
  %v668 = vld [vmem:[%s10 + $0x8f0] sm:$0xff]
  %v669 = vld [vmem:[%s10 + $0x8f8] sm:$0xff]
  %v670 = vld [vmem:[%s10 + $0x900] sm:$0xff]
  %v671 = vld [vmem:[%s10 + $0x908] sm:$0xff]
  %v672 = vld [vmem:[%s10 + $0x910] sm:$0xff]
  %v673 = vld [vmem:[%s10 + $0x918] sm:$0xff]
  %v674 = vld [vmem:[%s10 + $0x920] sm:$0xff]
  %v675 = vld [vmem:[%s10 + $0x928] sm:$0xff]
  %v676 = vld [vmem:[%s10 + $0x930] sm:$0xff]
  %v677 = vld [vmem:[%s10 + $0x938] sm:$0xff]
  %v678 = vld [vmem:[%s10 + $0x940] sm:$0xff]
  %v679 = vld [vmem:[%s10 + $0x948] sm:$0xff]
  %v680 = vld [vmem:[%s10 + $0x950] sm:$0xff]
  %v681 = vld [vmem:[%s10 + $0x958] sm:$0xff]
  %v682 = vld [vmem:[%s10 + $0x960] sm:$0xff]
  %v683 = vld [vmem:[%s10 + $0x968] sm:$0xff]
  %v684 = vld [vmem:[%s10 + $0x970] sm:$0xff]
  %v685 = vld [vmem:[%s10 + $0x978] sm:$0xff]
  %v686 = vld [vmem:[%s10 + $0x980] sm:$0xff]
  %v687 = vld [vmem:[%s10 + $0x988] sm:$0xff]
  %v688 = vld [vmem:[%s10 + $0x990] sm:$0xff]
  %v689 = vld [vmem:[%s10 + $0x998] sm:$0xff]
  %v690 = vld [vmem:[%s10 + $0x9a0] sm:$0xff]
  %v691 = vld [vmem:[%s10 + $0x9a8] sm:$0xff]
  %v692 = vld [vmem:[%s10 + $0x9b0] sm:$0xff]
  %v693 = vld [vmem:[%s10 + $0x9b8] sm:$0xff]
  %v694 = vld [vmem:[%s10 + $0x9c0] sm:$0xff]
  %v695 = vld [vmem:[%s10 + $0x9c8] sm:$0xff]
  %v696 = vld [vmem:[%s10 + $0x9d0] sm:$0xff]
  %v697 = vld [vmem:[%s10 + $0x9d8] sm:$0xff]
  %v698 = vld [vmem:[%s10 + $0x9e0] sm:$0xff]
  %v699 = vld [vmem:[%s10 + $0x9e8] sm:$0xff]
  %v700 = vld [vmem:[%s10 + $0x9f0] sm:$0xff]
  %v701 = vld [vmem:[%s10 + $0x9f8] sm:$0xff]
  %v702 = vld [vmem:[%s11] sm:$0xff]
  %v703 = vld [vmem:[%s11 + $0x8] sm:$0xff]
  %v704 = vld [vmem:[%s11 + $0x10] sm:$0xff]
  %v705 = vld [vmem:[%s11 + $0x18] sm:$0xff]
  %v706 = vld [vmem:[%s11 + $0x20] sm:$0xff]
  %v707 = vld [vmem:[%s11 + $0x28] sm:$0xff]
  %v708 = vld [vmem:[%s11 + $0x30] sm:$0xff]
  %v709 = vld [vmem:[%s11 + $0x38] sm:$0xff]
  %v710 = vld [vmem:[%s11 + $0x40] sm:$0xff]
  %v711 = vld [vmem:[%s11 + $0x48] sm:$0xff]
  %v712 = vld [vmem:[%s11 + $0x50] sm:$0xff]
  %v713 = vld [vmem:[%s11 + $0x58] sm:$0xff]
  %v714 = vld [vmem:[%s11 + $0x60] sm:$0xff]
  %v715 = vld [vmem:[%s11 + $0x68] sm:$0xff]
  %v716 = vld [vmem:[%s11 + $0x70] sm:$0xff]
  %v717 = vld [vmem:[%s11 + $0x78] sm:$0xff]
  %v718 = vld [vmem:[%s11 + $0x80] sm:$0xff]
  %v719 = vld [vmem:[%s11 + $0x88] sm:$0xff]
  %v720 = vld [vmem:[%s11 + $0x90] sm:$0xff]
  %v721 = vld [vmem:[%s11 + $0x98] sm:$0xff]
  %v722 = vld [vmem:[%s11 + $0xa0] sm:$0xff]
  %v723 = vld [vmem:[%s11 + $0xa8] sm:$0xff]
  %v724 = vld [vmem:[%s11 + $0xb0] sm:$0xff]
  %v725 = vld [vmem:[%s11 + $0xb8] sm:$0xff]
  %v726 = vld [vmem:[%s11 + $0xc0] sm:$0xff]
  %v727 = vld [vmem:[%s11 + $0xc8] sm:$0xff]
  %v728 = vld [vmem:[%s11 + $0xd0] sm:$0xff]
  %v729 = vld [vmem:[%s11 + $0xd8] sm:$0xff]
  %v730 = vld [vmem:[%s11 + $0xe0] sm:$0xff]
  %v731 = vld [vmem:[%s11 + $0xe8] sm:$0xff]
  %v732 = vld [vmem:[%s11 + $0xf0] sm:$0xff]
  %v733 = vld [vmem:[%s11 + $0xf8] sm:$0xff]
  %734 = vmatprep.subr.mxu0 0.0
  %735 = vmatpush1.msra.mxu0 %v702
  %736 = vmatprep.subr.mxu0 0.0
  %737 = vmatpush1.msra.mxu0 %v703
  %738 = vmatprep.subr.mxu0 0.0
  %739 = vmatpush1.msra.mxu0 %v704
  %740 = vmatprep.subr.mxu0 0.0
  %741 = vmatpush1.msra.mxu0 %v705
  %742 = vmatprep.subr.mxu0 0.0
  %743 = vmatpush1.msra.mxu0 %v706
  %744 = vmatprep.subr.mxu0 0.0
  %745 = vmatpush1.msra.mxu0 %v707
  %746 = vmatprep.subr.mxu0 0.0
  %747 = vmatpush1.msra.mxu0 %v708
  %748 = vmatprep.subr.mxu0 0.0
  %749 = vmatpush1.msra.mxu0 %v709
  %750 = vmatprep.subr.mxu0 0.0
  %751 = vmatpush1.msra.mxu0 %v710
  %752 = vmatprep.subr.mxu0 0.0
  %753 = vmatpush1.msra.mxu0 %v711
  %754 = vmatprep.subr.mxu0 0.0
  %755 = vmatpush1.msra.mxu0 %v712
  %756 = vmatprep.subr.mxu0 0.0
  %757 = vmatpush1.msra.mxu0 %v713
  %758 = vmatprep.subr.mxu0 0.0
  %759 = vmatpush1.msra.mxu0 %v714
  %760 = vmatprep.subr.mxu0 0.0
  %761 = vmatpush1.msra.mxu0 %v715
  %762 = vmatprep.subr.mxu0 0.0
  %763 = vmatpush1.msra.mxu0 %v716
  %764 = vmatprep.subr.mxu0 0.0
  %765 = vmatpush1.msra.mxu0 %v717
  %766 = vmatprep.subr.mxu0 0.0
  %767 = vmatpush1.msra.mxu0 %v718
  %768 = vmatprep.subr.mxu0 0.0
  %769 = vmatpush1.msra.mxu0 %v719
  %770 = vmatprep.subr.mxu0 0.0
  %771 = vmatpush1.msra.mxu0 %v720
  %772 = vmatprep.subr.mxu0 0.0
  %773 = vmatpush1.msra.mxu0 %v721
  %774 = vmatprep.subr.mxu0 0.0
  %775 = vmatpush1.msra.mxu0 %v722
  %776 = vmatprep.subr.mxu0 0.0
  %777 = vmatpush1.msra.mxu0 %v723
  %778 = vmatprep.subr.mxu0 0.0
  %779 = vmatpush1.msra.mxu0 %v724
  %780 = vmatprep.subr.mxu0 0.0
  %781 = vmatpush1.msra.mxu0 %v725
  %782 = vmatprep.subr.mxu0 0.0
  %783 = vmatpush1.msra.mxu0 %v726
  %784 = vmatprep.subr.mxu0 0.0
  %785 = vmatpush1.msra.mxu0 %v727
  %786 = vmatprep.subr.mxu0 0.0
  %787 = vmatpush1.msra.mxu0 %v728
  %788 = vmatprep.subr.mxu0 0.0
  %789 = vmatpush1.msra.mxu0 %v729
  %790 = vmatprep.subr.mxu0 0.0
  %791 = vmatpush1.msra.mxu0 %v730
  %792 = vmatprep.subr.mxu0 0.0
  %793 = vmatpush1.msra.mxu0 %v731
  %794 = vmatprep.subr.mxu0 0.0
  %795 = vmatpush1.msra.mxu0 %v732
  %796 = vmatprep.subr.mxu0 0.0
  %797 = vmatpush1.msra.mxu0 %v733
  %798 = vmatprep.mubr.f32.mxu0 %v381
  %799 = vmatmul.mubr.f32.gmra.mrb[0].mxu0 %v380
  %v800 = vpop.f32.mrb[0].mxu0
  %v801 = vadd.f32 0.0, %v800
  %v802 = vpop.f32.mrb[0].mxu0
  %803 = vdwg.mxu0
  %v809 = vcombine.high %v54, %v54
  %v811 = vunpack.c.l.s4 1983009808
  %v812 = vunpack.c.0.s8 %v811
  %v813 = vlaneseq
  %v814 = vshrl.u32 %v813, 7
  %v815 = vsub.s32 %v812, %v814
  %v816 = vrot.slane %v54, %v815
  %v818 = vunpack.c.l.s4 1983009808
  %v819 = vunpack.c.0.s8 %v818
  %v820 = vlaneseq
  %v821 = vshrl.u32 %v820, 7
  %v822 = vsub.s32 %v819, %v821
  %v823 = vrot.slane %v809, %v822
  %v824 = vcombine.high %v816, %v816
  %v825 = vcombine.high %v823, %v823
  %v826 = vcombine.high %v55, %v55
  %v828 = vunpack.c.l.s4 1983009808
  %v829 = vunpack.c.0.s8 %v828
  %v830 = vlaneseq
  %v831 = vshrl.u32 %v830, 7
  %v832 = vsub.s32 %v829, %v831
  %v833 = vrot.slane %v55, %v832
  %v835 = vunpack.c.l.s4 1983009808
  %v836 = vunpack.c.0.s8 %v835
  %v837 = vlaneseq
  %v838 = vshrl.u32 %v837, 7
  %v839 = vsub.s32 %v836, %v838
  %v840 = vrot.slane %v826, %v839
  %v841 = vcombine.high %v833, %v833
  %v842 = vcombine.high %v840, %v840
  %v843 = vcombine.high %v56, %v56
  %v845 = vunpack.c.l.s4 1983009808
  %v846 = vunpack.c.0.s8 %v845
  %v847 = vlaneseq
  %v848 = vshrl.u32 %v847, 7
  %v849 = vsub.s32 %v846, %v848
  %v850 = vrot.slane %v56, %v849
  %v852 = vunpack.c.l.s4 1983009808
  %v853 = vunpack.c.0.s8 %v852
  %v854 = vlaneseq
  %v855 = vshrl.u32 %v854, 7
  %v856 = vsub.s32 %v853, %v855
  %v857 = vrot.slane %v843, %v856
  %v858 = vcombine.high %v850, %v850
  %v859 = vcombine.high %v857, %v857
  %v860 = vcombine.high %v57, %v57
  %v862 = vunpack.c.l.s4 1983009808
  %v863 = vunpack.c.0.s8 %v862
  %v864 = vlaneseq
  %v865 = vshrl.u32 %v864, 7
  %v866 = vsub.s32 %v863, %v865
  %v867 = vrot.slane %v57, %v866
  %v869 = vunpack.c.l.s4 1983009808
  %v870 = vunpack.c.0.s8 %v869
  %v871 = vlaneseq
  %v872 = vshrl.u32 %v871, 7
  %v873 = vsub.s32 %v870, %v872
  %v874 = vrot.slane %v860, %v873
  %v875 = vcombine.high %v867, %v867
  %v876 = vcombine.high %v874, %v874
  %v877 = vcombine.high %v58, %v58
  %v879 = vunpack.c.l.s4 1983009808
  %v880 = vunpack.c.0.s8 %v879
  %v881 = vlaneseq
  %v882 = vshrl.u32 %v881, 7
  %v883 = vsub.s32 %v880, %v882
  %v884 = vrot.slane %v58, %v883
  %v886 = vunpack.c.l.s4 1983009808
  %v887 = vunpack.c.0.s8 %v886
  %v888 = vlaneseq
  %v889 = vshrl.u32 %v888, 7
  %v890 = vsub.s32 %v887, %v889
  %v891 = vrot.slane %v877, %v890
  %v892 = vcombine.high %v884, %v884
  %v893 = vcombine.high %v891, %v891
  %914 = vmatprep.subr.mxu0 0.0
  %915 = vmatpush1.msra.mxu0 %v382
  %916 = vmatprep.subr.mxu0 0.0
  %917 = vmatpush1.msra.mxu0 %v383
  %918 = vmatprep.subr.mxu0 0.0
  %919 = vmatpush1.msra.mxu0 %v384
  %920 = vmatprep.subr.mxu0 0.0
  %921 = vmatpush1.msra.mxu0 %v385
  %922 = vmatprep.subr.mxu0 0.0
  %923 = vmatpush1.msra.mxu0 %v386
  %924 = vmatprep.subr.mxu0 0.0
  %925 = vmatpush1.msra.mxu0 %v387
  %926 = vmatprep.subr.mxu0 0.0
  %927 = vmatpush1.msra.mxu0 %v388
  %928 = vmatprep.subr.mxu0 0.0
  %929 = vmatpush1.msra.mxu0 %v389
  %930 = vmatprep.subr.mxu0 0.0
  %931 = vmatpush1.msra.mxu0 %v390
  %932 = vmatprep.subr.mxu0 0.0
  %933 = vmatpush1.msra.mxu0 %v391
  %934 = vmatprep.subr.mxu0 0.0
  %935 = vmatpush1.msra.mxu0 %v392
  %936 = vmatprep.subr.mxu0 0.0
  %937 = vmatpush1.msra.mxu0 %v393
  %938 = vmatprep.subr.mxu0 0.0
  %939 = vmatpush1.msra.mxu0 %v394
  %940 = vmatprep.subr.mxu0 0.0
  %941 = vmatpush1.msra.mxu0 %v395
  %942 = vmatprep.subr.mxu0 0.0
  %943 = vmatpush1.msra.mxu0 %v396
  %944 = vmatprep.subr.mxu0 0.0
  %945 = vmatpush1.msra.mxu0 %v397
  %946 = vmatprep.subr.mxu0 0.0
  %947 = vmatpush1.msra.mxu0 %v398
  %948 = vmatprep.subr.mxu0 0.0
  %949 = vmatpush1.msra.mxu0 %v399
  %950 = vmatprep.subr.mxu0 0.0
  %951 = vmatpush1.msra.mxu0 %v400
  %952 = vmatprep.subr.mxu0 0.0
  %953 = vmatpush1.msra.mxu0 %v401
  %954 = vmatprep.subr.mxu0 0.0
  %955 = vmatpush1.msra.mxu0 %v402
  %956 = vmatprep.subr.mxu0 0.0
  %957 = vmatpush1.msra.mxu0 %v403
  %958 = vmatprep.subr.mxu0 0.0
  %959 = vmatpush1.msra.mxu0 %v404
  %960 = vmatprep.subr.mxu0 0.0
  %961 = vmatpush1.msra.mxu0 %v405
  %962 = vmatprep.subr.mxu0 0.0
  %963 = vmatpush1.msra.mxu0 %v406
  %964 = vmatprep.subr.mxu0 0.0
  %965 = vmatpush1.msra.mxu0 %v407
  %966 = vmatprep.subr.mxu0 0.0
  %967 = vmatpush1.msra.mxu0 %v408
  %968 = vmatprep.subr.mxu0 0.0
  %969 = vmatpush1.msra.mxu0 %v409
  %970 = vmatprep.subr.mxu0 0.0
  %971 = vmatpush1.msra.mxu0 %v410
  %972 = vmatprep.subr.mxu0 0.0
  %973 = vmatpush1.msra.mxu0 %v411
  %974 = vmatprep.subr.mxu0 0.0
  %975 = vmatpush1.msra.mxu0 %v412
  %976 = vmatprep.subr.mxu0 0.0
  %977 = vmatpush1.msra.mxu0 %v413
  %978 = vmatprep.mubr.f32.mxu0 %v824
  %979 = vmatmul.mubr.f32.gmra.mrb[0].mxu0 %v816
  %v980 = vpop.f32.mrb[0].mxu0
  %v981 = vadd.f32 %v801, %v980
  %v982 = vpop.f32.mrb[0].mxu0
  %983 = vdwg.mxu0
  %984 = vmatprep.subr.mxu0 0.0
  %985 = vmatpush1.msra.mxu0 %v414
  %986 = vmatprep.subr.mxu0 0.0
  %987 = vmatpush1.msra.mxu0 %v415
  %988 = vmatprep.subr.mxu0 0.0
  %989 = vmatpush1.msra.mxu0 %v416
  %990 = vmatprep.subr.mxu0 0.0
  %991 = vmatpush1.msra.mxu0 %v417
  %992 = vmatprep.subr.mxu0 0.0
  %993 = vmatpush1.msra.mxu0 %v418
  %994 = vmatprep.subr.mxu0 0.0
  %995 = vmatpush1.msra.mxu0 %v419
  %996 = vmatprep.subr.mxu0 0.0
  %997 = vmatpush1.msra.mxu0 %v420
  %998 = vmatprep.subr.mxu0 0.0
  %999 = vmatpush1.msra.mxu0 %v421
  %1000 = vmatprep.subr.mxu0 0.0
  %1001 = vmatpush1.msra.mxu0 %v422
  %1002 = vmatprep.subr.mxu0 0.0
  %1003 = vmatpush1.msra.mxu0 %v423
  %1004 = vmatprep.subr.mxu0 0.0
  %1005 = vmatpush1.msra.mxu0 %v424
  %1006 = vmatprep.subr.mxu0 0.0
  %1007 = vmatpush1.msra.mxu0 %v425
  %1008 = vmatprep.subr.mxu0 0.0
  %1009 = vmatpush1.msra.mxu0 %v426
  %1010 = vmatprep.subr.mxu0 0.0
  %1011 = vmatpush1.msra.mxu0 %v427
  %1012 = vmatprep.subr.mxu0 0.0
  %1013 = vmatpush1.msra.mxu0 %v428
  %1014 = vmatprep.subr.mxu0 0.0
  %1015 = vmatpush1.msra.mxu0 %v429
  %1016 = vmatprep.subr.mxu0 0.0
  %1017 = vmatpush1.msra.mxu0 %v430
  %1018 = vmatprep.subr.mxu0 0.0
  %1019 = vmatpush1.msra.mxu0 %v431
  %1020 = vmatprep.subr.mxu0 0.0
  %1021 = vmatpush1.msra.mxu0 %v432
  %1022 = vmatprep.subr.mxu0 0.0
  %1023 = vmatpush1.msra.mxu0 %v433
  %1024 = vmatprep.subr.mxu0 0.0
  %1025 = vmatpush1.msra.mxu0 %v434
  %1026 = vmatprep.subr.mxu0 0.0
  %1027 = vmatpush1.msra.mxu0 %v435
  %1028 = vmatprep.subr.mxu0 0.0
  %1029 = vmatpush1.msra.mxu0 %v436
  %1030 = vmatprep.subr.mxu0 0.0
  %1031 = vmatpush1.msra.mxu0 %v437
  %1032 = vmatprep.subr.mxu0 0.0
  %1033 = vmatpush1.msra.mxu0 %v438
  %1034 = vmatprep.subr.mxu0 0.0
  %1035 = vmatpush1.msra.mxu0 %v439
  %1036 = vmatprep.subr.mxu0 0.0
  %1037 = vmatpush1.msra.mxu0 %v440
  %1038 = vmatprep.subr.mxu0 0.0
  %1039 = vmatpush1.msra.mxu0 %v441
  %1040 = vmatprep.subr.mxu0 0.0
  %1041 = vmatpush1.msra.mxu0 %v442
  %1042 = vmatprep.subr.mxu0 0.0
  %1043 = vmatpush1.msra.mxu0 %v443
  %1044 = vmatprep.subr.mxu0 0.0
  %1045 = vmatpush1.msra.mxu0 %v444
  %1046 = vmatprep.subr.mxu0 0.0
  %1047 = vmatpush1.msra.mxu0 %v445
  %1048 = vmatprep.mubr.f32.mxu0 %v825
  %1049 = vmatmul.mubr.f32.gmra.mrb[0].mxu0 %v823
  %v1050 = vpop.f32.mrb[0].mxu0
  %v1051 = vadd.f32 %v981, %v1050
  %v1052 = vpop.f32.mrb[0].mxu0
  %1053 = vdwg.mxu0
  %1054 = vmatprep.subr.mxu0 0.0
  %1055 = vmatpush1.msra.mxu0 %v446
  %1056 = vmatprep.subr.mxu0 0.0
  %1057 = vmatpush1.msra.mxu0 %v447
  %1058 = vmatprep.subr.mxu0 0.0
  %1059 = vmatpush1.msra.mxu0 %v448
  %1060 = vmatprep.subr.mxu0 0.0
  %1061 = vmatpush1.msra.mxu0 %v449
  %1062 = vmatprep.subr.mxu0 0.0
  %1063 = vmatpush1.msra.mxu0 %v450
  %1064 = vmatprep.subr.mxu0 0.0
  %1065 = vmatpush1.msra.mxu0 %v451
  %1066 = vmatprep.subr.mxu0 0.0
  %1067 = vmatpush1.msra.mxu0 %v452
  %1068 = vmatprep.subr.mxu0 0.0
  %1069 = vmatpush1.msra.mxu0 %v453
  %1070 = vmatprep.subr.mxu0 0.0
  %1071 = vmatpush1.msra.mxu0 %v454
  %1072 = vmatprep.subr.mxu0 0.0
  %1073 = vmatpush1.msra.mxu0 %v455
  %1074 = vmatprep.subr.mxu0 0.0
  %1075 = vmatpush1.msra.mxu0 %v456
  %1076 = vmatprep.subr.mxu0 0.0
  %1077 = vmatpush1.msra.mxu0 %v457
  %1078 = vmatprep.subr.mxu0 0.0
  %1079 = vmatpush1.msra.mxu0 %v458
  %1080 = vmatprep.subr.mxu0 0.0
  %1081 = vmatpush1.msra.mxu0 %v459
  %1082 = vmatprep.subr.mxu0 0.0
  %1083 = vmatpush1.msra.mxu0 %v460
  %1084 = vmatprep.subr.mxu0 0.0
  %1085 = vmatpush1.msra.mxu0 %v461
  %1086 = vmatprep.subr.mxu0 0.0
  %1087 = vmatpush1.msra.mxu0 %v462
  %1088 = vmatprep.subr.mxu0 0.0
  %1089 = vmatpush1.msra.mxu0 %v463
  %1090 = vmatprep.subr.mxu0 0.0
  %1091 = vmatpush1.msra.mxu0 %v464
  %1092 = vmatprep.subr.mxu0 0.0
  %1093 = vmatpush1.msra.mxu0 %v465
  %1094 = vmatprep.subr.mxu0 0.0
  %1095 = vmatpush1.msra.mxu0 %v466
  %1096 = vmatprep.subr.mxu0 0.0
  %1097 = vmatpush1.msra.mxu0 %v467
  %1098 = vmatprep.subr.mxu0 0.0
  %1099 = vmatpush1.msra.mxu0 %v468
  %1100 = vmatprep.subr.mxu0 0.0
  %1101 = vmatpush1.msra.mxu0 %v469
  %1102 = vmatprep.subr.mxu0 0.0
  %1103 = vmatpush1.msra.mxu0 %v470
  %1104 = vmatprep.subr.mxu0 0.0
  %1105 = vmatpush1.msra.mxu0 %v471
  %1106 = vmatprep.subr.mxu0 0.0
  %1107 = vmatpush1.msra.mxu0 %v472
  %1108 = vmatprep.subr.mxu0 0.0
  %1109 = vmatpush1.msra.mxu0 %v473
  %1110 = vmatprep.subr.mxu0 0.0
  %1111 = vmatpush1.msra.mxu0 %v474
  %1112 = vmatprep.subr.mxu0 0.0
  %1113 = vmatpush1.msra.mxu0 %v475
  %1114 = vmatprep.subr.mxu0 0.0
  %1115 = vmatpush1.msra.mxu0 %v476
  %1116 = vmatprep.subr.mxu0 0.0
  %1117 = vmatpush1.msra.mxu0 %v477
  %1118 = vmatprep.mubr.f32.mxu0 %v841
  %1119 = vmatmul.mubr.f32.gmra.mrb[0].mxu0 %v833
  %v1120 = vpop.f32.mrb[0].mxu0
  %v1121 = vadd.f32 %v1051, %v1120
  %v1122 = vpop.f32.mrb[0].mxu0
  %1123 = vdwg.mxu0
  %1124 = vmatprep.subr.mxu0 0.0
  %1125 = vmatpush1.msra.mxu0 %v478
  %1126 = vmatprep.subr.mxu0 0.0
  %1127 = vmatpush1.msra.mxu0 %v479
  %1128 = vmatprep.subr.mxu0 0.0
  %1129 = vmatpush1.msra.mxu0 %v480
  %1130 = vmatprep.subr.mxu0 0.0
  %1131 = vmatpush1.msra.mxu0 %v481
  %1132 = vmatprep.subr.mxu0 0.0
  %1133 = vmatpush1.msra.mxu0 %v482
  %1134 = vmatprep.subr.mxu0 0.0
  %1135 = vmatpush1.msra.mxu0 %v483
  %1136 = vmatprep.subr.mxu0 0.0
  %1137 = vmatpush1.msra.mxu0 %v484
  %1138 = vmatprep.subr.mxu0 0.0
  %1139 = vmatpush1.msra.mxu0 %v485
  %1140 = vmatprep.subr.mxu0 0.0
  %1141 = vmatpush1.msra.mxu0 %v486
  %1142 = vmatprep.subr.mxu0 0.0
  %1143 = vmatpush1.msra.mxu0 %v487
  %1144 = vmatprep.subr.mxu0 0.0
  %1145 = vmatpush1.msra.mxu0 %v488
  %1146 = vmatprep.subr.mxu0 0.0
  %1147 = vmatpush1.msra.mxu0 %v489
  %1148 = vmatprep.subr.mxu0 0.0
  %1149 = vmatpush1.msra.mxu0 %v490
  %1150 = vmatprep.subr.mxu0 0.0
  %1151 = vmatpush1.msra.mxu0 %v491
  %1152 = vmatprep.subr.mxu0 0.0
  %1153 = vmatpush1.msra.mxu0 %v492
  %1154 = vmatprep.subr.mxu0 0.0
  %1155 = vmatpush1.msra.mxu0 %v493
  %1156 = vmatprep.subr.mxu0 0.0
  %1157 = vmatpush1.msra.mxu0 %v494
  %1158 = vmatprep.subr.mxu0 0.0
  %1159 = vmatpush1.msra.mxu0 %v495
  %1160 = vmatprep.subr.mxu0 0.0
  %1161 = vmatpush1.msra.mxu0 %v496
  %1162 = vmatprep.subr.mxu0 0.0
  %1163 = vmatpush1.msra.mxu0 %v497
  %1164 = vmatprep.subr.mxu0 0.0
  %1165 = vmatpush1.msra.mxu0 %v498
  %1166 = vmatprep.subr.mxu0 0.0
  %1167 = vmatpush1.msra.mxu0 %v499
  %1168 = vmatprep.subr.mxu0 0.0
  %1169 = vmatpush1.msra.mxu0 %v500
  %1170 = vmatprep.subr.mxu0 0.0
  %1171 = vmatpush1.msra.mxu0 %v501
  %1172 = vmatprep.subr.mxu0 0.0
  %1173 = vmatpush1.msra.mxu0 %v502
  %1174 = vmatprep.subr.mxu0 0.0
  %1175 = vmatpush1.msra.mxu0 %v503
  %1176 = vmatprep.subr.mxu0 0.0
  %1177 = vmatpush1.msra.mxu0 %v504
  %1178 = vmatprep.subr.mxu0 0.0
  %1179 = vmatpush1.msra.mxu0 %v505
  %1180 = vmatprep.subr.mxu0 0.0
  %1181 = vmatpush1.msra.mxu0 %v506
  %1182 = vmatprep.subr.mxu0 0.0
  %1183 = vmatpush1.msra.mxu0 %v507
  %1184 = vmatprep.subr.mxu0 0.0
  %1185 = vmatpush1.msra.mxu0 %v508
  %1186 = vmatprep.subr.mxu0 0.0
  %1187 = vmatpush1.msra.mxu0 %v509
  %1188 = vmatprep.mubr.f32.mxu0 %v842
  %1189 = vmatmul.mubr.f32.gmra.mrb[0].mxu0 %v840
  %v1190 = vpop.f32.mrb[0].mxu0
  %v1191 = vadd.f32 %v1121, %v1190
  %v1192 = vpop.f32.mrb[0].mxu0
  %1193 = vdwg.mxu0
  %1194 = vmatprep.subr.mxu0 0.0
  %1195 = vmatpush1.msra.mxu0 %v510
  %1196 = vmatprep.subr.mxu0 0.0
  %1197 = vmatpush1.msra.mxu0 %v511
  %1198 = vmatprep.subr.mxu0 0.0
  %1199 = vmatpush1.msra.mxu0 %v512
  %1200 = vmatprep.subr.mxu0 0.0
  %1201 = vmatpush1.msra.mxu0 %v513
  %1202 = vmatprep.subr.mxu0 0.0
  %1203 = vmatpush1.msra.mxu0 %v514
  %1204 = vmatprep.subr.mxu0 0.0
  %1205 = vmatpush1.msra.mxu0 %v515
  %1206 = vmatprep.subr.mxu0 0.0
  %1207 = vmatpush1.msra.mxu0 %v516
  %1208 = vmatprep.subr.mxu0 0.0
  %1209 = vmatpush1.msra.mxu0 %v517
  %1210 = vmatprep.subr.mxu0 0.0
  %1211 = vmatpush1.msra.mxu0 %v518
  %1212 = vmatprep.subr.mxu0 0.0
  %1213 = vmatpush1.msra.mxu0 %v519
  %1214 = vmatprep.subr.mxu0 0.0
  %1215 = vmatpush1.msra.mxu0 %v520
  %1216 = vmatprep.subr.mxu0 0.0
  %1217 = vmatpush1.msra.mxu0 %v521
  %1218 = vmatprep.subr.mxu0 0.0
  %1219 = vmatpush1.msra.mxu0 %v522
  %1220 = vmatprep.subr.mxu0 0.0
  %1221 = vmatpush1.msra.mxu0 %v523
  %1222 = vmatprep.subr.mxu0 0.0
  %1223 = vmatpush1.msra.mxu0 %v524
  %1224 = vmatprep.subr.mxu0 0.0
  %1225 = vmatpush1.msra.mxu0 %v525
  %1226 = vmatprep.subr.mxu0 0.0
  %1227 = vmatpush1.msra.mxu0 %v526
  %1228 = vmatprep.subr.mxu0 0.0
  %1229 = vmatpush1.msra.mxu0 %v527
  %1230 = vmatprep.subr.mxu0 0.0
  %1231 = vmatpush1.msra.mxu0 %v528
  %1232 = vmatprep.subr.mxu0 0.0
  %1233 = vmatpush1.msra.mxu0 %v529
  %1234 = vmatprep.subr.mxu0 0.0
  %1235 = vmatpush1.msra.mxu0 %v530
  %1236 = vmatprep.subr.mxu0 0.0
  %1237 = vmatpush1.msra.mxu0 %v531
  %1238 = vmatprep.subr.mxu0 0.0
  %1239 = vmatpush1.msra.mxu0 %v532
  %1240 = vmatprep.subr.mxu0 0.0
  %1241 = vmatpush1.msra.mxu0 %v533
  %1242 = vmatprep.subr.mxu0 0.0
  %1243 = vmatpush1.msra.mxu0 %v534
  %1244 = vmatprep.subr.mxu0 0.0
  %1245 = vmatpush1.msra.mxu0 %v535
  %1246 = vmatprep.subr.mxu0 0.0
  %1247 = vmatpush1.msra.mxu0 %v536
  %1248 = vmatprep.subr.mxu0 0.0
  %1249 = vmatpush1.msra.mxu0 %v537
  %1250 = vmatprep.subr.mxu0 0.0
  %1251 = vmatpush1.msra.mxu0 %v538
  %1252 = vmatprep.subr.mxu0 0.0
  %1253 = vmatpush1.msra.mxu0 %v539
  %1254 = vmatprep.subr.mxu0 0.0
  %1255 = vmatpush1.msra.mxu0 %v540
  %1256 = vmatprep.subr.mxu0 0.0
  %1257 = vmatpush1.msra.mxu0 %v541
  %1258 = vmatprep.mubr.f32.mxu0 %v858
  %1259 = vmatmul.mubr.f32.gmra.mrb[0].mxu0 %v850
  %v1260 = vpop.f32.mrb[0].mxu0
  %v1261 = vadd.f32 %v1191, %v1260
  %v1262 = vpop.f32.mrb[0].mxu0
  %1263 = vdwg.mxu0
  %1264 = vmatprep.subr.mxu0 0.0
  %1265 = vmatpush1.msra.mxu0 %v542
  %1266 = vmatprep.subr.mxu0 0.0
  %1267 = vmatpush1.msra.mxu0 %v543
  %1268 = vmatprep.subr.mxu0 0.0
  %1269 = vmatpush1.msra.mxu0 %v544
  %1270 = vmatprep.subr.mxu0 0.0
  %1271 = vmatpush1.msra.mxu0 %v545
  %1272 = vmatprep.subr.mxu0 0.0
  %1273 = vmatpush1.msra.mxu0 %v546
  %1274 = vmatprep.subr.mxu0 0.0
  %1275 = vmatpush1.msra.mxu0 %v547
  %1276 = vmatprep.subr.mxu0 0.0
  %1277 = vmatpush1.msra.mxu0 %v548
  %1278 = vmatprep.subr.mxu0 0.0
  %1279 = vmatpush1.msra.mxu0 %v549
  %1280 = vmatprep.subr.mxu0 0.0
  %1281 = vmatpush1.msra.mxu0 %v550
  %1282 = vmatprep.subr.mxu0 0.0
  %1283 = vmatpush1.msra.mxu0 %v551
  %1284 = vmatprep.subr.mxu0 0.0
  %1285 = vmatpush1.msra.mxu0 %v552
  %1286 = vmatprep.subr.mxu0 0.0
  %1287 = vmatpush1.msra.mxu0 %v553
  %1288 = vmatprep.subr.mxu0 0.0
  %1289 = vmatpush1.msra.mxu0 %v554
  %1290 = vmatprep.subr.mxu0 0.0
  %1291 = vmatpush1.msra.mxu0 %v555
  %1292 = vmatprep.subr.mxu0 0.0
  %1293 = vmatpush1.msra.mxu0 %v556
  %1294 = vmatprep.subr.mxu0 0.0
  %1295 = vmatpush1.msra.mxu0 %v557
  %1296 = vmatprep.subr.mxu0 0.0
  %1297 = vmatpush1.msra.mxu0 %v558
  %1298 = vmatprep.subr.mxu0 0.0
  %1299 = vmatpush1.msra.mxu0 %v559
  %1300 = vmatprep.subr.mxu0 0.0
  %1301 = vmatpush1.msra.mxu0 %v560
  %1302 = vmatprep.subr.mxu0 0.0
  %1303 = vmatpush1.msra.mxu0 %v561
  %1304 = vmatprep.subr.mxu0 0.0
  %1305 = vmatpush1.msra.mxu0 %v562
  %1306 = vmatprep.subr.mxu0 0.0
  %1307 = vmatpush1.msra.mxu0 %v563
  %1308 = vmatprep.subr.mxu0 0.0
  %1309 = vmatpush1.msra.mxu0 %v564
  %1310 = vmatprep.subr.mxu0 0.0
  %1311 = vmatpush1.msra.mxu0 %v565
  %1312 = vmatprep.subr.mxu0 0.0
  %1313 = vmatpush1.msra.mxu0 %v566
  %1314 = vmatprep.subr.mxu0 0.0
  %1315 = vmatpush1.msra.mxu0 %v567
  %1316 = vmatprep.subr.mxu0 0.0
  %1317 = vmatpush1.msra.mxu0 %v568
  %1318 = vmatprep.subr.mxu0 0.0
  %1319 = vmatpush1.msra.mxu0 %v569
  %1320 = vmatprep.subr.mxu0 0.0
  %1321 = vmatpush1.msra.mxu0 %v570
  %1322 = vmatprep.subr.mxu0 0.0
  %1323 = vmatpush1.msra.mxu0 %v571
  %1324 = vmatprep.subr.mxu0 0.0
  %1325 = vmatpush1.msra.mxu0 %v572
  %1326 = vmatprep.subr.mxu0 0.0
  %1327 = vmatpush1.msra.mxu0 %v573
  %1328 = vmatprep.mubr.f32.mxu0 %v859
  %1329 = vmatmul.mubr.f32.gmra.mrb[0].mxu0 %v857
  %v1330 = vpop.f32.mrb[0].mxu0
  %v1331 = vadd.f32 %v1261, %v1330
  %v1332 = vpop.f32.mrb[0].mxu0
  %1333 = vdwg.mxu0
  %1334 = vmatprep.subr.mxu0 0.0
  %1335 = vmatpush1.msra.mxu0 %v574
  %1336 = vmatprep.subr.mxu0 0.0
  %1337 = vmatpush1.msra.mxu0 %v575
  %1338 = vmatprep.subr.mxu0 0.0
  %1339 = vmatpush1.msra.mxu0 %v576
  %1340 = vmatprep.subr.mxu0 0.0
  %1341 = vmatpush1.msra.mxu0 %v577
  %1342 = vmatprep.subr.mxu0 0.0
  %1343 = vmatpush1.msra.mxu0 %v578
  %1344 = vmatprep.subr.mxu0 0.0
  %1345 = vmatpush1.msra.mxu0 %v579
  %1346 = vmatprep.subr.mxu0 0.0
  %1347 = vmatpush1.msra.mxu0 %v580
  %1348 = vmatprep.subr.mxu0 0.0
  %1349 = vmatpush1.msra.mxu0 %v581
  %1350 = vmatprep.subr.mxu0 0.0
  %1351 = vmatpush1.msra.mxu0 %v582
  %1352 = vmatprep.subr.mxu0 0.0
  %1353 = vmatpush1.msra.mxu0 %v583
  %1354 = vmatprep.subr.mxu0 0.0
  %1355 = vmatpush1.msra.mxu0 %v584
  %1356 = vmatprep.subr.mxu0 0.0
  %1357 = vmatpush1.msra.mxu0 %v585
  %1358 = vmatprep.subr.mxu0 0.0
  %1359 = vmatpush1.msra.mxu0 %v586
  %1360 = vmatprep.subr.mxu0 0.0
  %1361 = vmatpush1.msra.mxu0 %v587
  %1362 = vmatprep.subr.mxu0 0.0
  %1363 = vmatpush1.msra.mxu0 %v588
  %1364 = vmatprep.subr.mxu0 0.0
  %1365 = vmatpush1.msra.mxu0 %v589
  %1366 = vmatprep.subr.mxu0 0.0
  %1367 = vmatpush1.msra.mxu0 %v590
  %1368 = vmatprep.subr.mxu0 0.0
  %1369 = vmatpush1.msra.mxu0 %v591
  %1370 = vmatprep.subr.mxu0 0.0
  %1371 = vmatpush1.msra.mxu0 %v592
  %1372 = vmatprep.subr.mxu0 0.0
  %1373 = vmatpush1.msra.mxu0 %v593
  %1374 = vmatprep.subr.mxu0 0.0
  %1375 = vmatpush1.msra.mxu0 %v594
  %1376 = vmatprep.subr.mxu0 0.0
  %1377 = vmatpush1.msra.mxu0 %v595
  %1378 = vmatprep.subr.mxu0 0.0
  %1379 = vmatpush1.msra.mxu0 %v596
  %1380 = vmatprep.subr.mxu0 0.0
  %1381 = vmatpush1.msra.mxu0 %v597
  %1382 = vmatprep.subr.mxu0 0.0
  %1383 = vmatpush1.msra.mxu0 %v598
  %1384 = vmatprep.subr.mxu0 0.0
  %1385 = vmatpush1.msra.mxu0 %v599
  %1386 = vmatprep.subr.mxu0 0.0
  %1387 = vmatpush1.msra.mxu0 %v600
  %1388 = vmatprep.subr.mxu0 0.0
  %1389 = vmatpush1.msra.mxu0 %v601
  %1390 = vmatprep.subr.mxu0 0.0
  %1391 = vmatpush1.msra.mxu0 %v602
  %1392 = vmatprep.subr.mxu0 0.0
  %1393 = vmatpush1.msra.mxu0 %v603
  %1394 = vmatprep.subr.mxu0 0.0
  %1395 = vmatpush1.msra.mxu0 %v604
  %1396 = vmatprep.subr.mxu0 0.0
  %1397 = vmatpush1.msra.mxu0 %v605
  %1398 = vmatprep.mubr.f32.mxu0 %v875
  %1399 = vmatmul.mubr.f32.gmra.mrb[0].mxu0 %v867
  %v1400 = vpop.f32.mrb[0].mxu0
  %v1401 = vadd.f32 %v1331, %v1400
  %v1402 = vpop.f32.mrb[0].mxu0
  %1403 = vdwg.mxu0
  %1404 = vmatprep.subr.mxu0 0.0
  %1405 = vmatpush1.msra.mxu0 %v606
  %1406 = vmatprep.subr.mxu0 0.0
  %1407 = vmatpush1.msra.mxu0 %v607
  %1408 = vmatprep.subr.mxu0 0.0
  %1409 = vmatpush1.msra.mxu0 %v608
  %1410 = vmatprep.subr.mxu0 0.0
  %1411 = vmatpush1.msra.mxu0 %v609
  %1412 = vmatprep.subr.mxu0 0.0
  %1413 = vmatpush1.msra.mxu0 %v610
  %1414 = vmatprep.subr.mxu0 0.0
  %1415 = vmatpush1.msra.mxu0 %v611
  %1416 = vmatprep.subr.mxu0 0.0
  %1417 = vmatpush1.msra.mxu0 %v612
  %1418 = vmatprep.subr.mxu0 0.0
  %1419 = vmatpush1.msra.mxu0 %v613
  %1420 = vmatprep.subr.mxu0 0.0
  %1421 = vmatpush1.msra.mxu0 %v614
  %1422 = vmatprep.subr.mxu0 0.0
  %1423 = vmatpush1.msra.mxu0 %v615
  %1424 = vmatprep.subr.mxu0 0.0
  %1425 = vmatpush1.msra.mxu0 %v616
  %1426 = vmatprep.subr.mxu0 0.0
  %1427 = vmatpush1.msra.mxu0 %v617
  %1428 = vmatprep.subr.mxu0 0.0
  %1429 = vmatpush1.msra.mxu0 %v618
  %1430 = vmatprep.subr.mxu0 0.0
  %1431 = vmatpush1.msra.mxu0 %v619
  %1432 = vmatprep.subr.mxu0 0.0
  %1433 = vmatpush1.msra.mxu0 %v620
  %1434 = vmatprep.subr.mxu0 0.0
  %1435 = vmatpush1.msra.mxu0 %v621
  %1436 = vmatprep.subr.mxu0 0.0
  %1437 = vmatpush1.msra.mxu0 %v622
  %1438 = vmatprep.subr.mxu0 0.0
  %1439 = vmatpush1.msra.mxu0 %v623
  %1440 = vmatprep.subr.mxu0 0.0
  %1441 = vmatpush1.msra.mxu0 %v624
  %1442 = vmatprep.subr.mxu0 0.0
  %1443 = vmatpush1.msra.mxu0 %v625
  %1444 = vmatprep.subr.mxu0 0.0
  %1445 = vmatpush1.msra.mxu0 %v626
  %1446 = vmatprep.subr.mxu0 0.0
  %1447 = vmatpush1.msra.mxu0 %v627
  %1448 = vmatprep.subr.mxu0 0.0
  %1449 = vmatpush1.msra.mxu0 %v628
  %1450 = vmatprep.subr.mxu0 0.0
  %1451 = vmatpush1.msra.mxu0 %v629
  %1452 = vmatprep.subr.mxu0 0.0
  %1453 = vmatpush1.msra.mxu0 %v630
  %1454 = vmatprep.subr.mxu0 0.0
  %1455 = vmatpush1.msra.mxu0 %v631
  %1456 = vmatprep.subr.mxu0 0.0
  %1457 = vmatpush1.msra.mxu0 %v632
  %1458 = vmatprep.subr.mxu0 0.0
  %1459 = vmatpush1.msra.mxu0 %v633
  %1460 = vmatprep.subr.mxu0 0.0
  %1461 = vmatpush1.msra.mxu0 %v634
  %1462 = vmatprep.subr.mxu0 0.0
  %1463 = vmatpush1.msra.mxu0 %v635
  %1464 = vmatprep.subr.mxu0 0.0
  %1465 = vmatpush1.msra.mxu0 %v636
  %1466 = vmatprep.subr.mxu0 0.0
  %1467 = vmatpush1.msra.mxu0 %v637
  %1468 = vmatprep.mubr.f32.mxu0 %v876
  %1469 = vmatmul.mubr.f32.gmra.mrb[0].mxu0 %v874
  %v1470 = vpop.f32.mrb[0].mxu0
  %v1471 = vadd.f32 %v1401, %v1470
  %v1472 = vpop.f32.mrb[0].mxu0
  %1473 = vdwg.mxu0
  %1474 = vmatprep.subr.mxu0 0.0
  %1475 = vmatpush1.msra.mxu0 %v638
  %1476 = vmatprep.subr.mxu0 0.0
  %1477 = vmatpush1.msra.mxu0 %v639
  %1478 = vmatprep.subr.mxu0 0.0
  %1479 = vmatpush1.msra.mxu0 %v640
  %1480 = vmatprep.subr.mxu0 0.0
  %1481 = vmatpush1.msra.mxu0 %v641
  %1482 = vmatprep.subr.mxu0 0.0
  %1483 = vmatpush1.msra.mxu0 %v642
  %1484 = vmatprep.subr.mxu0 0.0
  %1485 = vmatpush1.msra.mxu0 %v643
  %1486 = vmatprep.subr.mxu0 0.0
  %1487 = vmatpush1.msra.mxu0 %v644
  %1488 = vmatprep.subr.mxu0 0.0
  %1489 = vmatpush1.msra.mxu0 %v645
  %1490 = vmatprep.subr.mxu0 0.0
  %1491 = vmatpush1.msra.mxu0 %v646
  %1492 = vmatprep.subr.mxu0 0.0
  %1493 = vmatpush1.msra.mxu0 %v647
  %1494 = vmatprep.subr.mxu0 0.0
  %1495 = vmatpush1.msra.mxu0 %v648
  %1496 = vmatprep.subr.mxu0 0.0
  %1497 = vmatpush1.msra.mxu0 %v649
  %1498 = vmatprep.subr.mxu0 0.0
  %1499 = vmatpush1.msra.mxu0 %v650
  %1500 = vmatprep.subr.mxu0 0.0
  %1501 = vmatpush1.msra.mxu0 %v651
  %1502 = vmatprep.subr.mxu0 0.0
  %1503 = vmatpush1.msra.mxu0 %v652
  %1504 = vmatprep.subr.mxu0 0.0
  %1505 = vmatpush1.msra.mxu0 %v653
  %1506 = vmatprep.subr.mxu0 0.0
  %1507 = vmatpush1.msra.mxu0 %v654
  %1508 = vmatprep.subr.mxu0 0.0
  %1509 = vmatpush1.msra.mxu0 %v655
  %1510 = vmatprep.subr.mxu0 0.0
  %1511 = vmatpush1.msra.mxu0 %v656
  %1512 = vmatprep.subr.mxu0 0.0
  %1513 = vmatpush1.msra.mxu0 %v657
  %1514 = vmatprep.subr.mxu0 0.0
  %1515 = vmatpush1.msra.mxu0 %v658
  %1516 = vmatprep.subr.mxu0 0.0
  %1517 = vmatpush1.msra.mxu0 %v659
  %1518 = vmatprep.subr.mxu0 0.0
  %1519 = vmatpush1.msra.mxu0 %v660
  %1520 = vmatprep.subr.mxu0 0.0
  %1521 = vmatpush1.msra.mxu0 %v661
  %1522 = vmatprep.subr.mxu0 0.0
  %1523 = vmatpush1.msra.mxu0 %v662
  %1524 = vmatprep.subr.mxu0 0.0
  %1525 = vmatpush1.msra.mxu0 %v663
  %1526 = vmatprep.subr.mxu0 0.0
  %1527 = vmatpush1.msra.mxu0 %v664
  %1528 = vmatprep.subr.mxu0 0.0
  %1529 = vmatpush1.msra.mxu0 %v665
  %1530 = vmatprep.subr.mxu0 0.0
  %1531 = vmatpush1.msra.mxu0 %v666
  %1532 = vmatprep.subr.mxu0 0.0
  %1533 = vmatpush1.msra.mxu0 %v667
  %1534 = vmatprep.subr.mxu0 0.0
  %1535 = vmatpush1.msra.mxu0 %v668
  %1536 = vmatprep.subr.mxu0 0.0
  %1537 = vmatpush1.msra.mxu0 %v669
  %1538 = vmatprep.mubr.f32.mxu0 %v892
  %1539 = vmatmul.mubr.f32.gmra.mrb[0].mxu0 %v884
  %v1540 = vpop.f32.mrb[0].mxu0
  %v1541 = vadd.f32 %v1471, %v1540
  %v1542 = vpop.f32.mrb[0].mxu0
  %1543 = vdwg.mxu0
  %1544 = vmatprep.subr.mxu0 0.0
  %1545 = vmatpush1.msra.mxu0 %v670
  %1546 = vmatprep.subr.mxu0 0.0
  %1547 = vmatpush1.msra.mxu0 %v671
  %1548 = vmatprep.subr.mxu0 0.0
  %1549 = vmatpush1.msra.mxu0 %v672
  %1550 = vmatprep.subr.mxu0 0.0
  %1551 = vmatpush1.msra.mxu0 %v673
  %1552 = vmatprep.subr.mxu0 0.0
  %1553 = vmatpush1.msra.mxu0 %v674
  %1554 = vmatprep.subr.mxu0 0.0
  %1555 = vmatpush1.msra.mxu0 %v675
  %1556 = vmatprep.subr.mxu0 0.0
  %1557 = vmatpush1.msra.mxu0 %v676
  %1558 = vmatprep.subr.mxu0 0.0
  %1559 = vmatpush1.msra.mxu0 %v677
  %1560 = vmatprep.subr.mxu0 0.0
  %1561 = vmatpush1.msra.mxu0 %v678
  %1562 = vmatprep.subr.mxu0 0.0
  %1563 = vmatpush1.msra.mxu0 %v679
  %1564 = vmatprep.subr.mxu0 0.0
  %1565 = vmatpush1.msra.mxu0 %v680
  %1566 = vmatprep.subr.mxu0 0.0
  %1567 = vmatpush1.msra.mxu0 %v681
  %1568 = vmatprep.subr.mxu0 0.0
  %1569 = vmatpush1.msra.mxu0 %v682
  %1570 = vmatprep.subr.mxu0 0.0
  %1571 = vmatpush1.msra.mxu0 %v683
  %1572 = vmatprep.subr.mxu0 0.0
  %1573 = vmatpush1.msra.mxu0 %v684
  %1574 = vmatprep.subr.mxu0 0.0
  %1575 = vmatpush1.msra.mxu0 %v685
  %1576 = vmatprep.subr.mxu0 0.0
  %1577 = vmatpush1.msra.mxu0 %v686
  %1578 = vmatprep.subr.mxu0 0.0
  %1579 = vmatpush1.msra.mxu0 %v687
  %1580 = vmatprep.subr.mxu0 0.0
  %1581 = vmatpush1.msra.mxu0 %v688
  %1582 = vmatprep.subr.mxu0 0.0
  %1583 = vmatpush1.msra.mxu0 %v689
  %1584 = vmatprep.subr.mxu0 0.0
  %1585 = vmatpush1.msra.mxu0 %v690
  %1586 = vmatprep.subr.mxu0 0.0
  %1587 = vmatpush1.msra.mxu0 %v691
  %1588 = vmatprep.subr.mxu0 0.0
  %1589 = vmatpush1.msra.mxu0 %v692
  %1590 = vmatprep.subr.mxu0 0.0
  %1591 = vmatpush1.msra.mxu0 %v693
  %1592 = vmatprep.subr.mxu0 0.0
  %1593 = vmatpush1.msra.mxu0 %v694
  %1594 = vmatprep.subr.mxu0 0.0
  %1595 = vmatpush1.msra.mxu0 %v695
  %1596 = vmatprep.subr.mxu0 0.0
  %1597 = vmatpush1.msra.mxu0 %v696
  %1598 = vmatprep.subr.mxu0 0.0
  %1599 = vmatpush1.msra.mxu0 %v697
  %1600 = vmatprep.subr.mxu0 0.0
  %1601 = vmatpush1.msra.mxu0 %v698
  %1602 = vmatprep.subr.mxu0 0.0
  %1603 = vmatpush1.msra.mxu0 %v699
  %1604 = vmatprep.subr.mxu0 0.0
  %1605 = vmatpush1.msra.mxu0 %v700
  %1606 = vmatprep.subr.mxu0 0.0
  %1607 = vmatpush1.msra.mxu0 %v701
  %1608 = vmatprep.mubr.f32.mxu0 %v893
  %1609 = vmatmul.mubr.f32.gmra.mrb[0].mxu0 %v891
  %v1610 = vpop.f32.mrb[0].mxu0
  %v1611 = vadd.f32 %v1541, %v1610
  %v1612 = vpop.f32.mrb[0].mxu0
  %1613 = vdwg.mxu0
  %v1614 = vld [vmem:[%s12] sm:$0x1]
  %v1616 = vlaneseq
  %v1617 = vshrl.u32 %v1616, 7
  %v1618 = vsub.s32 0, %v1617
  %v1619 = vrot.slane %v1614, %v1618
  %v1621 = vadd.f32 %v1611, %v1619
  %1622 = vst [vmem:[%s13] sm:$0x3] %v1621
  // Predicated region
  $region54: #{efficient_network_forward.3} parent=0 // pred_check
    _
  $region55: #{efficient_network_forward.3} parent=0 // pred_check_branch
    %1624 = sbr.rel (0) target = $region57
  $region56: #{efficient_network_forward.3} parent=0 // pred_region
    _
  $region57: #{efficient_network_forward.3} parent=0 // pred_fallthru
    _
  // Predicated region
  $region58: #{efficient_network_forward.3} parent=0 // pred_check
    _
  $region59: #{efficient_network_forward.3} parent=0 // pred_check_branch
    %1626 = sbr.rel (0) target = $region61
  $region60: #{efficient_network_forward.3} parent=0 // pred_region
    _
  $region61: #{efficient_network_forward.3} parent=0 // pred_fallthru
    _

// kernel: efficient_network_forward.2
$region0: #{efficient_network_forward.2}
  #allocation0 [shape = 'u32[]', space=smem, size = 0x4, offset = 0x4, fixed_abs, tag = 'smem constant byte address 0x4 - core index']
  #allocation1 [shape = 'u32[144,128]{1,0:T(1,128)}', space=vmem, size = 0x12000, scoped, tag = 'internal scratch']
  %s0 = inlined_call_operand.vmem [shape: bf16[2,128,32], index: 0, kind: input, shape index: {}]
  %s1 = inlined_call_operand.hbm [shape: bf16[32,128], index: 1, kind: input, shape index: {}]
  %s2 = inlined_call_operand.hbm [shape: f32[1,128], index: 2, kind: input, shape index: {}]
  %s3 = inlined_call_operand.hbm [shape: bf16[128,2560], index: 3, kind: input, shape index: {}]
  %s4 = inlined_call_operand.hbm [shape: f32[1,2560], index: 4, kind: input, shape index: {}]
  %s5 = inlined_call_operand.vmem [shape: f32[2,2,1,2560], index: 5, kind: output, shape index: {}]
  %s6 = sld [smem:[#allocation0]]
  $region77: #{efficient_network_forward.2} parent=0
    _
  %s8 = ssub.s32 1, %s6
  %s9 = scalar_select 0, %s8, %s6
  $region1: #{efficient_network_forward.2} parent=0
    #allocation2 [shape = 'u8[8192]{0}', space=vmem, size = 0x2000, scoped, tag = 'input window, operand 1, single buffered']
    #allocation3 [shape = 's32[2]{0}', space=sflag, size = 0x8, scoped, tag = 'scoped memory for efficient_network_forward.2']
    #allocation4 [shape = 'u8[512]{0}', space=vmem, size = 0x400, scoped, tag = 'input window, operand 2, single buffered']
    #allocation5 [shape = 's32[1]{0}', space=sflag, size = 0x4, scoped, tag = 'scoped memory for efficient_network_forward.2']
    #allocation6 [shape = 'u8[655360]{0}', space=vmem, size = 0xa0000, scoped, tag = 'input window, operand 3, single buffered']
    #allocation7 [shape = 'u8[10240]{0}', space=vmem, size = 0x2800, scoped, tag = 'input window, operand 4, single buffered']
    #allocation8 [shape = 's32[1]{0}', space=sflag, size = 0x4, scoped, tag = 'scoped memory for efficient_network_forward.2']
    %10 = vsyncpa [#allocation3], 0
    %11 = vsyncpa [#allocation5], 0
    %12 = vsyncpa [#allocation8], 0
    loop: start=0, step=1, limit=6
    $region2: #{efficient_network_forward.2} parent=1 // loop_pre_header
      _
    $region3: #{efficient_network_forward.2} parent=1 // loop_header
      %s14 = sphi 0, %s18
      %p15 = scmp.ge.s32.totalorder %s14, 6
      %s21 = sphi 0, %s40
      %s22 = sphi 0, %s36
      %s23 = sphi 0, %s32
      %s24 = sphi 0, %s21
      %s25 = sphi 0, %s22
      %s26 = sphi 0, %s23
      %s27 = sphi 0, %s24
      %s28 = sphi 0, %s25
      %s29 = sphi 0, %s26
      %s47 = sphi 0, %s49
      %s50 = sphi 0, %s47
      %s51 = sphi 0, %s50
      %s67 = sphi 0, %s51
      %s71 = sphi 0, %s71
      %s73 = sphi 0, %s71
      %s74 = sphi 0, %s73
      %s88 = sphi 0, %s74
      %s92 = sphi 0, %s92
      %s94 = sphi 0, %s92
      %s95 = sphi 0, %s94
      %s109 = sphi 0, %s95
      %s113 = sphi 0, %s113
      %s115 = sphi 0, %s113
      %s116 = sphi 0, %s115
      %s130 = sphi 0, %s116
      %s134 = sphi 0, %s134
      %s136 = sphi 0, %s134
      %s137 = sphi 0, %s136
      %s151 = sphi 0, %s137
      %s159 = sphi 0, %s161
      %s162 = sphi 0, %s159
      %s163 = sphi 0, %s162
      %s179 = sphi 0, %s163
    $region4: #{efficient_network_forward.2} parent=1 // loop_header_branch
      %17 = sbr.rel (%p15) target = $region8
    $region5: #{efficient_network_forward.2} parent=1 // loop_body
      %s19 = ssub.s32 %s14, 1
      %s20 = ssub.s32 %s14, 2
      %s30 = sadd.s32 1, %s23
      %p31 = scmp.ge.s32.totalorder %s30, 1
      %s32 = scalar_select %p31, 0, %s30
      %s33 = sadd.s32 1, %s22
      %s34 = scalar_select %p31, %s33, %s22
      %p35 = scmp.ge.s32.totalorder %s34, 2
      %s36 = scalar_select %p35, 0, %s34
      %s37 = sadd.s32 1, %s21
      %s38 = scalar_select %p35, %s37, %s21
      %p39 = scmp.ge.s32.totalorder %s38, 2
      %s40 = scalar_select %p39, 0, %s38
      %s41 = sadd.s32 %s22, %s23
      %s42 = sadd.s32 %s36, %s32
      %s43 = ssub.s32 %s21, %s40
      %s44 = ssub.s32 %s41, %s42
      %s45 = sor.u32 %s43, %s44
      %p46 = scmp.eq.s32.totalorder %s45, 0
      %s48 = sadd.s32 %s47, 1
      %s49 = scalar_select %p46, %s47, %s48
      %p52 = pneg %p46
      %p53 = scmp.eq.s32.totalorder %s14, 3
      %p54 = por %p52, %p53
      %p55 = scmp.ne.s32.totalorder %s47, %s50
      %p56 = scmp.eq.s32.totalorder %s14, 0
      %p57 = por %p55, %p56
      %p58 = scmp.ne.s32.totalorder %s47, %s50
      %p59 = scmp.eq.s32.totalorder %s19, 3
      %p60 = por %p58, %p59
      %p61 = scmp.ne.s32.totalorder %s50, %s51
      %p62 = scmp.eq.s32.totalorder %s19, 0
      %p63 = por %p61, %p62
      %p64 = scmp.ne.s32.totalorder %s50, %s51
      %p65 = scmp.eq.s32.totalorder %s20, 3
      %p66 = por %p64, %p65
      %p68 = scmp.ne.s32.totalorder %s51, %s67
      %p69 = scmp.eq.s32.totalorder %s20, 0
      %p70 = por %p68, %p69
      %s72 = sadd.s32 %s71, 1
      %p75 = scmp.eq.s32.totalorder %s14, 3
      %p76 = scmp.ne.s32.totalorder %s71, %s73
      %p77 = scmp.eq.s32.totalorder %s14, 0
      %p78 = por %p76, %p77
      %p79 = scmp.ne.s32.totalorder %s71, %s73
      %p80 = scmp.eq.s32.totalorder %s19, 3
      %p81 = por %p79, %p80
      %p82 = scmp.ne.s32.totalorder %s73, %s74
      %p83 = scmp.eq.s32.totalorder %s19, 0
      %p84 = por %p82, %p83
      %p85 = scmp.ne.s32.totalorder %s73, %s74
      %p86 = scmp.eq.s32.totalorder %s20, 3
      %p87 = por %p85, %p86
      %p89 = scmp.ne.s32.totalorder %s74, %s88
      %p90 = scmp.eq.s32.totalorder %s20, 0
      %p91 = por %p89, %p90
      %s93 = sadd.s32 %s92, 1
      %p96 = scmp.eq.s32.totalorder %s14, 3
      %p97 = scmp.ne.s32.totalorder %s92, %s94
      %p98 = scmp.eq.s32.totalorder %s14, 0
      %p99 = por %p97, %p98
      %p100 = scmp.ne.s32.totalorder %s92, %s94
      %p101 = scmp.eq.s32.totalorder %s19, 3
      %p102 = por %p100, %p101
      %p103 = scmp.ne.s32.totalorder %s94, %s95
      %p104 = scmp.eq.s32.totalorder %s19, 0
      %p105 = por %p103, %p104
      %p106 = scmp.ne.s32.totalorder %s94, %s95
      %p107 = scmp.eq.s32.totalorder %s20, 3
      %p108 = por %p106, %p107
      %p110 = scmp.ne.s32.totalorder %s95, %s109
      %p111 = scmp.eq.s32.totalorder %s20, 0
      %p112 = por %p110, %p111
      %s114 = sadd.s32 %s113, 1
      %p117 = scmp.eq.s32.totalorder %s14, 3
      %p118 = scmp.ne.s32.totalorder %s113, %s115
      %p119 = scmp.eq.s32.totalorder %s14, 0
      %p120 = por %p118, %p119
      %p121 = scmp.ne.s32.totalorder %s113, %s115
      %p122 = scmp.eq.s32.totalorder %s19, 3
      %p123 = por %p121, %p122
      %p124 = scmp.ne.s32.totalorder %s115, %s116
      %p125 = scmp.eq.s32.totalorder %s19, 0
      %p126 = por %p124, %p125
      %p127 = scmp.ne.s32.totalorder %s115, %s116
      %p128 = scmp.eq.s32.totalorder %s20, 3
      %p129 = por %p127, %p128
      %p131 = scmp.ne.s32.totalorder %s116, %s130
      %p132 = scmp.eq.s32.totalorder %s20, 0
      %p133 = por %p131, %p132
      %s135 = sadd.s32 %s134, 1
      %p138 = scmp.eq.s32.totalorder %s14, 3
      %p139 = scmp.ne.s32.totalorder %s134, %s136
      %p140 = scmp.eq.s32.totalorder %s14, 0
      %p141 = por %p139, %p140
      %p142 = scmp.ne.s32.totalorder %s134, %s136
      %p143 = scmp.eq.s32.totalorder %s19, 3
      %p144 = por %p142, %p143
      %p145 = scmp.ne.s32.totalorder %s136, %s137
      %p146 = scmp.eq.s32.totalorder %s19, 0
      %p147 = por %p145, %p146
      %p148 = scmp.ne.s32.totalorder %s136, %s137
      %p149 = scmp.eq.s32.totalorder %s20, 3
      %p150 = por %p148, %p149
      %p152 = scmp.ne.s32.totalorder %s137, %s151
      %p153 = scmp.eq.s32.totalorder %s20, 0
      %p154 = por %p152, %p153
      %s155 = ssub.s32 %s22, %s36
      %s156 = ssub.s32 %s21, %s40
      %s157 = sor.u32 %s155, %s156
      %p158 = scmp.eq.s32.totalorder %s157, 0
      %s160 = sadd.s32 %s159, 1
      %s161 = scalar_select %p158, %s159, %s160
      %p164 = pneg %p158
      %p165 = scmp.eq.s32.totalorder %s14, 3
      %p166 = por %p164, %p165
      %p167 = scmp.ne.s32.totalorder %s159, %s162
      %p168 = scmp.eq.s32.totalorder %s14, 0
      %p169 = por %p167, %p168
      %p170 = scmp.ne.s32.totalorder %s159, %s162
      %p171 = scmp.eq.s32.totalorder %s19, 3
      %p172 = por %p170, %p171
      %p173 = scmp.ne.s32.totalorder %s162, %s163
      %p174 = scmp.eq.s32.totalorder %s19, 0
      %p175 = por %p173, %p174
      %p176 = scmp.ne.s32.totalorder %s162, %s163
      %p177 = scmp.eq.s32.totalorder %s20, 3
      %p178 = por %p176, %p177
      %p180 = scmp.ne.s32.totalorder %s163, %s179
      %p181 = scmp.eq.s32.totalorder %s20, 0
      %p182 = por %p180, %p181
      %p183 = scmp.le.s32.totalorder 1, %s14
      %p184 = scmp.lt.s32.totalorder %s14, 5
      %p185 = pnand %p183, %p184
      %p186 = pneg %p185
      // Predicated region
      $region9: #{efficient_network_forward.2} parent=5 // pred_check
        _
      $region10: #{efficient_network_forward.2} parent=5 // pred_check_branch
        %188 = sbr.rel (%p185) target = $region12
      $region11: #{efficient_network_forward.2} parent=5 // pred_region
        %s189 = ssub.s32 %s14, 1
        // Predicated region
        $region13: #{efficient_network_forward.2} parent=11 // pred_check
          %p190 = pneg %p84
        $region14: #{efficient_network_forward.2} parent=11 // pred_check_branch
          %192 = sbr.rel (%p190) target = $region16
        $region15: #{efficient_network_forward.2} parent=11 // pred_region
          %s194 = ssub.s32 256, 256
          %195 = vsyncadd [#allocation3], %s194
          %s196 = sshll.u32 [#allocation2], 4
          %s197 = int_to_ptr.vmem [resolvable:$true] %s196
          %202 = dma.hbm_to_vmem [thread:$0]  %s1, 256, %s197, [#allocation3], 64, 64, 4
        $region16: #{efficient_network_forward.2} parent=11 // pred_fallthru
          _
        // Predicated region
        $region17: #{efficient_network_forward.2} parent=11 // pred_check
          %p203 = pneg %p105
        $region18: #{efficient_network_forward.2} parent=11 // pred_check_branch
          %205 = sbr.rel (%p203) target = $region20
        $region19: #{efficient_network_forward.2} parent=11 // pred_region
          %s207 = ssub.s32 16, 16
          %208 = vsyncadd [#allocation5], %s207
          %s210 = sshll.u32 [#allocation4], 4
          %s211 = int_to_ptr.vmem [resolvable:$true] %s210
          %213 = dma.hbm_to_vmem [thread:$0]  %s2, 16, %s211, [#allocation5]
        $region20: #{efficient_network_forward.2} parent=11 // pred_fallthru
          _
        // Predicated region
        $region21: #{efficient_network_forward.2} parent=11 // pred_check
          %p214 = pneg %p126
        $region22: #{efficient_network_forward.2} parent=11 // pred_check_branch
          %216 = sbr.rel (%p214) target = $region24
        $region23: #{efficient_network_forward.2} parent=11 // pred_region
          %s218 = ssub.s32 20480, 20480
          %219 = vsyncadd [#allocation5], %s218
          %s220 = sshll.u32 [#allocation6], 4
          %s221 = int_to_ptr.vmem [resolvable:$true] %s220
          %226 = dma.hbm_to_vmem [thread:$0]  %s3, 20480, %s221, [#allocation5], 1280, 1280, 80
        $region24: #{efficient_network_forward.2} parent=11 // pred_fallthru
          _
        // Predicated region
        $region25: #{efficient_network_forward.2} parent=11 // pred_check
          %p227 = pneg %p147
        $region26: #{efficient_network_forward.2} parent=11 // pred_check_branch
          %229 = sbr.rel (%p227) target = $region28
        $region27: #{efficient_network_forward.2} parent=11 // pred_region
          %s231 = ssub.s32 320, 320
          %232 = vsyncadd [#allocation8], %s231
          %s234 = sshll.u32 [#allocation7], 4
          %s235 = int_to_ptr.vmem [resolvable:$true] %s234
          %237 = dma.hbm_to_vmem [thread:$0]  %s4, 320, %s235, [#allocation8]
        $region28: #{efficient_network_forward.2} parent=11 // pred_fallthru
          _
      $region12: #{efficient_network_forward.2} parent=5 // pred_fallthru
        _
      %p238 = scmp.lt.s32.totalorder %s14, 4
      // Predicated region
      $region29: #{efficient_network_forward.2} parent=5 // pred_check
        %p239 = pneg %p238
      $region30: #{efficient_network_forward.2} parent=5 // pred_check_branch
        %241 = sbr.rel (%p239) target = $region32
      $region31: #{efficient_network_forward.2} parent=5 // pred_region
        // Predicated region
        $region33: #{efficient_network_forward.2} parent=31 // pred_check
          %p242 = pneg %p57
        $region34: #{efficient_network_forward.2} parent=31 // pred_check_branch
          %244 = sbr.rel (%p242) target = $region36
        $region35: #{efficient_network_forward.2} parent=31 // pred_region
          %s245 = sadd.s32 %s22, %s23
          %s246 = smul.u32 8, %s245
          %p247 = scmp.lt.s32.totalorder %s21, 1
          %s248 = scalar_select %p247, %s21, 1
          %p249 = scmp.lt.s32.totalorder %s246, 15
          %s250 = scalar_select %p249, %s246, 15
          %s251 = smul.addr %s248, 16
          %s252 = sadd.s32 %s250, %s251
          %s253 = smul.addr %s252, 4
          %s254 = scalar_lea.vmem %s0, %s253
          %s255 = sadd.s32 %s22, %s23
          %s256 = smul.u32 8, %s255
        $region36: #{efficient_network_forward.2} parent=31 // pred_fallthru
          _
      $region32: #{efficient_network_forward.2} parent=5 // pred_fallthru
        _
      %p257 = scmp.le.s32.totalorder 1, %s14
      %p258 = scmp.lt.s32.totalorder %s14, 5
      %p259 = pnand %p257, %p258
      %p260 = pneg %p259
      // Predicated region
      $region37: #{efficient_network_forward.2} parent=5 // pred_check
        _
      $region38: #{efficient_network_forward.2} parent=5 // pred_check_branch
        %262 = sbr.rel (%p259) target = $region40
      $region39: #{efficient_network_forward.2} parent=5 // pred_region
        %s263 = ssub.s32 %s14, 1
        // Predicated region
        $region41: #{efficient_network_forward.2} parent=39 // pred_check
          %p264 = pneg %p84
        $region42: #{efficient_network_forward.2} parent=39 // pred_check_branch
          %266 = sbr.rel (%p264) target = $region44
        $region43: #{efficient_network_forward.2} parent=39 // pred_region
          %267 = dma.done [#allocation3], 256
        $region44: #{efficient_network_forward.2} parent=39 // pred_fallthru
          _
        // Predicated region
        $region45: #{efficient_network_forward.2} parent=39 // pred_check
          %p268 = pneg %p105
        $region46: #{efficient_network_forward.2} parent=39 // pred_check_branch
          %270 = sbr.rel (%p268) target = $region48
        $region47: #{efficient_network_forward.2} parent=39 // pred_region
          %271 = dma.done [#allocation5], 16
        $region48: #{efficient_network_forward.2} parent=39 // pred_fallthru
          _
        // Predicated region
        $region49: #{efficient_network_forward.2} parent=39 // pred_check
          %p272 = pneg %p126
        $region50: #{efficient_network_forward.2} parent=39 // pred_check_branch
          %274 = sbr.rel (%p272) target = $region52
        $region51: #{efficient_network_forward.2} parent=39 // pred_region
          %275 = dma.done [#allocation5], 20480
        $region52: #{efficient_network_forward.2} parent=39 // pred_fallthru
          _
        // Predicated region
        $region53: #{efficient_network_forward.2} parent=39 // pred_check
          %p276 = pneg %p147
        $region54: #{efficient_network_forward.2} parent=39 // pred_check_branch
          %278 = sbr.rel (%p276) target = $region56
        $region55: #{efficient_network_forward.2} parent=39 // pred_region
          %279 = dma.done [#allocation8], 320
        $region56: #{efficient_network_forward.2} parent=39 // pred_fallthru
          _
        %s280 = sadd.s32 %s25, %s26
        %s281 = smul.u32 8, %s280
        %p282 = scmp.lt.s32.totalorder %s24, 1
        %s283 = scalar_select %p282, %s24, 1
        %p284 = scmp.lt.s32.totalorder %s281, 15
        %s285 = scalar_select %p284, %s281, 15
        %s286 = smul.addr %s283, 16
        %s287 = sadd.s32 %s285, %s286
        %s288 = smul.addr %s287, 4
        %s289 = scalar_lea.vmem %s0, %s288
        %p290 = pneg %p63
        %p291 = pneg %p60
        %p292 = pneg %p84
        %p293 = pneg %p81
        %p294 = pneg %p105
        %p295 = pneg %p102
        %p296 = pneg %p126
        %p297 = pneg %p123
        %p298 = pneg %p147
        %p299 = pneg %p144
        %p300 = pneg %p175
        %p301 = pneg %p172
        %p302 = scmp.lt.s32.totalorder %s25, 1
        %s303 = scalar_select %p302, %s25, 1
        %p304 = scmp.lt.s32.totalorder %s24, 1
        %s305 = scalar_select %p304, %s24, 1
        %s306 = smul.addr %s305, 20
        %s307 = smul.addr %s303, 40
        %s308 = sadd.s32 %s306, %s307
        %s309 = scalar_lea.vmem %s5, %s308
        %s310 = sadd.s32 %s25, %s26
        %s311 = smul.u32 8, %s310
        %p312 = scmp.lt.s32.totalorder %s24, 1
        %s313 = scalar_select %p312, %s24, 1
        %p314 = scmp.lt.s32.totalorder %s311, 15
        %s315 = scalar_select %p314, %s311, 15
        %s316 = smul.addr %s313, 16
        %s317 = sadd.s32 %s315, %s316
        %s318 = smul.addr %s317, 4
        %s319 = scalar_lea.vmem %s0, %s318
        %s320 = sadd.s32 %s25, %s26
        %s321 = smul.u32 8, %s320
        %p322 = scmp.lt.s32.totalorder %s25, 1
        %s323 = scalar_select %p322, %s25, 1
        %p324 = scmp.lt.s32.totalorder %s24, 1
        %s325 = scalar_select %p324, %s24, 1
        %s326 = smul.addr %s325, 20
        %s327 = smul.addr %s323, 40
        %s328 = sadd.s32 %s326, %s327
        %s329 = scalar_lea.vmem %s5, %s328
        %p332 = scmp.eq.s32.totalorder %s26, 0
        // Predicated region
        $region57: #{efficient_network_forward.2} parent=39 // pred_check
          %p333 = pneg %p332
        $region58: #{efficient_network_forward.2} parent=39 // pred_check_branch
          %335 = sbr.rel (%p333) target = $region60
        $region59: #{efficient_network_forward.2} parent=39 // pred_region
          %336 = vst [vmem:[%s329] sm:$0xff] 0.0
          %337 = vst [vmem:[%s329 + $0x8] sm:$0xff] 0.0
          %v338 = vlaneseq
          %vm339 = vcmp.ge.s32.totalorder %v338, 0
          %vm340 = vcmp.lt.s32.totalorder %v338, 512
          %vm341 = vmand %vm339, %vm340
          %342 = vst.msk [vmem:[%s329 + $0x10] sm:$0xf] %vm341, 0.0
        $region60: #{efficient_network_forward.2} parent=39 // pred_fallthru
          _
        %v343 = vld [vmem:[%s319] sm:$0xf]
        %v344 = vld [vmem:[%s319 + $0x4] sm:$0xf]
        %v345 = vld [vmem:[%s319 + $0x8] sm:$0xf]
        %v346 = vld [vmem:[%s319 + $0xc] sm:$0xf]
        %v347 = vld [vmem:[%s319 + $0x10] sm:$0xf]
        %v348 = vld [vmem:[%s319 + $0x14] sm:$0xf]
        %v349 = vld [vmem:[%s319 + $0x18] sm:$0xf]
        %v350 = vld [vmem:[%s319 + $0x1c] sm:$0xf]
        %v351 = vld [vmem:[#allocation2] sm:$0xf]
        %v352 = vld [vmem:[#allocation2 + $0x4] sm:$0xf]
        %v353 = vld [vmem:[#allocation2 + $0x8] sm:$0xf]
        %v354 = vld [vmem:[#allocation2 + $0xc] sm:$0xf]
        %v355 = vld [vmem:[#allocation4] sm:$0x1]
        %v357 = vlaneseq
        %v358 = vshrl.u32 %v357, 7
        %v359 = vsub.s32 0, %v358
        %v360 = vrot.slane %v355, %v359
        %v370 = vunpack.c.l.b16 %v343
        %v371 = vunpack.c.l.b16 %v344
        %v372 = vunpack.c.l.b16 %v345
        %v373 = vunpack.c.l.b16 %v346
        %v374 = vunpack.c.l.b16 %v347
        %v375 = vunpack.c.l.b16 %v348
        %v376 = vunpack.c.l.b16 %v349
        %v377 = vunpack.c.l.b16 %v350
        %v378 = vpack.c.b16 %v371, %v370
        %v379 = vpack.c.b16 %v373, %v372
        %v380 = vpack.c.b16 %v375, %v374
        %v381 = vpack.c.b16 %v377, %v376
        %v386 = vunpack.c.l.b16 %v351
        %v387 = vunpack.c.l.b16 %v352
        %v388 = vunpack.c.l.b16 %v353
        %v389 = vunpack.c.l.b16 %v354
        %v390 = vpack.c.b16 %v387, %v386
        %v391 = vpack.c.b16 %v389, %v388
        %vm394 = vcmask 261120
        %v396 = vsel %vm394, %v378, 0
        %v399 = vsel %vm394, %v379, 0
        %v402 = vsel %vm394, %v380, 0
        %v405 = vsel %vm394, %v381, 0
        %407 = vmatprep.subr.bf16.mxu0 0
        %408 = vmatpush1.bf16.msra.mxu0 %v390
        %409 = vmatprep.subr.bf16.mxu0 0
        %410 = vmatpush1.bf16.msra.mxu0 %v391
        %411 = vmatprep.subr.bf16.mxu0 0
        %412 = vmatpush1.bf16.msra.mxu0 0
        %413 = vmatprep.subr.bf16.mxu0 0
        %414 = vmatpush1.bf16.msra.mxu0 0
        %415 = vmatprep.subr.bf16.mxu0 0
        %416 = vmatpush1.bf16.msra.mxu0 0
        %417 = vmatprep.subr.bf16.mxu0 0
        %418 = vmatpush1.bf16.msra.mxu0 0
        %419 = vmatprep.subr.bf16.mxu0 0
        %420 = vmatpush1.bf16.msra.mxu0 0
        %421 = vmatprep.subr.bf16.mxu0 0
        %422 = vmatpush1.bf16.msra.mxu0 0
        %423 = vmatprep.subr.bf16.mxu0 0
        %424 = vmatpush1.bf16.msra.mxu0 0
        %425 = vmatprep.subr.bf16.mxu0 0
        %426 = vmatpush1.bf16.msra.mxu0 0
        %427 = vmatprep.subr.bf16.mxu0 0
        %428 = vmatpush1.bf16.msra.mxu0 0
        %429 = vmatprep.subr.bf16.mxu0 0
        %430 = vmatpush1.bf16.msra.mxu0 0
        %431 = vmatprep.subr.bf16.mxu0 0
        %432 = vmatpush1.bf16.msra.mxu0 0
        %433 = vmatprep.subr.bf16.mxu0 0
        %434 = vmatpush1.bf16.msra.mxu0 0
        %435 = vmatprep.subr.bf16.mxu0 0
        %436 = vmatpush1.bf16.msra.mxu0 0
        %437 = vmatprep.subr.bf16.mxu0 0
        %438 = vmatpush1.bf16.msra.mxu0 0
        %439 = vmatprep.mubr.bf16.mxu0 0
        %440 = vmatmul.mubr.bf16.gmra.mrb[0].mxu0 %v396
        %v441 = vpop.f32.mrb[0].mxu0
        %v442 = vadd.f32 %v360, %v441
        %v443 = vpop.f32.mrb[0].mxu0
        %v444 = vpop.f32.mrb[0].mxu0
        %v445 = vadd.f32 %v360, %v444
        %v446 = vpop.f32.mrb[0].mxu0
        %447 = vmatprep.mubr.bf16.mxu0 0
        %448 = vmatmul.mubr.bf16.gmra.mrb[0].mxu0 %v399
        %v449 = vpop.f32.mrb[0].mxu0
        %v450 = vadd.f32 %v360, %v449
        %v451 = vpop.f32.mrb[0].mxu0
        %v452 = vpop.f32.mrb[0].mxu0
        %v453 = vadd.f32 %v360, %v452
        %v454 = vpop.f32.mrb[0].mxu0
        %455 = vmatprep.mubr.bf16.mxu0 0
        %456 = vmatmul.mubr.bf16.gmra.mrb[0].mxu0 %v402
        %v457 = vpop.f32.mrb[0].mxu0
        %v458 = vadd.f32 %v360, %v457
        %v459 = vpop.f32.mrb[0].mxu0
        %v460 = vpop.f32.mrb[0].mxu0
        %v461 = vadd.f32 %v360, %v460
        %v462 = vpop.f32.mrb[0].mxu0
        %463 = vmatprep.mubr.bf16.mxu0 0
        %464 = vmatmul.mubr.bf16.gmra.mrb[0].mxu0 %v405
        %v465 = vpop.f32.mrb[0].mxu0
        %v466 = vadd.f32 %v360, %v465
        %v467 = vpop.f32.mrb[0].mxu0
        %v468 = vpop.f32.mrb[0].mxu0
        %v469 = vadd.f32 %v360, %v468
        %v470 = vpop.f32.mrb[0].mxu0
        %471 = vdwg.mxu0
        %v472 = vxor.u32 %v442, 2147483648
        %v473 = vxor.u32 %v445, 2147483648
        %v474 = vxor.u32 %v450, 2147483648
        %v475 = vxor.u32 %v453, 2147483648
        %v476 = vxor.u32 %v458, 2147483648
        %v477 = vxor.u32 %v461, 2147483648
        %v478 = vxor.u32 %v466, 2147483648
        %v479 = vxor.u32 %v469, 2147483648
        %v480 = vmul.f32 %v472, 1.442695
        %v481 = vpow.pop %v480
        %v482 = vmul.f32 %v473, 1.442695
        %v483 = vpow.pop %v482
        %v484 = vmul.f32 %v474, 1.442695
        %v485 = vpow.pop %v484
        %v486 = vmul.f32 %v475, 1.442695
        %v487 = vpow.pop %v486
        %v488 = vmul.f32 %v476, 1.442695
        %v489 = vpow.pop %v488
        %v490 = vmul.f32 %v477, 1.442695
        %v491 = vpow.pop %v490
        %v492 = vmul.f32 %v478, 1.442695
        %v493 = vpow.pop %v492
        %v494 = vmul.f32 %v479, 1.442695
        %v495 = vpow.pop %v494
        %v496 = vadd.f32 %v481, 1.0
        %v497 = vadd.f32 %v483, 1.0
        %v498 = vadd.f32 %v485, 1.0
        %v499 = vadd.f32 %v487, 1.0
        %v500 = vadd.f32 %v489, 1.0
        %v501 = vadd.f32 %v491, 1.0
        %v502 = vadd.f32 %v493, 1.0
        %v503 = vadd.f32 %v495, 1.0
        %v504 = vrcp.pop %v496
        %v505 = vmul.f32 1.0, %v504
        %v506 = vrcp.pop %v497
        %v507 = vmul.f32 1.0, %v506
        %v508 = vrcp.pop %v498
        %v509 = vmul.f32 1.0, %v508
        %v510 = vrcp.pop %v499
        %v511 = vmul.f32 1.0, %v510
        %v512 = vrcp.pop %v500
        %v513 = vmul.f32 1.0, %v512
        %v514 = vrcp.pop %v501
        %v515 = vmul.f32 1.0, %v514
        %v516 = vrcp.pop %v502
        %v517 = vmul.f32 1.0, %v516
        %v518 = vrcp.pop %v503
        %v519 = vmul.f32 1.0, %v518
        %v520 = vmul.f32 %v442, %v505
        %v521 = vmul.f32 %v445, %v507
        %v522 = vmul.f32 %v450, %v509
        %v523 = vmul.f32 %v453, %v511
        %v524 = vmul.f32 %v458, %v513
        %v525 = vmul.f32 %v461, %v515
        %v526 = vmul.f32 %v466, %v517
        %v527 = vmul.f32 %v469, %v519
        %v528 = vpack.c.bf16 %v521, %v520
        %v529 = vpack.c.bf16 %v523, %v522
        %v530 = vpack.c.bf16 %v525, %v524
        %v531 = vpack.c.bf16 %v527, %v526
        %v532 = vld [vmem:[#allocation6] sm:$0xff]
        %v533 = vld [vmem:[#allocation6 + $0x8] sm:$0xff]
        %v534 = vld [vmem:[#allocation6 + $0x10] sm:$0xff]
        %v535 = vld [vmem:[#allocation6 + $0x18] sm:$0xff]
        %v536 = vld [vmem:[#allocation6 + $0x20] sm:$0xff]
        %v537 = vld [vmem:[#allocation6 + $0x28] sm:$0xff]
        %v538 = vld [vmem:[#allocation6 + $0x30] sm:$0xff]
        %v539 = vld [vmem:[#allocation6 + $0x38] sm:$0xff]
        %v540 = vld [vmem:[#allocation6 + $0x40] sm:$0xff]
        %v541 = vld [vmem:[#allocation6 + $0x48] sm:$0xff]
        %v542 = vld [vmem:[#allocation6 + $0x50] sm:$0xff]
        %v543 = vld [vmem:[#allocation6 + $0x58] sm:$0xff]
        %v544 = vld [vmem:[#allocation6 + $0x60] sm:$0xff]
        %v545 = vld [vmem:[#allocation6 + $0x68] sm:$0xff]
        %v546 = vld [vmem:[#allocation6 + $0x70] sm:$0xff]
        %v547 = vld [vmem:[#allocation6 + $0x78] sm:$0xff]
        %v548 = vld [vmem:[#allocation6 + $0x80] sm:$0xff]
        %v549 = vld [vmem:[#allocation6 + $0x88] sm:$0xff]
        %v550 = vld [vmem:[#allocation6 + $0x90] sm:$0xff]
        %v551 = vld [vmem:[#allocation6 + $0x98] sm:$0xff]
        %v552 = vld [vmem:[#allocation6 + $0xa0] sm:$0xff]
        %v553 = vld [vmem:[#allocation6 + $0xa8] sm:$0xff]
        %v554 = vld [vmem:[#allocation6 + $0xb0] sm:$0xff]
        %v555 = vld [vmem:[#allocation6 + $0xb8] sm:$0xff]
        %v556 = vld [vmem:[#allocation6 + $0xc0] sm:$0xff]
        %v557 = vld [vmem:[#allocation6 + $0xc8] sm:$0xff]
        %v558 = vld [vmem:[#allocation6 + $0xd0] sm:$0xff]
        %v559 = vld [vmem:[#allocation6 + $0xd8] sm:$0xff]
        %v560 = vld [vmem:[#allocation6 + $0xe0] sm:$0xff]
        %v561 = vld [vmem:[#allocation6 + $0xe8] sm:$0xff]
        %v562 = vld [vmem:[#allocation6 + $0xf0] sm:$0xff]
        %v563 = vld [vmem:[#allocation6 + $0xf8] sm:$0xff]
        %v564 = vld [vmem:[#allocation6 + $0x100] sm:$0xff]
        %v565 = vld [vmem:[#allocation6 + $0x108] sm:$0xff]
        %v566 = vld [vmem:[#allocation6 + $0x110] sm:$0xff]
        %v567 = vld [vmem:[#allocation6 + $0x118] sm:$0xff]
        %v568 = vld [vmem:[#allocation6 + $0x120] sm:$0xff]
        %v569 = vld [vmem:[#allocation6 + $0x128] sm:$0xff]
        %v570 = vld [vmem:[#allocation6 + $0x130] sm:$0xff]
        %v571 = vld [vmem:[#allocation6 + $0x138] sm:$0xff]
        %v572 = vld [vmem:[#allocation6 + $0x140] sm:$0xff]
        %v573 = vld [vmem:[#allocation6 + $0x148] sm:$0xff]
        %v574 = vld [vmem:[#allocation6 + $0x150] sm:$0xff]
        %v575 = vld [vmem:[#allocation6 + $0x158] sm:$0xff]
        %v576 = vld [vmem:[#allocation6 + $0x160] sm:$0xff]
        %v577 = vld [vmem:[#allocation6 + $0x168] sm:$0xff]
        %v578 = vld [vmem:[#allocation6 + $0x170] sm:$0xff]
        %v579 = vld [vmem:[#allocation6 + $0x178] sm:$0xff]
        %v580 = vld [vmem:[#allocation6 + $0x180] sm:$0xff]
        %v581 = vld [vmem:[#allocation6 + $0x188] sm:$0xff]
        %v582 = vld [vmem:[#allocation6 + $0x190] sm:$0xff]
        %v583 = vld [vmem:[#allocation6 + $0x198] sm:$0xff]
        %v584 = vld [vmem:[#allocation6 + $0x1a0] sm:$0xff]
        %v585 = vld [vmem:[#allocation6 + $0x1a8] sm:$0xff]
        %v586 = vld [vmem:[#allocation6 + $0x1b0] sm:$0xff]
        %v587 = vld [vmem:[#allocation6 + $0x1b8] sm:$0xff]
        %v588 = vld [vmem:[#allocation6 + $0x1c0] sm:$0xff]
        %v589 = vld [vmem:[#allocation6 + $0x1c8] sm:$0xff]
        %v590 = vld [vmem:[#allocation6 + $0x1d0] sm:$0xff]
        %v591 = vld [vmem:[#allocation6 + $0x1d8] sm:$0xff]
        %v592 = vld [vmem:[#allocation6 + $0x1e0] sm:$0xff]
        %v593 = vld [vmem:[#allocation6 + $0x1e8] sm:$0xff]
        %v594 = vld [vmem:[#allocation6 + $0x1f0] sm:$0xff]
        %v595 = vld [vmem:[#allocation6 + $0x1f8] sm:$0xff]
        %v596 = vld [vmem:[#allocation6 + $0x200] sm:$0xff]
        %v597 = vld [vmem:[#allocation6 + $0x208] sm:$0xff]
        %v598 = vld [vmem:[#allocation6 + $0x210] sm:$0xff]
        %v599 = vld [vmem:[#allocation6 + $0x218] sm:$0xff]
        %v600 = vld [vmem:[#allocation6 + $0x220] sm:$0xff]
        %v601 = vld [vmem:[#allocation6 + $0x228] sm:$0xff]
        %v602 = vld [vmem:[#allocation6 + $0x230] sm:$0xff]
        %v603 = vld [vmem:[#allocation6 + $0x238] sm:$0xff]
        %v604 = vld [vmem:[#allocation6 + $0x240] sm:$0xff]
        %v605 = vld [vmem:[#allocation6 + $0x248] sm:$0xff]
        %v606 = vld [vmem:[#allocation6 + $0x250] sm:$0xff]
        %v607 = vld [vmem:[#allocation6 + $0x258] sm:$0xff]
        %v608 = vld [vmem:[#allocation6 + $0x260] sm:$0xff]
        %v609 = vld [vmem:[#allocation6 + $0x268] sm:$0xff]
        %v610 = vld [vmem:[#allocation6 + $0x270] sm:$0xff]
        %v611 = vld [vmem:[#allocation6 + $0x278] sm:$0xff]
        %v612 = vld [vmem:[#allocation6 + $0x280] sm:$0xff]
        %v613 = vld [vmem:[#allocation6 + $0x288] sm:$0xff]
        %v614 = vld [vmem:[#allocation6 + $0x290] sm:$0xff]
        %v615 = vld [vmem:[#allocation6 + $0x298] sm:$0xff]
        %v616 = vld [vmem:[#allocation6 + $0x2a0] sm:$0xff]
        %v617 = vld [vmem:[#allocation6 + $0x2a8] sm:$0xff]
        %v618 = vld [vmem:[#allocation6 + $0x2b0] sm:$0xff]
        %v619 = vld [vmem:[#allocation6 + $0x2b8] sm:$0xff]
        %v620 = vld [vmem:[#allocation6 + $0x2c0] sm:$0xff]
        %v621 = vld [vmem:[#allocation6 + $0x2c8] sm:$0xff]
        %v622 = vld [vmem:[#allocation6 + $0x2d0] sm:$0xff]
        %v623 = vld [vmem:[#allocation6 + $0x2d8] sm:$0xff]
        %v624 = vld [vmem:[#allocation6 + $0x2e0] sm:$0xff]
        %v625 = vld [vmem:[#allocation6 + $0x2e8] sm:$0xff]
        %v626 = vld [vmem:[#allocation6 + $0x2f0] sm:$0xff]
        %v627 = vld [vmem:[#allocation6 + $0x2f8] sm:$0xff]
        %v628 = vld [vmem:[#allocation6 + $0x300] sm:$0xff]
        %v629 = vld [vmem:[#allocation6 + $0x308] sm:$0xff]
        %v630 = vld [vmem:[#allocation6 + $0x310] sm:$0xff]
        %v631 = vld [vmem:[#allocation6 + $0x318] sm:$0xff]
        %v632 = vld [vmem:[#allocation6 + $0x320] sm:$0xff]
        %v633 = vld [vmem:[#allocation6 + $0x328] sm:$0xff]
        %v634 = vld [vmem:[#allocation6 + $0x330] sm:$0xff]
        %v635 = vld [vmem:[#allocation6 + $0x338] sm:$0xff]
        %v636 = vld [vmem:[#allocation6 + $0x340] sm:$0xff]
        %v637 = vld [vmem:[#allocation6 + $0x348] sm:$0xff]
        %v638 = vld [vmem:[#allocation6 + $0x350] sm:$0xff]
        %v639 = vld [vmem:[#allocation6 + $0x358] sm:$0xff]
        %v640 = vld [vmem:[#allocation6 + $0x360] sm:$0xff]
        %v641 = vld [vmem:[#allocation6 + $0x368] sm:$0xff]
        %v642 = vld [vmem:[#allocation6 + $0x370] sm:$0xff]
        %v643 = vld [vmem:[#allocation6 + $0x378] sm:$0xff]
        %v644 = vld [vmem:[#allocation6 + $0x380] sm:$0xff]
        %v645 = vld [vmem:[#allocation6 + $0x388] sm:$0xff]
        %v646 = vld [vmem:[#allocation6 + $0x390] sm:$0xff]
        %v647 = vld [vmem:[#allocation6 + $0x398] sm:$0xff]
        %v648 = vld [vmem:[#allocation6 + $0x3a0] sm:$0xff]
        %v649 = vld [vmem:[#allocation6 + $0x3a8] sm:$0xff]
        %v650 = vld [vmem:[#allocation6 + $0x3b0] sm:$0xff]
        %v651 = vld [vmem:[#allocation6 + $0x3b8] sm:$0xff]
        %v652 = vld [vmem:[#allocation6 + $0x3c0] sm:$0xff]
        %v653 = vld [vmem:[#allocation6 + $0x3c8] sm:$0xff]
        %v654 = vld [vmem:[#allocation6 + $0x3d0] sm:$0xff]
        %v655 = vld [vmem:[#allocation6 + $0x3d8] sm:$0xff]
        %v656 = vld [vmem:[#allocation6 + $0x3e0] sm:$0xff]
        %v657 = vld [vmem:[#allocation6 + $0x3e8] sm:$0xff]
        %v658 = vld [vmem:[#allocation6 + $0x3f0] sm:$0xff]
        %v659 = vld [vmem:[#allocation6 + $0x3f8] sm:$0xff]
        %v660 = vld [vmem:[#allocation6 + $0x400] sm:$0xff]
        %v661 = vld [vmem:[#allocation6 + $0x408] sm:$0xff]
        %v662 = vld [vmem:[#allocation6 + $0x410] sm:$0xff]
        %v663 = vld [vmem:[#allocation6 + $0x418] sm:$0xff]
        %v664 = vld [vmem:[#allocation6 + $0x420] sm:$0xff]
        %v665 = vld [vmem:[#allocation6 + $0x428] sm:$0xff]
        %v666 = vld [vmem:[#allocation6 + $0x430] sm:$0xff]
        %v667 = vld [vmem:[#allocation6 + $0x438] sm:$0xff]
        %v668 = vld [vmem:[#allocation6 + $0x440] sm:$0xff]
        %v669 = vld [vmem:[#allocation6 + $0x448] sm:$0xff]
        %v670 = vld [vmem:[#allocation6 + $0x450] sm:$0xff]
        %v671 = vld [vmem:[#allocation6 + $0x458] sm:$0xff]
        %v672 = vld [vmem:[#allocation6 + $0x460] sm:$0xff]
        %v673 = vld [vmem:[#allocation6 + $0x468] sm:$0xff]
        %v674 = vld [vmem:[#allocation6 + $0x470] sm:$0xff]
        %v675 = vld [vmem:[#allocation6 + $0x478] sm:$0xff]
        %v676 = vld [vmem:[#allocation6 + $0x480] sm:$0xff]
        %v677 = vld [vmem:[#allocation6 + $0x488] sm:$0xff]
        %v678 = vld [vmem:[#allocation6 + $0x490] sm:$0xff]
        %v679 = vld [vmem:[#allocation6 + $0x498] sm:$0xff]
        %v680 = vld [vmem:[#allocation6 + $0x4a0] sm:$0xff]
        %v681 = vld [vmem:[#allocation6 + $0x4a8] sm:$0xff]
        %v682 = vld [vmem:[#allocation6 + $0x4b0] sm:$0xff]
        %v683 = vld [vmem:[#allocation6 + $0x4b8] sm:$0xff]
        %v684 = vld [vmem:[#allocation6 + $0x4c0] sm:$0xff]
        %v685 = vld [vmem:[#allocation6 + $0x4c8] sm:$0xff]
        %v686 = vld [vmem:[#allocation6 + $0x4d0] sm:$0xff]
        %v687 = vld [vmem:[#allocation6 + $0x4d8] sm:$0xff]
        %v688 = vld [vmem:[#allocation6 + $0x4e0] sm:$0xff]
        %v689 = vld [vmem:[#allocation6 + $0x4e8] sm:$0xff]
        %v690 = vld [vmem:[#allocation6 + $0x4f0] sm:$0xff]
        %v691 = vld [vmem:[#allocation6 + $0x4f8] sm:$0xff]
        %v692 = vld [vmem:[#allocation7] sm:$0xff]
        %v693 = vld [vmem:[#allocation7 + $0x8] sm:$0xff]
        %v694 = vld [vmem:[#allocation7 + $0x10] sm:$0xf]
        %v698 = vlaneseq
        %v699 = vshrl.u32 %v698, 7
        %v700 = vsub.s32 0, %v699
        %v701 = vrot.slane %v692, %v700
        %v702 = vlaneseq
        %v703 = vshrl.u32 %v702, 7
        %v704 = vsub.s32 1, %v703
        %v705 = vrot.slane %v692, %v704
        %v706 = vlaneseq
        %v707 = vshrl.u32 %v706, 7
        %v708 = vsub.s32 2, %v707
        %v709 = vrot.slane %v692, %v708
        %v710 = vlaneseq
        %v711 = vshrl.u32 %v710, 7
        %v712 = vsub.s32 3, %v711
        %v713 = vrot.slane %v692, %v712
        %v714 = vlaneseq
        %v715 = vshrl.u32 %v714, 7
        %v716 = vsub.s32 4, %v715
        %v717 = vrot.slane %v692, %v716
        %v718 = vlaneseq
        %v719 = vshrl.u32 %v718, 7
        %v720 = vsub.s32 5, %v719
        %v721 = vrot.slane %v692, %v720
        %v722 = vlaneseq
        %v723 = vshrl.u32 %v722, 7
        %v724 = vsub.s32 6, %v723
        %v725 = vrot.slane %v692, %v724
        %v726 = vlaneseq
        %v727 = vshrl.u32 %v726, 7
        %v728 = vsub.s32 7, %v727
        %v729 = vrot.slane %v692, %v728
        %v730 = vlaneseq
        %v731 = vshrl.u32 %v730, 7
        %v732 = vsub.s32 0, %v731
        %v733 = vrot.slane %v693, %v732
        %v734 = vlaneseq
        %v735 = vshrl.u32 %v734, 7
        %v736 = vsub.s32 1, %v735
        %v737 = vrot.slane %v693, %v736
        %v738 = vlaneseq
        %v739 = vshrl.u32 %v738, 7
        %v740 = vsub.s32 2, %v739
        %v741 = vrot.slane %v693, %v740
        %v742 = vlaneseq
        %v743 = vshrl.u32 %v742, 7
        %v744 = vsub.s32 3, %v743
        %v745 = vrot.slane %v693, %v744
        %v746 = vlaneseq
        %v747 = vshrl.u32 %v746, 7
        %v748 = vsub.s32 4, %v747
        %v749 = vrot.slane %v693, %v748
        %v750 = vlaneseq
        %v751 = vshrl.u32 %v750, 7
        %v752 = vsub.s32 5, %v751
        %v753 = vrot.slane %v693, %v752
        %v754 = vlaneseq
        %v755 = vshrl.u32 %v754, 7
        %v756 = vsub.s32 6, %v755
        %v757 = vrot.slane %v693, %v756
        %v758 = vlaneseq
        %v759 = vshrl.u32 %v758, 7
        %v760 = vsub.s32 7, %v759
        %v761 = vrot.slane %v693, %v760
        %v762 = vlaneseq
        %v763 = vshrl.u32 %v762, 7
        %v764 = vsub.s32 0, %v763
        %v765 = vrot.slane %v694, %v764
        %v766 = vlaneseq
        %v767 = vshrl.u32 %v766, 7
        %v768 = vsub.s32 1, %v767
        %v769 = vrot.slane %v694, %v768
        %v770 = vlaneseq
        %v771 = vshrl.u32 %v770, 7
        %v772 = vsub.s32 2, %v771
        %v773 = vrot.slane %v694, %v772
        %v774 = vlaneseq
        %v775 = vshrl.u32 %v774, 7
        %v776 = vsub.s32 3, %v775
        %v777 = vrot.slane %v694, %v776
        %v958 = vunpack.c.l.b16 %v532
        %v959 = vunpack.c.h.b16 %v532
        %v960 = vunpack.c.l.b16 %v533
        %v961 = vunpack.c.h.b16 %v533
        %v962 = vunpack.c.l.b16 %v534
        %v963 = vunpack.c.h.b16 %v534
        %v964 = vunpack.c.l.b16 %v535
        %v965 = vunpack.c.h.b16 %v535
        %v966 = vunpack.c.l.b16 %v536
        %v967 = vunpack.c.h.b16 %v536
        %v968 = vunpack.c.l.b16 %v537
        %v969 = vunpack.c.h.b16 %v537
        %v970 = vunpack.c.l.b16 %v538
        %v971 = vunpack.c.h.b16 %v538
        %v972 = vunpack.c.l.b16 %v539
        %v973 = vunpack.c.h.b16 %v539
        %v974 = vunpack.c.l.b16 %v540
        %v975 = vunpack.c.h.b16 %v540
        %v976 = vunpack.c.l.b16 %v541
        %v977 = vunpack.c.h.b16 %v541
        %v978 = vunpack.c.l.b16 %v542
        %v979 = vunpack.c.h.b16 %v542
        %v980 = vunpack.c.l.b16 %v543
        %v981 = vunpack.c.h.b16 %v543
        %v982 = vunpack.c.l.b16 %v544
        %v983 = vunpack.c.h.b16 %v544
        %v984 = vunpack.c.l.b16 %v545
        %v985 = vunpack.c.h.b16 %v545
        %v986 = vunpack.c.l.b16 %v546
        %v987 = vunpack.c.h.b16 %v546
        %v988 = vunpack.c.l.b16 %v547
        %v989 = vunpack.c.h.b16 %v547
        %v990 = vunpack.c.l.b16 %v548
        %v991 = vunpack.c.h.b16 %v548
        %v992 = vunpack.c.l.b16 %v549
        %v993 = vunpack.c.h.b16 %v549
        %v994 = vunpack.c.l.b16 %v550
        %v995 = vunpack.c.h.b16 %v550
        %v996 = vunpack.c.l.b16 %v551
        %v997 = vunpack.c.h.b16 %v551
        %v998 = vunpack.c.l.b16 %v552
        %v999 = vunpack.c.h.b16 %v552
        %v1000 = vunpack.c.l.b16 %v553
        %v1001 = vunpack.c.h.b16 %v553
        %v1002 = vunpack.c.l.b16 %v554
        %v1003 = vunpack.c.h.b16 %v554
        %v1004 = vunpack.c.l.b16 %v555
        %v1005 = vunpack.c.h.b16 %v555
        %v1006 = vunpack.c.l.b16 %v556
        %v1007 = vunpack.c.h.b16 %v556
        %v1008 = vunpack.c.l.b16 %v557
        %v1009 = vunpack.c.h.b16 %v557
        %v1010 = vunpack.c.l.b16 %v558
        %v1011 = vunpack.c.h.b16 %v558
        %v1012 = vunpack.c.l.b16 %v559
        %v1013 = vunpack.c.h.b16 %v559
        %v1014 = vunpack.c.l.b16 %v560
        %v1015 = vunpack.c.h.b16 %v560
        %v1016 = vunpack.c.l.b16 %v561
        %v1017 = vunpack.c.h.b16 %v561
        %v1018 = vunpack.c.l.b16 %v562
        %v1019 = vunpack.c.h.b16 %v562
        %v1020 = vunpack.c.l.b16 %v563
        %v1021 = vunpack.c.h.b16 %v563
        %v1022 = vunpack.c.l.b16 %v564
        %v1023 = vunpack.c.h.b16 %v564
        %v1024 = vunpack.c.l.b16 %v565
        %v1025 = vunpack.c.h.b16 %v565
        %v1026 = vunpack.c.l.b16 %v566
        %v1027 = vunpack.c.h.b16 %v566
        %v1028 = vunpack.c.l.b16 %v567
        %v1029 = vunpack.c.h.b16 %v567
        %v1030 = vunpack.c.l.b16 %v568
        %v1031 = vunpack.c.h.b16 %v568
        %v1032 = vunpack.c.l.b16 %v569
        %v1033 = vunpack.c.h.b16 %v569
        %v1034 = vunpack.c.l.b16 %v570
        %v1035 = vunpack.c.h.b16 %v570
        %v1036 = vunpack.c.l.b16 %v571
        %v1037 = vunpack.c.h.b16 %v571
        %v1038 = vunpack.c.l.b16 %v572
        %v1039 = vunpack.c.h.b16 %v572
        %v1040 = vunpack.c.l.b16 %v573
        %v1041 = vunpack.c.h.b16 %v573
        %v1042 = vunpack.c.l.b16 %v574
        %v1043 = vunpack.c.h.b16 %v574
        %v1044 = vunpack.c.l.b16 %v575
        %v1045 = vunpack.c.h.b16 %v575
        %v1046 = vunpack.c.l.b16 %v576
        %v1047 = vunpack.c.h.b16 %v576
        %v1048 = vunpack.c.l.b16 %v577
        %v1049 = vunpack.c.h.b16 %v577
        %v1050 = vunpack.c.l.b16 %v578
        %v1051 = vunpack.c.h.b16 %v578
        %v1052 = vunpack.c.l.b16 %v579
        %v1053 = vunpack.c.h.b16 %v579
        %v1054 = vunpack.c.l.b16 %v580
        %v1055 = vunpack.c.h.b16 %v580
        %v1056 = vunpack.c.l.b16 %v581
        %v1057 = vunpack.c.h.b16 %v581
        %v1058 = vunpack.c.l.b16 %v582
        %v1059 = vunpack.c.h.b16 %v582
        %v1060 = vunpack.c.l.b16 %v583
        %v1061 = vunpack.c.h.b16 %v583
        %v1062 = vunpack.c.l.b16 %v584
        %v1063 = vunpack.c.h.b16 %v584
        %v1064 = vunpack.c.l.b16 %v585
        %v1065 = vunpack.c.h.b16 %v585
        %v1066 = vunpack.c.l.b16 %v586
        %v1067 = vunpack.c.h.b16 %v586
        %v1068 = vunpack.c.l.b16 %v587
        %v1069 = vunpack.c.h.b16 %v587
        %v1070 = vunpack.c.l.b16 %v588
        %v1071 = vunpack.c.h.b16 %v588
        %v1072 = vunpack.c.l.b16 %v589
        %v1073 = vunpack.c.h.b16 %v589
        %v1074 = vunpack.c.l.b16 %v590
        %v1075 = vunpack.c.h.b16 %v590
        %v1076 = vunpack.c.l.b16 %v591
        %v1077 = vunpack.c.h.b16 %v591
        %v1078 = vunpack.c.l.b16 %v592
        %v1079 = vunpack.c.h.b16 %v592
        %v1080 = vunpack.c.l.b16 %v593
        %v1081 = vunpack.c.h.b16 %v593
        %v1082 = vunpack.c.l.b16 %v594
        %v1083 = vunpack.c.h.b16 %v594
        %v1084 = vunpack.c.l.b16 %v595
        %v1085 = vunpack.c.h.b16 %v595
        %v1086 = vunpack.c.l.b16 %v596
        %v1087 = vunpack.c.h.b16 %v596
        %v1088 = vunpack.c.l.b16 %v597
        %v1089 = vunpack.c.h.b16 %v597
        %v1090 = vunpack.c.l.b16 %v598
        %v1091 = vunpack.c.h.b16 %v598
        %v1092 = vunpack.c.l.b16 %v599
        %v1093 = vunpack.c.h.b16 %v599
        %v1094 = vunpack.c.l.b16 %v600
        %v1095 = vunpack.c.h.b16 %v600
        %v1096 = vunpack.c.l.b16 %v601
        %v1097 = vunpack.c.h.b16 %v601
        %v1098 = vunpack.c.l.b16 %v602
        %v1099 = vunpack.c.h.b16 %v602
        %v1100 = vunpack.c.l.b16 %v603
        %v1101 = vunpack.c.h.b16 %v603
        %v1102 = vunpack.c.l.b16 %v604
        %v1103 = vunpack.c.h.b16 %v604
        %v1104 = vunpack.c.l.b16 %v605
        %v1105 = vunpack.c.h.b16 %v605
        %v1106 = vunpack.c.l.b16 %v606
        %v1107 = vunpack.c.h.b16 %v606
        %v1108 = vunpack.c.l.b16 %v607
        %v1109 = vunpack.c.h.b16 %v607
        %v1110 = vunpack.c.l.b16 %v608
        %v1111 = vunpack.c.h.b16 %v608
        %v1112 = vunpack.c.l.b16 %v609
        %v1113 = vunpack.c.h.b16 %v609
        %v1114 = vunpack.c.l.b16 %v610
        %v1115 = vunpack.c.h.b16 %v610
        %v1116 = vunpack.c.l.b16 %v611
        %v1117 = vunpack.c.h.b16 %v611
        %v1118 = vunpack.c.l.b16 %v612
        %v1119 = vunpack.c.h.b16 %v612
        %v1120 = vunpack.c.l.b16 %v613
        %v1121 = vunpack.c.h.b16 %v613
        %v1122 = vunpack.c.l.b16 %v614
        %v1123 = vunpack.c.h.b16 %v614
        %v1124 = vunpack.c.l.b16 %v615
        %v1125 = vunpack.c.h.b16 %v615
        %v1126 = vunpack.c.l.b16 %v616
        %v1127 = vunpack.c.h.b16 %v616
        %v1128 = vunpack.c.l.b16 %v617
        %v1129 = vunpack.c.h.b16 %v617
        %v1130 = vunpack.c.l.b16 %v618
        %v1131 = vunpack.c.h.b16 %v618
        %v1132 = vunpack.c.l.b16 %v619
        %v1133 = vunpack.c.h.b16 %v619
        %v1134 = vunpack.c.l.b16 %v620
        %v1135 = vunpack.c.h.b16 %v620
        %v1136 = vunpack.c.l.b16 %v621
        %v1137 = vunpack.c.h.b16 %v621
        %v1138 = vunpack.c.l.b16 %v622
        %v1139 = vunpack.c.h.b16 %v622
        %v1140 = vunpack.c.l.b16 %v623
        %v1141 = vunpack.c.h.b16 %v623
        %v1142 = vunpack.c.l.b16 %v624
        %v1143 = vunpack.c.h.b16 %v624
        %v1144 = vunpack.c.l.b16 %v625
        %v1145 = vunpack.c.h.b16 %v625
        %v1146 = vunpack.c.l.b16 %v626
        %v1147 = vunpack.c.h.b16 %v626
        %v1148 = vunpack.c.l.b16 %v627
        %v1149 = vunpack.c.h.b16 %v627
        %v1150 = vunpack.c.l.b16 %v628
        %v1151 = vunpack.c.h.b16 %v628
        %v1152 = vunpack.c.l.b16 %v629
        %v1153 = vunpack.c.h.b16 %v629
        %v1154 = vunpack.c.l.b16 %v630
        %v1155 = vunpack.c.h.b16 %v630
        %v1156 = vunpack.c.l.b16 %v631
        %v1157 = vunpack.c.h.b16 %v631
        %v1158 = vunpack.c.l.b16 %v632
        %v1159 = vunpack.c.h.b16 %v632
        %v1160 = vunpack.c.l.b16 %v633
        %v1161 = vunpack.c.h.b16 %v633
        %v1162 = vunpack.c.l.b16 %v634
        %v1163 = vunpack.c.h.b16 %v634
        %v1164 = vunpack.c.l.b16 %v635
        %v1165 = vunpack.c.h.b16 %v635
        %v1166 = vunpack.c.l.b16 %v636
        %v1167 = vunpack.c.h.b16 %v636
        %v1168 = vunpack.c.l.b16 %v637
        %v1169 = vunpack.c.h.b16 %v637
        %v1170 = vunpack.c.l.b16 %v638
        %v1171 = vunpack.c.h.b16 %v638
        %v1172 = vunpack.c.l.b16 %v639
        %v1173 = vunpack.c.h.b16 %v639
        %v1174 = vunpack.c.l.b16 %v640
        %v1175 = vunpack.c.h.b16 %v640
        %v1176 = vunpack.c.l.b16 %v641
        %v1177 = vunpack.c.h.b16 %v641
        %v1178 = vunpack.c.l.b16 %v642
        %v1179 = vunpack.c.h.b16 %v642
        %v1180 = vunpack.c.l.b16 %v643
        %v1181 = vunpack.c.h.b16 %v643
        %v1182 = vunpack.c.l.b16 %v644
        %v1183 = vunpack.c.h.b16 %v644
        %v1184 = vunpack.c.l.b16 %v645
        %v1185 = vunpack.c.h.b16 %v645
        %v1186 = vunpack.c.l.b16 %v646
        %v1187 = vunpack.c.h.b16 %v646
        %v1188 = vunpack.c.l.b16 %v647
        %v1189 = vunpack.c.h.b16 %v647
        %v1190 = vunpack.c.l.b16 %v648
        %v1191 = vunpack.c.h.b16 %v648
        %v1192 = vunpack.c.l.b16 %v649
        %v1193 = vunpack.c.h.b16 %v649
        %v1194 = vunpack.c.l.b16 %v650
        %v1195 = vunpack.c.h.b16 %v650
        %v1196 = vunpack.c.l.b16 %v651
        %v1197 = vunpack.c.h.b16 %v651
        %v1198 = vunpack.c.l.b16 %v652
        %v1199 = vunpack.c.h.b16 %v652
        %v1200 = vunpack.c.l.b16 %v653
        %v1201 = vunpack.c.h.b16 %v653
        %v1202 = vunpack.c.l.b16 %v654
        %v1203 = vunpack.c.h.b16 %v654
        %v1204 = vunpack.c.l.b16 %v655
        %v1205 = vunpack.c.h.b16 %v655
        %v1206 = vunpack.c.l.b16 %v656
        %v1207 = vunpack.c.h.b16 %v656
        %v1208 = vunpack.c.l.b16 %v657
        %v1209 = vunpack.c.h.b16 %v657
        %v1210 = vunpack.c.l.b16 %v658
        %v1211 = vunpack.c.h.b16 %v658
        %v1212 = vunpack.c.l.b16 %v659
        %v1213 = vunpack.c.h.b16 %v659
        %v1214 = vunpack.c.l.b16 %v660
        %v1215 = vunpack.c.h.b16 %v660
        %v1216 = vunpack.c.l.b16 %v661
        %v1217 = vunpack.c.h.b16 %v661
        %v1218 = vunpack.c.l.b16 %v662
        %v1219 = vunpack.c.h.b16 %v662
        %v1220 = vunpack.c.l.b16 %v663
        %v1221 = vunpack.c.h.b16 %v663
        %v1222 = vunpack.c.l.b16 %v664
        %v1223 = vunpack.c.h.b16 %v664
        %v1224 = vunpack.c.l.b16 %v665
        %v1225 = vunpack.c.h.b16 %v665
        %v1226 = vunpack.c.l.b16 %v666
        %v1227 = vunpack.c.h.b16 %v666
        %v1228 = vunpack.c.l.b16 %v667
        %v1229 = vunpack.c.h.b16 %v667
        %v1230 = vunpack.c.l.b16 %v668
        %v1231 = vunpack.c.h.b16 %v668
        %v1232 = vunpack.c.l.b16 %v669
        %v1233 = vunpack.c.h.b16 %v669
        %v1234 = vunpack.c.l.b16 %v670
        %v1235 = vunpack.c.h.b16 %v670
        %v1236 = vunpack.c.l.b16 %v671
        %v1237 = vunpack.c.h.b16 %v671
        %v1238 = vunpack.c.l.b16 %v672
        %v1239 = vunpack.c.h.b16 %v672
        %v1240 = vunpack.c.l.b16 %v673
        %v1241 = vunpack.c.h.b16 %v673
        %v1242 = vunpack.c.l.b16 %v674
        %v1243 = vunpack.c.h.b16 %v674
        %v1244 = vunpack.c.l.b16 %v675
        %v1245 = vunpack.c.h.b16 %v675
        %v1246 = vunpack.c.l.b16 %v676
        %v1247 = vunpack.c.h.b16 %v676
        %v1248 = vunpack.c.l.b16 %v677
        %v1249 = vunpack.c.h.b16 %v677
        %v1250 = vunpack.c.l.b16 %v678
        %v1251 = vunpack.c.h.b16 %v678
        %v1252 = vunpack.c.l.b16 %v679
        %v1253 = vunpack.c.h.b16 %v679
        %v1254 = vunpack.c.l.b16 %v680
        %v1255 = vunpack.c.h.b16 %v680
        %v1256 = vunpack.c.l.b16 %v681
        %v1257 = vunpack.c.h.b16 %v681
        %v1258 = vunpack.c.l.b16 %v682
        %v1259 = vunpack.c.h.b16 %v682
        %v1260 = vunpack.c.l.b16 %v683
        %v1261 = vunpack.c.h.b16 %v683
        %v1262 = vunpack.c.l.b16 %v684
        %v1263 = vunpack.c.h.b16 %v684
        %v1264 = vunpack.c.l.b16 %v685
        %v1265 = vunpack.c.h.b16 %v685
        %v1266 = vunpack.c.l.b16 %v686
        %v1267 = vunpack.c.h.b16 %v686
        %v1268 = vunpack.c.l.b16 %v687
        %v1269 = vunpack.c.h.b16 %v687
        %v1270 = vunpack.c.l.b16 %v688
        %v1271 = vunpack.c.h.b16 %v688
        %v1272 = vunpack.c.l.b16 %v689
        %v1273 = vunpack.c.h.b16 %v689
        %v1274 = vunpack.c.l.b16 %v690
        %v1275 = vunpack.c.h.b16 %v690
        %v1276 = vunpack.c.l.b16 %v691
        %v1277 = vunpack.c.h.b16 %v691
        %v1278 = vpack.c.b16 %v978, %v958
        %v1279 = vpack.c.b16 %v979, %v959
        %v1280 = vpack.c.b16 %v980, %v960
        %v1281 = vpack.c.b16 %v981, %v961
        %v1282 = vpack.c.b16 %v982, %v962
        %v1283 = vpack.c.b16 %v983, %v963
        %v1284 = vpack.c.b16 %v984, %v964
        %v1285 = vpack.c.b16 %v985, %v965
        %v1286 = vpack.c.b16 %v986, %v966
        %v1287 = vpack.c.b16 %v987, %v967
        %v1288 = vpack.c.b16 %v988, %v968
        %v1289 = vpack.c.b16 %v989, %v969
        %v1290 = vpack.c.b16 %v990, %v970
        %v1291 = vpack.c.b16 %v991, %v971
        %v1292 = vpack.c.b16 %v992, %v972
        %v1293 = vpack.c.b16 %v993, %v973
        %v1294 = vpack.c.b16 %v994, %v974
        %v1295 = vpack.c.b16 %v995, %v975
        %v1296 = vpack.c.b16 %v996, %v976
        %v1297 = vpack.c.b16 %v997, %v977
        %v1298 = vpack.c.b16 %v1018, %v998
        %v1299 = vpack.c.b16 %v1019, %v999
        %v1300 = vpack.c.b16 %v1020, %v1000
        %v1301 = vpack.c.b16 %v1021, %v1001
        %v1302 = vpack.c.b16 %v1022, %v1002
        %v1303 = vpack.c.b16 %v1023, %v1003
        %v1304 = vpack.c.b16 %v1024, %v1004
        %v1305 = vpack.c.b16 %v1025, %v1005
        %v1306 = vpack.c.b16 %v1026, %v1006
        %v1307 = vpack.c.b16 %v1027, %v1007
        %v1308 = vpack.c.b16 %v1028, %v1008
        %v1309 = vpack.c.b16 %v1029, %v1009
        %v1310 = vpack.c.b16 %v1030, %v1010
        %v1311 = vpack.c.b16 %v1031, %v1011
        %v1312 = vpack.c.b16 %v1032, %v1012
        %v1313 = vpack.c.b16 %v1033, %v1013
        %v1314 = vpack.c.b16 %v1034, %v1014
        %v1315 = vpack.c.b16 %v1035, %v1015
        %v1316 = vpack.c.b16 %v1036, %v1016
        %v1317 = vpack.c.b16 %v1037, %v1017
        %v1318 = vpack.c.b16 %v1058, %v1038
        %v1319 = vpack.c.b16 %v1059, %v1039
        %v1320 = vpack.c.b16 %v1060, %v1040
        %v1321 = vpack.c.b16 %v1061, %v1041
        %v1322 = vpack.c.b16 %v1062, %v1042
        %v1323 = vpack.c.b16 %v1063, %v1043
        %v1324 = vpack.c.b16 %v1064, %v1044
        %v1325 = vpack.c.b16 %v1065, %v1045
        %v1326 = vpack.c.b16 %v1066, %v1046
        %v1327 = vpack.c.b16 %v1067, %v1047
        %v1328 = vpack.c.b16 %v1068, %v1048
        %v1329 = vpack.c.b16 %v1069, %v1049
        %v1330 = vpack.c.b16 %v1070, %v1050
        %v1331 = vpack.c.b16 %v1071, %v1051
        %v1332 = vpack.c.b16 %v1072, %v1052
        %v1333 = vpack.c.b16 %v1073, %v1053
        %v1334 = vpack.c.b16 %v1074, %v1054
        %v1335 = vpack.c.b16 %v1075, %v1055
        %v1336 = vpack.c.b16 %v1076, %v1056
        %v1337 = vpack.c.b16 %v1077, %v1057
        %v1338 = vpack.c.b16 %v1098, %v1078
        %v1339 = vpack.c.b16 %v1099, %v1079
        %v1340 = vpack.c.b16 %v1100, %v1080
        %v1341 = vpack.c.b16 %v1101, %v1081
        %v1342 = vpack.c.b16 %v1102, %v1082
        %v1343 = vpack.c.b16 %v1103, %v1083
        %v1344 = vpack.c.b16 %v1104, %v1084
        %v1345 = vpack.c.b16 %v1105, %v1085
        %v1346 = vpack.c.b16 %v1106, %v1086
        %v1347 = vpack.c.b16 %v1107, %v1087
        %v1348 = vpack.c.b16 %v1108, %v1088
        %v1349 = vpack.c.b16 %v1109, %v1089
        %v1350 = vpack.c.b16 %v1110, %v1090
        %v1351 = vpack.c.b16 %v1111, %v1091
        %v1352 = vpack.c.b16 %v1112, %v1092
        %v1353 = vpack.c.b16 %v1113, %v1093
        %v1354 = vpack.c.b16 %v1114, %v1094
        %v1355 = vpack.c.b16 %v1115, %v1095
        %v1356 = vpack.c.b16 %v1116, %v1096
        %v1357 = vpack.c.b16 %v1117, %v1097
        %v1358 = vpack.c.b16 %v1138, %v1118
        %v1359 = vpack.c.b16 %v1139, %v1119
        %v1360 = vpack.c.b16 %v1140, %v1120
        %v1361 = vpack.c.b16 %v1141, %v1121
        %v1362 = vpack.c.b16 %v1142, %v1122
        %v1363 = vpack.c.b16 %v1143, %v1123
        %v1364 = vpack.c.b16 %v1144, %v1124
        %v1365 = vpack.c.b16 %v1145, %v1125
        %v1366 = vpack.c.b16 %v1146, %v1126
        %v1367 = vpack.c.b16 %v1147, %v1127
        %v1368 = vpack.c.b16 %v1148, %v1128
        %v1369 = vpack.c.b16 %v1149, %v1129
        %v1370 = vpack.c.b16 %v1150, %v1130
        %v1371 = vpack.c.b16 %v1151, %v1131
        %v1372 = vpack.c.b16 %v1152, %v1132
        %v1373 = vpack.c.b16 %v1153, %v1133
        %v1374 = vpack.c.b16 %v1154, %v1134
        %v1375 = vpack.c.b16 %v1155, %v1135
        %v1376 = vpack.c.b16 %v1156, %v1136
        %v1377 = vpack.c.b16 %v1157, %v1137
        %v1378 = vpack.c.b16 %v1178, %v1158
        %v1379 = vpack.c.b16 %v1179, %v1159
        %v1380 = vpack.c.b16 %v1180, %v1160
        %v1381 = vpack.c.b16 %v1181, %v1161
        %v1382 = vpack.c.b16 %v1182, %v1162
        %v1383 = vpack.c.b16 %v1183, %v1163
        %v1384 = vpack.c.b16 %v1184, %v1164
        %v1385 = vpack.c.b16 %v1185, %v1165
        %v1386 = vpack.c.b16 %v1186, %v1166
        %v1387 = vpack.c.b16 %v1187, %v1167
        %v1388 = vpack.c.b16 %v1188, %v1168
        %v1389 = vpack.c.b16 %v1189, %v1169
        %v1390 = vpack.c.b16 %v1190, %v1170
        %v1391 = vpack.c.b16 %v1191, %v1171
        %v1392 = vpack.c.b16 %v1192, %v1172
        %v1393 = vpack.c.b16 %v1193, %v1173
        %v1394 = vpack.c.b16 %v1194, %v1174
        %v1395 = vpack.c.b16 %v1195, %v1175
        %v1396 = vpack.c.b16 %v1196, %v1176
        %v1397 = vpack.c.b16 %v1197, %v1177
        %v1398 = vpack.c.b16 %v1218, %v1198
        %v1399 = vpack.c.b16 %v1219, %v1199
        %v1400 = vpack.c.b16 %v1220, %v1200
        %v1401 = vpack.c.b16 %v1221, %v1201
        %v1402 = vpack.c.b16 %v1222, %v1202
        %v1403 = vpack.c.b16 %v1223, %v1203
        %v1404 = vpack.c.b16 %v1224, %v1204
        %v1405 = vpack.c.b16 %v1225, %v1205
        %v1406 = vpack.c.b16 %v1226, %v1206
        %v1407 = vpack.c.b16 %v1227, %v1207
        %v1408 = vpack.c.b16 %v1228, %v1208
        %v1409 = vpack.c.b16 %v1229, %v1209
        %v1410 = vpack.c.b16 %v1230, %v1210
        %v1411 = vpack.c.b16 %v1231, %v1211
        %v1412 = vpack.c.b16 %v1232, %v1212
        %v1413 = vpack.c.b16 %v1233, %v1213
        %v1414 = vpack.c.b16 %v1234, %v1214
        %v1415 = vpack.c.b16 %v1235, %v1215
        %v1416 = vpack.c.b16 %v1236, %v1216
        %v1417 = vpack.c.b16 %v1237, %v1217
        %v1418 = vpack.c.b16 %v1258, %v1238
        %v1419 = vpack.c.b16 %v1259, %v1239
        %v1420 = vpack.c.b16 %v1260, %v1240
        %v1421 = vpack.c.b16 %v1261, %v1241
        %v1422 = vpack.c.b16 %v1262, %v1242
        %v1423 = vpack.c.b16 %v1263, %v1243
        %v1424 = vpack.c.b16 %v1264, %v1244
        %v1425 = vpack.c.b16 %v1265, %v1245
        %v1426 = vpack.c.b16 %v1266, %v1246
        %v1427 = vpack.c.b16 %v1267, %v1247
        %v1428 = vpack.c.b16 %v1268, %v1248
        %v1429 = vpack.c.b16 %v1269, %v1249
        %v1430 = vpack.c.b16 %v1270, %v1250
        %v1431 = vpack.c.b16 %v1271, %v1251
        %v1432 = vpack.c.b16 %v1272, %v1252
        %v1433 = vpack.c.b16 %v1273, %v1253
        %v1434 = vpack.c.b16 %v1274, %v1254
        %v1435 = vpack.c.b16 %v1275, %v1255
        %v1436 = vpack.c.b16 %v1276, %v1256
        %v1437 = vpack.c.b16 %v1277, %v1257
        %1598 = vmatprep.subr.bf16.mxu0 %v1279
        %1599 = vmatpush1.bf16.msra.mxu0 %v1278
        %1600 = vmatprep.subr.bf16.mxu0 %v1299
        %1601 = vmatpush1.bf16.msra.mxu0 %v1298
        %1602 = vmatprep.subr.bf16.mxu0 %v1319
        %1603 = vmatpush1.bf16.msra.mxu0 %v1318
        %1604 = vmatprep.subr.bf16.mxu0 %v1339
        %1605 = vmatpush1.bf16.msra.mxu0 %v1338
        %1606 = vmatprep.subr.bf16.mxu0 %v1359
        %1607 = vmatpush1.bf16.msra.mxu0 %v1358
        %1608 = vmatprep.subr.bf16.mxu0 %v1379
        %1609 = vmatpush1.bf16.msra.mxu0 %v1378
        %1610 = vmatprep.subr.bf16.mxu0 %v1399
        %1611 = vmatpush1.bf16.msra.mxu0 %v1398
        %1612 = vmatprep.subr.bf16.mxu0 %v1419
        %1613 = vmatpush1.bf16.msra.mxu0 %v1418
        %1614 = vmatprep.subr.bf16.mxu0 0
        %1615 = vmatpush1.bf16.msra.mxu0 0
        %1616 = vmatprep.subr.bf16.mxu0 0
        %1617 = vmatpush1.bf16.msra.mxu0 0
        %1618 = vmatprep.subr.bf16.mxu0 0
        %1619 = vmatpush1.bf16.msra.mxu0 0
        %1620 = vmatprep.subr.bf16.mxu0 0
        %1621 = vmatpush1.bf16.msra.mxu0 0
        %1622 = vmatprep.subr.bf16.mxu0 0
        %1623 = vmatpush1.bf16.msra.mxu0 0
        %1624 = vmatprep.subr.bf16.mxu0 0
        %1625 = vmatpush1.bf16.msra.mxu0 0
        %1626 = vmatprep.subr.bf16.mxu0 0
        %1627 = vmatpush1.bf16.msra.mxu0 0
        %1628 = vmatprep.subr.bf16.mxu0 0
        %1629 = vmatpush1.bf16.msra.mxu0 0
        %1630 = vmatprep.mubr.bf16.mxu0 0
        %1631 = vmatmul.mubr.bf16.gmra.mrb[0].mxu0 %v528
        %v1632 = vpop.f32.mrb[0].mxu0
        %v1633 = vadd.f32 %v701, %v1632
        %v1634 = vpop.f32.mrb[0].mxu0
        %v1635 = vadd.f32 %v705, %v1634
        %v1636 = vpop.f32.mrb[0].mxu0
        %v1637 = vadd.f32 %v701, %v1636
        %v1638 = vpop.f32.mrb[0].mxu0
        %v1639 = vadd.f32 %v705, %v1638
        %1640 = vmatprep.mubr.bf16.mxu0 0
        %1641 = vmatmul.mubr.bf16.gmra.mrb[0].mxu0 %v529
        %v1642 = vpop.f32.mrb[0].mxu0
        %v1643 = vadd.f32 %v701, %v1642
        %v1644 = vpop.f32.mrb[0].mxu0
        %v1645 = vadd.f32 %v705, %v1644
        %v1646 = vpop.f32.mrb[0].mxu0
        %v1647 = vadd.f32 %v701, %v1646
        %v1648 = vpop.f32.mrb[0].mxu0
        %v1649 = vadd.f32 %v705, %v1648
        %1650 = vmatprep.mubr.bf16.mxu0 0
        %1651 = vmatmul.mubr.bf16.gmra.mrb[0].mxu0 %v530
        %v1652 = vpop.f32.mrb[0].mxu0
        %v1653 = vadd.f32 %v701, %v1652
        %v1654 = vpop.f32.mrb[0].mxu0
        %v1655 = vadd.f32 %v705, %v1654
        %v1656 = vpop.f32.mrb[0].mxu0
        %v1657 = vadd.f32 %v701, %v1656
        %v1658 = vpop.f32.mrb[0].mxu0
        %v1659 = vadd.f32 %v705, %v1658
        %1660 = vmatprep.mubr.bf16.mxu0 0
        %1661 = vmatmul.mubr.bf16.gmra.mrb[0].mxu0 %v531
        %v1662 = vpop.f32.mrb[0].mxu0
        %v1663 = vadd.f32 %v701, %v1662
        %v1664 = vpop.f32.mrb[0].mxu0
        %v1665 = vadd.f32 %v705, %v1664
        %v1666 = vpop.f32.mrb[0].mxu0
        %v1667 = vadd.f32 %v701, %v1666
        %v1668 = vpop.f32.mrb[0].mxu0
        %v1669 = vadd.f32 %v705, %v1668
        %1670 = vdwg.mxu0
        %1671 = vmatprep.subr.bf16.mxu0 %v1281
        %1672 = vmatpush1.bf16.msra.mxu0 %v1280
        %1673 = vmatprep.subr.bf16.mxu0 %v1301
        %1674 = vmatpush1.bf16.msra.mxu0 %v1300
        %1675 = vmatprep.subr.bf16.mxu0 %v1321
        %1676 = vmatpush1.bf16.msra.mxu0 %v1320
        %1677 = vmatprep.subr.bf16.mxu0 %v1341
        %1678 = vmatpush1.bf16.msra.mxu0 %v1340
        %1679 = vmatprep.subr.bf16.mxu0 %v1361
        %1680 = vmatpush1.bf16.msra.mxu0 %v1360
        %1681 = vmatprep.subr.bf16.mxu0 %v1381
        %1682 = vmatpush1.bf16.msra.mxu0 %v1380
        %1683 = vmatprep.subr.bf16.mxu0 %v1401
        %1684 = vmatpush1.bf16.msra.mxu0 %v1400
        %1685 = vmatprep.subr.bf16.mxu0 %v1421
        %1686 = vmatpush1.bf16.msra.mxu0 %v1420
        %1687 = vmatprep.subr.bf16.mxu0 0
        %1688 = vmatpush1.bf16.msra.mxu0 0
        %1689 = vmatprep.subr.bf16.mxu0 0
        %1690 = vmatpush1.bf16.msra.mxu0 0
        %1691 = vmatprep.subr.bf16.mxu0 0
        %1692 = vmatpush1.bf16.msra.mxu0 0
        %1693 = vmatprep.subr.bf16.mxu0 0
        %1694 = vmatpush1.bf16.msra.mxu0 0
        %1695 = vmatprep.subr.bf16.mxu0 0
        %1696 = vmatpush1.bf16.msra.mxu0 0
        %1697 = vmatprep.subr.bf16.mxu0 0
        %1698 = vmatpush1.bf16.msra.mxu0 0
        %1699 = vmatprep.subr.bf16.mxu0 0
        %1700 = vmatpush1.bf16.msra.mxu0 0
        %1701 = vmatprep.subr.bf16.mxu0 0
        %1702 = vmatpush1.bf16.msra.mxu0 0
        %1703 = vmatprep.mubr.bf16.mxu0 0
        %1704 = vmatmul.mubr.bf16.gmra.mrb[0].mxu0 %v528
        %v1705 = vpop.f32.mrb[0].mxu0
        %v1706 = vadd.f32 %v709, %v1705
        %v1707 = vpop.f32.mrb[0].mxu0
        %v1708 = vadd.f32 %v713, %v1707
        %v1709 = vpop.f32.mrb[0].mxu0
        %v1710 = vadd.f32 %v709, %v1709
        %v1711 = vpop.f32.mrb[0].mxu0
        %v1712 = vadd.f32 %v713, %v1711
        %1713 = vmatprep.mubr.bf16.mxu0 0
        %1714 = vmatmul.mubr.bf16.gmra.mrb[0].mxu0 %v529
        %v1715 = vpop.f32.mrb[0].mxu0
        %v1716 = vadd.f32 %v709, %v1715
        %v1717 = vpop.f32.mrb[0].mxu0
        %v1718 = vadd.f32 %v713, %v1717
        %v1719 = vpop.f32.mrb[0].mxu0
        %v1720 = vadd.f32 %v709, %v1719
        %v1721 = vpop.f32.mrb[0].mxu0
        %v1722 = vadd.f32 %v713, %v1721
        %1723 = vmatprep.mubr.bf16.mxu0 0
        %1724 = vmatmul.mubr.bf16.gmra.mrb[0].mxu0 %v530
        %v1725 = vpop.f32.mrb[0].mxu0
        %v1726 = vadd.f32 %v709, %v1725
        %v1727 = vpop.f32.mrb[0].mxu0
        %v1728 = vadd.f32 %v713, %v1727
        %v1729 = vpop.f32.mrb[0].mxu0
        %v1730 = vadd.f32 %v709, %v1729
        %v1731 = vpop.f32.mrb[0].mxu0
        %v1732 = vadd.f32 %v713, %v1731
        %1733 = vmatprep.mubr.bf16.mxu0 0
        %1734 = vmatmul.mubr.bf16.gmra.mrb[0].mxu0 %v531
        %v1735 = vpop.f32.mrb[0].mxu0
        %v1736 = vadd.f32 %v709, %v1735
        %v1737 = vpop.f32.mrb[0].mxu0
        %v1738 = vadd.f32 %v713, %v1737
        %v1739 = vpop.f32.mrb[0].mxu0
        %v1740 = vadd.f32 %v709, %v1739
        %v1741 = vpop.f32.mrb[0].mxu0
        %v1742 = vadd.f32 %v713, %v1741
        %1743 = vdwg.mxu0
        %1744 = vmatprep.subr.bf16.mxu0 %v1283
        %1745 = vmatpush1.bf16.msra.mxu0 %v1282
        %1746 = vmatprep.subr.bf16.mxu0 %v1303
        %1747 = vmatpush1.bf16.msra.mxu0 %v1302
        %1748 = vmatprep.subr.bf16.mxu0 %v1323
        %1749 = vmatpush1.bf16.msra.mxu0 %v1322
        %1750 = vmatprep.subr.bf16.mxu0 %v1343
        %1751 = vmatpush1.bf16.msra.mxu0 %v1342
        %1752 = vmatprep.subr.bf16.mxu0 %v1363
        %1753 = vmatpush1.bf16.msra.mxu0 %v1362
        %1754 = vmatprep.subr.bf16.mxu0 %v1383
        %1755 = vmatpush1.bf16.msra.mxu0 %v1382
        %1756 = vmatprep.subr.bf16.mxu0 %v1403
        %1757 = vmatpush1.bf16.msra.mxu0 %v1402
        %1758 = vmatprep.subr.bf16.mxu0 %v1423
        %1759 = vmatpush1.bf16.msra.mxu0 %v1422
        %1760 = vmatprep.subr.bf16.mxu0 0
        %1761 = vmatpush1.bf16.msra.mxu0 0
        %1762 = vmatprep.subr.bf16.mxu0 0
        %1763 = vmatpush1.bf16.msra.mxu0 0
        %1764 = vmatprep.subr.bf16.mxu0 0
        %1765 = vmatpush1.bf16.msra.mxu0 0
        %1766 = vmatprep.subr.bf16.mxu0 0
        %1767 = vmatpush1.bf16.msra.mxu0 0
        %1768 = vmatprep.subr.bf16.mxu0 0
        %1769 = vmatpush1.bf16.msra.mxu0 0
        %1770 = vmatprep.subr.bf16.mxu0 0
        %1771 = vmatpush1.bf16.msra.mxu0 0
        %1772 = vmatprep.subr.bf16.mxu0 0
        %1773 = vmatpush1.bf16.msra.mxu0 0
        %1774 = vmatprep.subr.bf16.mxu0 0
        %1775 = vmatpush1.bf16.msra.mxu0 0
        %1776 = vmatprep.mubr.bf16.mxu0 0
        %1777 = vmatmul.mubr.bf16.gmra.mrb[0].mxu0 %v528
        %v1778 = vpop.f32.mrb[0].mxu0
        %v1779 = vadd.f32 %v717, %v1778
        %v1780 = vpop.f32.mrb[0].mxu0
        %v1781 = vadd.f32 %v721, %v1780
        %v1782 = vpop.f32.mrb[0].mxu0
        %v1783 = vadd.f32 %v717, %v1782
        %v1784 = vpop.f32.mrb[0].mxu0
        %v1785 = vadd.f32 %v721, %v1784
        %1786 = vmatprep.mubr.bf16.mxu0 0
        %1787 = vmatmul.mubr.bf16.gmra.mrb[0].mxu0 %v529
        %v1788 = vpop.f32.mrb[0].mxu0
        %v1789 = vadd.f32 %v717, %v1788
        %v1790 = vpop.f32.mrb[0].mxu0
        %v1791 = vadd.f32 %v721, %v1790
        %v1792 = vpop.f32.mrb[0].mxu0
        %v1793 = vadd.f32 %v717, %v1792
        %v1794 = vpop.f32.mrb[0].mxu0
        %v1795 = vadd.f32 %v721, %v1794
        %1796 = vmatprep.mubr.bf16.mxu0 0
        %1797 = vmatmul.mubr.bf16.gmra.mrb[0].mxu0 %v530
        %v1798 = vpop.f32.mrb[0].mxu0
        %v1799 = vadd.f32 %v717, %v1798
        %v1800 = vpop.f32.mrb[0].mxu0
        %v1801 = vadd.f32 %v721, %v1800
        %v1802 = vpop.f32.mrb[0].mxu0
        %v1803 = vadd.f32 %v717, %v1802
        %v1804 = vpop.f32.mrb[0].mxu0
        %v1805 = vadd.f32 %v721, %v1804
        %1806 = vmatprep.mubr.bf16.mxu0 0
        %1807 = vmatmul.mubr.bf16.gmra.mrb[0].mxu0 %v531
        %v1808 = vpop.f32.mrb[0].mxu0
        %v1809 = vadd.f32 %v717, %v1808
        %v1810 = vpop.f32.mrb[0].mxu0
        %v1811 = vadd.f32 %v721, %v1810
        %v1812 = vpop.f32.mrb[0].mxu0
        %v1813 = vadd.f32 %v717, %v1812
        %v1814 = vpop.f32.mrb[0].mxu0
        %v1815 = vadd.f32 %v721, %v1814
        %1816 = vdwg.mxu0
        %1817 = vmatprep.subr.bf16.mxu0 %v1285
        %1818 = vmatpush1.bf16.msra.mxu0 %v1284
        %1819 = vmatprep.subr.bf16.mxu0 %v1305
        %1820 = vmatpush1.bf16.msra.mxu0 %v1304
        %1821 = vmatprep.subr.bf16.mxu0 %v1325
        %1822 = vmatpush1.bf16.msra.mxu0 %v1324
        %1823 = vmatprep.subr.bf16.mxu0 %v1345
        %1824 = vmatpush1.bf16.msra.mxu0 %v1344
        %1825 = vmatprep.subr.bf16.mxu0 %v1365
        %1826 = vmatpush1.bf16.msra.mxu0 %v1364
        %1827 = vmatprep.subr.bf16.mxu0 %v1385
        %1828 = vmatpush1.bf16.msra.mxu0 %v1384
        %1829 = vmatprep.subr.bf16.mxu0 %v1405
        %1830 = vmatpush1.bf16.msra.mxu0 %v1404
        %1831 = vmatprep.subr.bf16.mxu0 %v1425
        %1832 = vmatpush1.bf16.msra.mxu0 %v1424
        %1833 = vmatprep.subr.bf16.mxu0 0
        %1834 = vmatpush1.bf16.msra.mxu0 0
        %1835 = vmatprep.subr.bf16.mxu0 0
        %1836 = vmatpush1.bf16.msra.mxu0 0
        %1837 = vmatprep.subr.bf16.mxu0 0
        %1838 = vmatpush1.bf16.msra.mxu0 0
        %1839 = vmatprep.subr.bf16.mxu0 0
        %1840 = vmatpush1.bf16.msra.mxu0 0
        %1841 = vmatprep.subr.bf16.mxu0 0
        %1842 = vmatpush1.bf16.msra.mxu0 0
        %1843 = vmatprep.subr.bf16.mxu0 0
        %1844 = vmatpush1.bf16.msra.mxu0 0
        %1845 = vmatprep.subr.bf16.mxu0 0
        %1846 = vmatpush1.bf16.msra.mxu0 0
        %1847 = vmatprep.subr.bf16.mxu0 0
        %1848 = vmatpush1.bf16.msra.mxu0 0
        %1849 = vmatprep.mubr.bf16.mxu0 0
        %1850 = vmatmul.mubr.bf16.gmra.mrb[0].mxu0 %v528
        %v1851 = vpop.f32.mrb[0].mxu0
        %v1852 = vadd.f32 %v725, %v1851
        %v1853 = vpop.f32.mrb[0].mxu0
        %v1854 = vadd.f32 %v729, %v1853
        %v1855 = vpop.f32.mrb[0].mxu0
        %v1856 = vadd.f32 %v725, %v1855
        %v1857 = vpop.f32.mrb[0].mxu0
        %v1858 = vadd.f32 %v729, %v1857
        %1859 = vmatprep.mubr.bf16.mxu0 0
        %1860 = vmatmul.mubr.bf16.gmra.mrb[0].mxu0 %v529
        %v1861 = vpop.f32.mrb[0].mxu0
        %v1862 = vadd.f32 %v725, %v1861
        %v1863 = vpop.f32.mrb[0].mxu0
        %v1864 = vadd.f32 %v729, %v1863
        %v1865 = vpop.f32.mrb[0].mxu0
        %v1866 = vadd.f32 %v725, %v1865
        %v1867 = vpop.f32.mrb[0].mxu0
        %v1868 = vadd.f32 %v729, %v1867
        %1869 = vmatprep.mubr.bf16.mxu0 0
        %1870 = vmatmul.mubr.bf16.gmra.mrb[0].mxu0 %v530
        %v1871 = vpop.f32.mrb[0].mxu0
        %v1872 = vadd.f32 %v725, %v1871
        %v1873 = vpop.f32.mrb[0].mxu0
        %v1874 = vadd.f32 %v729, %v1873
        %v1875 = vpop.f32.mrb[0].mxu0
        %v1876 = vadd.f32 %v725, %v1875
        %v1877 = vpop.f32.mrb[0].mxu0
        %v1878 = vadd.f32 %v729, %v1877
        %1879 = vmatprep.mubr.bf16.mxu0 0
        %1880 = vmatmul.mubr.bf16.gmra.mrb[0].mxu0 %v531
        %v1881 = vpop.f32.mrb[0].mxu0
        %v1882 = vadd.f32 %v725, %v1881
        %v1883 = vpop.f32.mrb[0].mxu0
        %v1884 = vadd.f32 %v729, %v1883
        %v1885 = vpop.f32.mrb[0].mxu0
        %v1886 = vadd.f32 %v725, %v1885
        %v1887 = vpop.f32.mrb[0].mxu0
        %v1888 = vadd.f32 %v729, %v1887
        %1889 = vdwg.mxu0
        %1890 = vmatprep.subr.bf16.mxu0 %v1287
        %1891 = vmatpush1.bf16.msra.mxu0 %v1286
        %1892 = vmatprep.subr.bf16.mxu0 %v1307
        %1893 = vmatpush1.bf16.msra.mxu0 %v1306
        %1894 = vmatprep.subr.bf16.mxu0 %v1327
        %1895 = vmatpush1.bf16.msra.mxu0 %v1326
        %1896 = vmatprep.subr.bf16.mxu0 %v1347
        %1897 = vmatpush1.bf16.msra.mxu0 %v1346
        %1898 = vmatprep.subr.bf16.mxu0 %v1367
        %1899 = vmatpush1.bf16.msra.mxu0 %v1366
        %1900 = vmatprep.subr.bf16.mxu0 %v1387
        %1901 = vmatpush1.bf16.msra.mxu0 %v1386
        %1902 = vmatprep.subr.bf16.mxu0 %v1407
        %1903 = vmatpush1.bf16.msra.mxu0 %v1406
        %1904 = vmatprep.subr.bf16.mxu0 %v1427
        %1905 = vmatpush1.bf16.msra.mxu0 %v1426
        %1906 = vmatprep.subr.bf16.mxu0 0
        %1907 = vmatpush1.bf16.msra.mxu0 0
        %1908 = vmatprep.subr.bf16.mxu0 0
        %1909 = vmatpush1.bf16.msra.mxu0 0
        %1910 = vmatprep.subr.bf16.mxu0 0
        %1911 = vmatpush1.bf16.msra.mxu0 0
        %1912 = vmatprep.subr.bf16.mxu0 0
        %1913 = vmatpush1.bf16.msra.mxu0 0
        %1914 = vmatprep.subr.bf16.mxu0 0
        %1915 = vmatpush1.bf16.msra.mxu0 0
        %1916 = vmatprep.subr.bf16.mxu0 0
        %1917 = vmatpush1.bf16.msra.mxu0 0
        %1918 = vmatprep.subr.bf16.mxu0 0
        %1919 = vmatpush1.bf16.msra.mxu0 0
        %1920 = vmatprep.subr.bf16.mxu0 0
        %1921 = vmatpush1.bf16.msra.mxu0 0
        %1922 = vmatprep.mubr.bf16.mxu0 0
        %1923 = vmatmul.mubr.bf16.gmra.mrb[0].mxu0 %v528
        %v1924 = vpop.f32.mrb[0].mxu0
        %v1925 = vadd.f32 %v733, %v1924
        %v1926 = vpop.f32.mrb[0].mxu0
        %v1927 = vadd.f32 %v737, %v1926
        %v1928 = vpop.f32.mrb[0].mxu0
        %v1929 = vadd.f32 %v733, %v1928
        %v1930 = vpop.f32.mrb[0].mxu0
        %v1931 = vadd.f32 %v737, %v1930
        %1932 = vmatprep.mubr.bf16.mxu0 0
        %1933 = vmatmul.mubr.bf16.gmra.mrb[0].mxu0 %v529
        %v1934 = vpop.f32.mrb[0].mxu0
        %v1935 = vadd.f32 %v733, %v1934
        %v1936 = vpop.f32.mrb[0].mxu0
        %v1937 = vadd.f32 %v737, %v1936
        %v1938 = vpop.f32.mrb[0].mxu0
        %v1939 = vadd.f32 %v733, %v1938
        %v1940 = vpop.f32.mrb[0].mxu0
        %v1941 = vadd.f32 %v737, %v1940
        %1942 = vmatprep.mubr.bf16.mxu0 0
        %1943 = vmatmul.mubr.bf16.gmra.mrb[0].mxu0 %v530
        %v1944 = vpop.f32.mrb[0].mxu0
        %v1945 = vadd.f32 %v733, %v1944
        %v1946 = vpop.f32.mrb[0].mxu0
        %v1947 = vadd.f32 %v737, %v1946
        %v1948 = vpop.f32.mrb[0].mxu0
        %v1949 = vadd.f32 %v733, %v1948
        %v1950 = vpop.f32.mrb[0].mxu0
        %v1951 = vadd.f32 %v737, %v1950
        %1952 = vmatprep.mubr.bf16.mxu0 0
        %1953 = vmatmul.mubr.bf16.gmra.mrb[0].mxu0 %v531
        %v1954 = vpop.f32.mrb[0].mxu0
        %v1955 = vadd.f32 %v733, %v1954
        %v1956 = vpop.f32.mrb[0].mxu0
        %v1957 = vadd.f32 %v737, %v1956
        %v1958 = vpop.f32.mrb[0].mxu0
        %v1959 = vadd.f32 %v733, %v1958
        %v1960 = vpop.f32.mrb[0].mxu0
        %v1961 = vadd.f32 %v737, %v1960
        %1962 = vdwg.mxu0
        %1963 = vmatprep.subr.bf16.mxu0 %v1289
        %1964 = vmatpush1.bf16.msra.mxu0 %v1288
        %1965 = vmatprep.subr.bf16.mxu0 %v1309
        %1966 = vmatpush1.bf16.msra.mxu0 %v1308
        %1967 = vmatprep.subr.bf16.mxu0 %v1329
        %1968 = vmatpush1.bf16.msra.mxu0 %v1328
        %1969 = vmatprep.subr.bf16.mxu0 %v1349
        %1970 = vmatpush1.bf16.msra.mxu0 %v1348
        %1971 = vmatprep.subr.bf16.mxu0 %v1369
        %1972 = vmatpush1.bf16.msra.mxu0 %v1368
        %1973 = vmatprep.subr.bf16.mxu0 %v1389
        %1974 = vmatpush1.bf16.msra.mxu0 %v1388
        %1975 = vmatprep.subr.bf16.mxu0 %v1409
        %1976 = vmatpush1.bf16.msra.mxu0 %v1408
        %1977 = vmatprep.subr.bf16.mxu0 %v1429
        %1978 = vmatpush1.bf16.msra.mxu0 %v1428
        %1979 = vmatprep.subr.bf16.mxu0 0
        %1980 = vmatpush1.bf16.msra.mxu0 0
        %1981 = vmatprep.subr.bf16.mxu0 0
        %1982 = vmatpush1.bf16.msra.mxu0 0
        %1983 = vmatprep.subr.bf16.mxu0 0
        %1984 = vmatpush1.bf16.msra.mxu0 0
        %1985 = vmatprep.subr.bf16.mxu0 0
        %1986 = vmatpush1.bf16.msra.mxu0 0
        %1987 = vmatprep.subr.bf16.mxu0 0
        %1988 = vmatpush1.bf16.msra.mxu0 0
        %1989 = vmatprep.subr.bf16.mxu0 0
        %1990 = vmatpush1.bf16.msra.mxu0 0
        %1991 = vmatprep.subr.bf16.mxu0 0
        %1992 = vmatpush1.bf16.msra.mxu0 0
        %1993 = vmatprep.subr.bf16.mxu0 0
        %1994 = vmatpush1.bf16.msra.mxu0 0
        %1995 = vmatprep.mubr.bf16.mxu0 0
        %1996 = vmatmul.mubr.bf16.gmra.mrb[0].mxu0 %v528
        %v1997 = vpop.f32.mrb[0].mxu0
        %v1998 = vadd.f32 %v741, %v1997
        %v1999 = vpop.f32.mrb[0].mxu0
        %v2000 = vadd.f32 %v745, %v1999
        %v2001 = vpop.f32.mrb[0].mxu0
        %v2002 = vadd.f32 %v741, %v2001
        %v2003 = vpop.f32.mrb[0].mxu0
        %v2004 = vadd.f32 %v745, %v2003
        %2005 = vmatprep.mubr.bf16.mxu0 0
        %2006 = vmatmul.mubr.bf16.gmra.mrb[0].mxu0 %v529
        %v2007 = vpop.f32.mrb[0].mxu0
        %v2008 = vadd.f32 %v741, %v2007
        %v2009 = vpop.f32.mrb[0].mxu0
        %v2010 = vadd.f32 %v745, %v2009
        %v2011 = vpop.f32.mrb[0].mxu0
        %v2012 = vadd.f32 %v741, %v2011
        %v2013 = vpop.f32.mrb[0].mxu0
        %v2014 = vadd.f32 %v745, %v2013
        %2015 = vmatprep.mubr.bf16.mxu0 0
        %2016 = vmatmul.mubr.bf16.gmra.mrb[0].mxu0 %v530
        %v2017 = vpop.f32.mrb[0].mxu0
        %v2018 = vadd.f32 %v741, %v2017
        %v2019 = vpop.f32.mrb[0].mxu0
        %v2020 = vadd.f32 %v745, %v2019
        %v2021 = vpop.f32.mrb[0].mxu0
        %v2022 = vadd.f32 %v741, %v2021
        %v2023 = vpop.f32.mrb[0].mxu0
        %v2024 = vadd.f32 %v745, %v2023
        %2025 = vmatprep.mubr.bf16.mxu0 0
        %2026 = vmatmul.mubr.bf16.gmra.mrb[0].mxu0 %v531
        %v2027 = vpop.f32.mrb[0].mxu0
        %v2028 = vadd.f32 %v741, %v2027
        %v2029 = vpop.f32.mrb[0].mxu0
        %v2030 = vadd.f32 %v745, %v2029
        %v2031 = vpop.f32.mrb[0].mxu0
        %v2032 = vadd.f32 %v741, %v2031
        %v2033 = vpop.f32.mrb[0].mxu0
        %v2034 = vadd.f32 %v745, %v2033
        %2035 = vdwg.mxu0
        %2036 = vmatprep.subr.bf16.mxu0 %v1291
        %2037 = vmatpush1.bf16.msra.mxu0 %v1290
        %2038 = vmatprep.subr.bf16.mxu0 %v1311
        %2039 = vmatpush1.bf16.msra.mxu0 %v1310
        %2040 = vmatprep.subr.bf16.mxu0 %v1331
        %2041 = vmatpush1.bf16.msra.mxu0 %v1330
        %2042 = vmatprep.subr.bf16.mxu0 %v1351
        %2043 = vmatpush1.bf16.msra.mxu0 %v1350
        %2044 = vmatprep.subr.bf16.mxu0 %v1371
        %2045 = vmatpush1.bf16.msra.mxu0 %v1370
        %2046 = vmatprep.subr.bf16.mxu0 %v1391
        %2047 = vmatpush1.bf16.msra.mxu0 %v1390
        %2048 = vmatprep.subr.bf16.mxu0 %v1411
        %2049 = vmatpush1.bf16.msra.mxu0 %v1410
        %2050 = vmatprep.subr.bf16.mxu0 %v1431
        %2051 = vmatpush1.bf16.msra.mxu0 %v1430
        %2052 = vmatprep.subr.bf16.mxu0 0
        %2053 = vmatpush1.bf16.msra.mxu0 0
        %2054 = vmatprep.subr.bf16.mxu0 0
        %2055 = vmatpush1.bf16.msra.mxu0 0
        %2056 = vmatprep.subr.bf16.mxu0 0
        %2057 = vmatpush1.bf16.msra.mxu0 0
        %2058 = vmatprep.subr.bf16.mxu0 0
        %2059 = vmatpush1.bf16.msra.mxu0 0
        %2060 = vmatprep.subr.bf16.mxu0 0
        %2061 = vmatpush1.bf16.msra.mxu0 0
        %2062 = vmatprep.subr.bf16.mxu0 0
        %2063 = vmatpush1.bf16.msra.mxu0 0
        %2064 = vmatprep.subr.bf16.mxu0 0
        %2065 = vmatpush1.bf16.msra.mxu0 0
        %2066 = vmatprep.subr.bf16.mxu0 0
        %2067 = vmatpush1.bf16.msra.mxu0 0
        %2068 = vmatprep.mubr.bf16.mxu0 0
        %2069 = vmatmul.mubr.bf16.gmra.mrb[0].mxu0 %v528
        %v2070 = vpop.f32.mrb[0].mxu0
        %v2071 = vadd.f32 %v749, %v2070
        %v2072 = vpop.f32.mrb[0].mxu0
        %v2073 = vadd.f32 %v753, %v2072
        %v2074 = vpop.f32.mrb[0].mxu0
        %v2075 = vadd.f32 %v749, %v2074
        %v2076 = vpop.f32.mrb[0].mxu0
        %v2077 = vadd.f32 %v753, %v2076
        %2078 = vmatprep.mubr.bf16.mxu0 0
        %2079 = vmatmul.mubr.bf16.gmra.mrb[0].mxu0 %v529
        %v2080 = vpop.f32.mrb[0].mxu0
        %v2081 = vadd.f32 %v749, %v2080
        %v2082 = vpop.f32.mrb[0].mxu0
        %v2083 = vadd.f32 %v753, %v2082
        %v2084 = vpop.f32.mrb[0].mxu0
        %v2085 = vadd.f32 %v749, %v2084
        %v2086 = vpop.f32.mrb[0].mxu0
        %v2087 = vadd.f32 %v753, %v2086
        %2088 = vmatprep.mubr.bf16.mxu0 0
        %2089 = vmatmul.mubr.bf16.gmra.mrb[0].mxu0 %v530
        %v2090 = vpop.f32.mrb[0].mxu0
        %v2091 = vadd.f32 %v749, %v2090
        %v2092 = vpop.f32.mrb[0].mxu0
        %v2093 = vadd.f32 %v753, %v2092
        %v2094 = vpop.f32.mrb[0].mxu0
        %v2095 = vadd.f32 %v749, %v2094
        %v2096 = vpop.f32.mrb[0].mxu0
        %v2097 = vadd.f32 %v753, %v2096
        %2098 = vmatprep.mubr.bf16.mxu0 0
        %2099 = vmatmul.mubr.bf16.gmra.mrb[0].mxu0 %v531
        %v2100 = vpop.f32.mrb[0].mxu0
        %v2101 = vadd.f32 %v749, %v2100
        %v2102 = vpop.f32.mrb[0].mxu0
        %v2103 = vadd.f32 %v753, %v2102
        %v2104 = vpop.f32.mrb[0].mxu0
        %v2105 = vadd.f32 %v749, %v2104
        %v2106 = vpop.f32.mrb[0].mxu0
        %v2107 = vadd.f32 %v753, %v2106
        %2108 = vdwg.mxu0
        %2109 = vmatprep.subr.bf16.mxu0 %v1293
        %2110 = vmatpush1.bf16.msra.mxu0 %v1292
        %2111 = vmatprep.subr.bf16.mxu0 %v1313
        %2112 = vmatpush1.bf16.msra.mxu0 %v1312
        %2113 = vmatprep.subr.bf16.mxu0 %v1333
        %2114 = vmatpush1.bf16.msra.mxu0 %v1332
        %2115 = vmatprep.subr.bf16.mxu0 %v1353
        %2116 = vmatpush1.bf16.msra.mxu0 %v1352
        %2117 = vmatprep.subr.bf16.mxu0 %v1373
        %2118 = vmatpush1.bf16.msra.mxu0 %v1372
        %2119 = vmatprep.subr.bf16.mxu0 %v1393
        %2120 = vmatpush1.bf16.msra.mxu0 %v1392
        %2121 = vmatprep.subr.bf16.mxu0 %v1413
        %2122 = vmatpush1.bf16.msra.mxu0 %v1412
        %2123 = vmatprep.subr.bf16.mxu0 %v1433
        %2124 = vmatpush1.bf16.msra.mxu0 %v1432
        %2125 = vmatprep.subr.bf16.mxu0 0
        %2126 = vmatpush1.bf16.msra.mxu0 0
        %2127 = vmatprep.subr.bf16.mxu0 0
        %2128 = vmatpush1.bf16.msra.mxu0 0
        %2129 = vmatprep.subr.bf16.mxu0 0
        %2130 = vmatpush1.bf16.msra.mxu0 0
        %2131 = vmatprep.subr.bf16.mxu0 0
        %2132 = vmatpush1.bf16.msra.mxu0 0
        %2133 = vmatprep.subr.bf16.mxu0 0
        %2134 = vmatpush1.bf16.msra.mxu0 0
        %2135 = vmatprep.subr.bf16.mxu0 0
        %2136 = vmatpush1.bf16.msra.mxu0 0
        %2137 = vmatprep.subr.bf16.mxu0 0
        %2138 = vmatpush1.bf16.msra.mxu0 0
        %2139 = vmatprep.subr.bf16.mxu0 0
        %2140 = vmatpush1.bf16.msra.mxu0 0
        %2141 = vmatprep.mubr.bf16.mxu0 0
        %2142 = vmatmul.mubr.bf16.gmra.mrb[0].mxu0 %v528
        %v2143 = vpop.f32.mrb[0].mxu0
        %v2144 = vadd.f32 %v757, %v2143
        %v2145 = vpop.f32.mrb[0].mxu0
        %v2146 = vadd.f32 %v761, %v2145
        %v2147 = vpop.f32.mrb[0].mxu0
        %v2148 = vadd.f32 %v757, %v2147
        %v2149 = vpop.f32.mrb[0].mxu0
        %v2150 = vadd.f32 %v761, %v2149
        %2151 = vmatprep.mubr.bf16.mxu0 0
        %2152 = vmatmul.mubr.bf16.gmra.mrb[0].mxu0 %v529
        %v2153 = vpop.f32.mrb[0].mxu0
        %v2154 = vadd.f32 %v757, %v2153
        %v2155 = vpop.f32.mrb[0].mxu0
        %v2156 = vadd.f32 %v761, %v2155
        %v2157 = vpop.f32.mrb[0].mxu0
        %v2158 = vadd.f32 %v757, %v2157
        %v2159 = vpop.f32.mrb[0].mxu0
        %v2160 = vadd.f32 %v761, %v2159
        %2161 = vmatprep.mubr.bf16.mxu0 0
        %2162 = vmatmul.mubr.bf16.gmra.mrb[0].mxu0 %v530
        %v2163 = vpop.f32.mrb[0].mxu0
        %v2164 = vadd.f32 %v757, %v2163
        %v2165 = vpop.f32.mrb[0].mxu0
        %v2166 = vadd.f32 %v761, %v2165
        %v2167 = vpop.f32.mrb[0].mxu0
        %v2168 = vadd.f32 %v757, %v2167
        %v2169 = vpop.f32.mrb[0].mxu0
        %v2170 = vadd.f32 %v761, %v2169
        %2171 = vmatprep.mubr.bf16.mxu0 0
        %2172 = vmatmul.mubr.bf16.gmra.mrb[0].mxu0 %v531
        %v2173 = vpop.f32.mrb[0].mxu0
        %v2174 = vadd.f32 %v757, %v2173
        %v2175 = vpop.f32.mrb[0].mxu0
        %v2176 = vadd.f32 %v761, %v2175
        %v2177 = vpop.f32.mrb[0].mxu0
        %v2178 = vadd.f32 %v757, %v2177
        %v2179 = vpop.f32.mrb[0].mxu0
        %v2180 = vadd.f32 %v761, %v2179
        %2181 = vdwg.mxu0
        %2182 = vmatprep.subr.bf16.mxu0 %v1295
        %2183 = vmatpush1.bf16.msra.mxu0 %v1294
        %2184 = vmatprep.subr.bf16.mxu0 %v1315
        %2185 = vmatpush1.bf16.msra.mxu0 %v1314
        %2186 = vmatprep.subr.bf16.mxu0 %v1335
        %2187 = vmatpush1.bf16.msra.mxu0 %v1334
        %2188 = vmatprep.subr.bf16.mxu0 %v1355
        %2189 = vmatpush1.bf16.msra.mxu0 %v1354
        %2190 = vmatprep.subr.bf16.mxu0 %v1375
        %2191 = vmatpush1.bf16.msra.mxu0 %v1374
        %2192 = vmatprep.subr.bf16.mxu0 %v1395
        %2193 = vmatpush1.bf16.msra.mxu0 %v1394
        %2194 = vmatprep.subr.bf16.mxu0 %v1415
        %2195 = vmatpush1.bf16.msra.mxu0 %v1414
        %2196 = vmatprep.subr.bf16.mxu0 %v1435
        %2197 = vmatpush1.bf16.msra.mxu0 %v1434
        %2198 = vmatprep.subr.bf16.mxu0 0
        %2199 = vmatpush1.bf16.msra.mxu0 0
        %2200 = vmatprep.subr.bf16.mxu0 0
        %2201 = vmatpush1.bf16.msra.mxu0 0
        %2202 = vmatprep.subr.bf16.mxu0 0
        %2203 = vmatpush1.bf16.msra.mxu0 0
        %2204 = vmatprep.subr.bf16.mxu0 0
        %2205 = vmatpush1.bf16.msra.mxu0 0
        %2206 = vmatprep.subr.bf16.mxu0 0
        %2207 = vmatpush1.bf16.msra.mxu0 0
        %2208 = vmatprep.subr.bf16.mxu0 0
        %2209 = vmatpush1.bf16.msra.mxu0 0
        %2210 = vmatprep.subr.bf16.mxu0 0
        %2211 = vmatpush1.bf16.msra.mxu0 0
        %2212 = vmatprep.subr.bf16.mxu0 0
        %2213 = vmatpush1.bf16.msra.mxu0 0
        %2214 = vmatprep.mubr.bf16.mxu0 0
        %2215 = vmatmul.mubr.bf16.gmra.mrb[0].mxu0 %v528
        %v2216 = vpop.f32.mrb[0].mxu0
        %v2217 = vadd.f32 %v765, %v2216
        %v2218 = vpop.f32.mrb[0].mxu0
        %v2219 = vadd.f32 %v769, %v2218
        %v2220 = vpop.f32.mrb[0].mxu0
        %v2221 = vadd.f32 %v765, %v2220
        %v2222 = vpop.f32.mrb[0].mxu0
        %v2223 = vadd.f32 %v769, %v2222
        %2224 = vmatprep.mubr.bf16.mxu0 0
        %2225 = vmatmul.mubr.bf16.gmra.mrb[0].mxu0 %v529
        %v2226 = vpop.f32.mrb[0].mxu0
        %v2227 = vadd.f32 %v765, %v2226
        %v2228 = vpop.f32.mrb[0].mxu0
        %v2229 = vadd.f32 %v769, %v2228
        %v2230 = vpop.f32.mrb[0].mxu0
        %v2231 = vadd.f32 %v765, %v2230
        %v2232 = vpop.f32.mrb[0].mxu0
        %v2233 = vadd.f32 %v769, %v2232
        %2234 = vmatprep.mubr.bf16.mxu0 0
        %2235 = vmatmul.mubr.bf16.gmra.mrb[0].mxu0 %v530
        %v2236 = vpop.f32.mrb[0].mxu0
        %v2237 = vadd.f32 %v765, %v2236
        %v2238 = vpop.f32.mrb[0].mxu0
        %v2239 = vadd.f32 %v769, %v2238
        %v2240 = vpop.f32.mrb[0].mxu0
        %v2241 = vadd.f32 %v765, %v2240
        %v2242 = vpop.f32.mrb[0].mxu0
        %v2243 = vadd.f32 %v769, %v2242
        %2244 = vmatprep.mubr.bf16.mxu0 0
        %2245 = vmatmul.mubr.bf16.gmra.mrb[0].mxu0 %v531
        %v2246 = vpop.f32.mrb[0].mxu0
        %v2247 = vadd.f32 %v765, %v2246
        %v2248 = vpop.f32.mrb[0].mxu0
        %v2249 = vadd.f32 %v769, %v2248
        %v2250 = vpop.f32.mrb[0].mxu0
        %v2251 = vadd.f32 %v765, %v2250
        %v2252 = vpop.f32.mrb[0].mxu0
        %v2253 = vadd.f32 %v769, %v2252
        %2254 = vdwg.mxu0
        %2255 = vmatprep.subr.bf16.mxu0 %v1297
        %2256 = vmatpush1.bf16.msra.mxu0 %v1296
        %2257 = vmatprep.subr.bf16.mxu0 %v1317
        %2258 = vmatpush1.bf16.msra.mxu0 %v1316
        %2259 = vmatprep.subr.bf16.mxu0 %v1337
        %2260 = vmatpush1.bf16.msra.mxu0 %v1336
        %2261 = vmatprep.subr.bf16.mxu0 %v1357
        %2262 = vmatpush1.bf16.msra.mxu0 %v1356
        %2263 = vmatprep.subr.bf16.mxu0 %v1377
        %2264 = vmatpush1.bf16.msra.mxu0 %v1376
        %2265 = vmatprep.subr.bf16.mxu0 %v1397
        %2266 = vmatpush1.bf16.msra.mxu0 %v1396
        %2267 = vmatprep.subr.bf16.mxu0 %v1417
        %2268 = vmatpush1.bf16.msra.mxu0 %v1416
        %2269 = vmatprep.subr.bf16.mxu0 %v1437
        %2270 = vmatpush1.bf16.msra.mxu0 %v1436
        %2271 = vmatprep.subr.bf16.mxu0 0
        %2272 = vmatpush1.bf16.msra.mxu0 0
        %2273 = vmatprep.subr.bf16.mxu0 0
        %2274 = vmatpush1.bf16.msra.mxu0 0
        %2275 = vmatprep.subr.bf16.mxu0 0
        %2276 = vmatpush1.bf16.msra.mxu0 0
        %2277 = vmatprep.subr.bf16.mxu0 0
        %2278 = vmatpush1.bf16.msra.mxu0 0
        %2279 = vmatprep.subr.bf16.mxu0 0
        %2280 = vmatpush1.bf16.msra.mxu0 0
        %2281 = vmatprep.subr.bf16.mxu0 0
        %2282 = vmatpush1.bf16.msra.mxu0 0
        %2283 = vmatprep.subr.bf16.mxu0 0
        %2284 = vmatpush1.bf16.msra.mxu0 0
        %2285 = vmatprep.subr.bf16.mxu0 0
        %2286 = vmatpush1.bf16.msra.mxu0 0
        %2287 = vmatprep.mubr.bf16.mxu0 0
        %2288 = vmatmul.mubr.bf16.gmra.mrb[0].mxu0 %v528
        %v2289 = vpop.f32.mrb[0].mxu0
        %v2290 = vadd.f32 %v773, %v2289
        %v2291 = vpop.f32.mrb[0].mxu0
        %v2292 = vadd.f32 %v777, %v2291
        %v2293 = vpop.f32.mrb[0].mxu0
        %v2294 = vadd.f32 %v773, %v2293
        %v2295 = vpop.f32.mrb[0].mxu0
        %v2296 = vadd.f32 %v777, %v2295
        %2297 = vmatprep.mubr.bf16.mxu0 0
        %2298 = vmatmul.mubr.bf16.gmra.mrb[0].mxu0 %v529
        %v2299 = vpop.f32.mrb[0].mxu0
        %v2300 = vadd.f32 %v773, %v2299
        %v2301 = vpop.f32.mrb[0].mxu0
        %v2302 = vadd.f32 %v777, %v2301
        %v2303 = vpop.f32.mrb[0].mxu0
        %v2304 = vadd.f32 %v773, %v2303
        %v2305 = vpop.f32.mrb[0].mxu0
        %v2306 = vadd.f32 %v777, %v2305
        %2307 = vmatprep.mubr.bf16.mxu0 0
        %2308 = vmatmul.mubr.bf16.gmra.mrb[0].mxu0 %v530
        %v2309 = vpop.f32.mrb[0].mxu0
        %v2310 = vadd.f32 %v773, %v2309
        %v2311 = vpop.f32.mrb[0].mxu0
        %v2312 = vadd.f32 %v777, %v2311
        %v2313 = vpop.f32.mrb[0].mxu0
        %v2314 = vadd.f32 %v773, %v2313
        %v2315 = vpop.f32.mrb[0].mxu0
        %v2316 = vadd.f32 %v777, %v2315
        %2317 = vmatprep.mubr.bf16.mxu0 0
        %2318 = vmatmul.mubr.bf16.gmra.mrb[0].mxu0 %v531
        %v2319 = vpop.f32.mrb[0].mxu0
        %v2320 = vadd.f32 %v773, %v2319
        %v2321 = vpop.f32.mrb[0].mxu0
        %v2322 = vadd.f32 %v777, %v2321
        %v2323 = vpop.f32.mrb[0].mxu0
        %v2324 = vadd.f32 %v773, %v2323
        %v2325 = vpop.f32.mrb[0].mxu0
        %v2326 = vadd.f32 %v777, %v2325
        %2327 = vdwg.mxu0
        %v2328 = vpack.c.bf16 %v1637, %v1633
        %v2329 = vpack.c.bf16 %v1639, %v1635
        %v2330 = vpack.c.bf16 %v1710, %v1706
        %v2331 = vpack.c.bf16 %v1712, %v1708
        %v2332 = vpack.c.bf16 %v1783, %v1779
        %v2333 = vpack.c.bf16 %v1785, %v1781
        %v2334 = vpack.c.bf16 %v1856, %v1852
        %v2335 = vpack.c.bf16 %v1858, %v1854
        %v2336 = vpack.c.bf16 %v1929, %v1925
        %v2337 = vpack.c.bf16 %v1931, %v1927
        %v2338 = vpack.c.bf16 %v2002, %v1998
        %v2339 = vpack.c.bf16 %v2004, %v2000
        %v2340 = vpack.c.bf16 %v2075, %v2071
        %v2341 = vpack.c.bf16 %v2077, %v2073
        %v2342 = vpack.c.bf16 %v2148, %v2144
        %v2343 = vpack.c.bf16 %v2150, %v2146
        %v2344 = vpack.c.bf16 %v2221, %v2217
        %v2345 = vpack.c.bf16 %v2223, %v2219
        %v2346 = vpack.c.bf16 %v2294, %v2290
        %v2347 = vpack.c.bf16 %v2296, %v2292
        %v2348 = vpack.c.bf16 %v1647, %v1643
        %v2349 = vpack.c.bf16 %v1649, %v1645
        %v2350 = vpack.c.bf16 %v1720, %v1716
        %v2351 = vpack.c.bf16 %v1722, %v1718
        %v2352 = vpack.c.bf16 %v1793, %v1789
        %v2353 = vpack.c.bf16 %v1795, %v1791
        %v2354 = vpack.c.bf16 %v1866, %v1862
        %v2355 = vpack.c.bf16 %v1868, %v1864
        %v2356 = vpack.c.bf16 %v1939, %v1935
        %v2357 = vpack.c.bf16 %v1941, %v1937
        %v2358 = vpack.c.bf16 %v2012, %v2008
        %v2359 = vpack.c.bf16 %v2014, %v2010
        %v2360 = vpack.c.bf16 %v2085, %v2081
        %v2361 = vpack.c.bf16 %v2087, %v2083
        %v2362 = vpack.c.bf16 %v2158, %v2154
        %v2363 = vpack.c.bf16 %v2160, %v2156
        %v2364 = vpack.c.bf16 %v2231, %v2227
        %v2365 = vpack.c.bf16 %v2233, %v2229
        %v2366 = vpack.c.bf16 %v2304, %v2300
        %v2367 = vpack.c.bf16 %v2306, %v2302
        %v2368 = vpack.c.bf16 %v1657, %v1653
        %v2369 = vpack.c.bf16 %v1659, %v1655
        %v2370 = vpack.c.bf16 %v1730, %v1726
        %v2371 = vpack.c.bf16 %v1732, %v1728
        %v2372 = vpack.c.bf16 %v1803, %v1799
        %v2373 = vpack.c.bf16 %v1805, %v1801
        %v2374 = vpack.c.bf16 %v1876, %v1872
        %v2375 = vpack.c.bf16 %v1878, %v1874
        %v2376 = vpack.c.bf16 %v1949, %v1945
        %v2377 = vpack.c.bf16 %v1951, %v1947
        %v2378 = vpack.c.bf16 %v2022, %v2018
        %v2379 = vpack.c.bf16 %v2024, %v2020
        %v2380 = vpack.c.bf16 %v2095, %v2091
        %v2381 = vpack.c.bf16 %v2097, %v2093
        %v2382 = vpack.c.bf16 %v2168, %v2164
        %v2383 = vpack.c.bf16 %v2170, %v2166
        %v2384 = vpack.c.bf16 %v2241, %v2237
        %v2385 = vpack.c.bf16 %v2243, %v2239
        %v2386 = vpack.c.bf16 %v2314, %v2310
        %v2387 = vpack.c.bf16 %v2316, %v2312
        %v2388 = vpack.c.bf16 %v1667, %v1663
        %v2389 = vpack.c.bf16 %v1669, %v1665
        %v2390 = vpack.c.bf16 %v1740, %v1736
        %v2391 = vpack.c.bf16 %v1742, %v1738
        %v2392 = vpack.c.bf16 %v1813, %v1809
        %v2393 = vpack.c.bf16 %v1815, %v1811
        %v2394 = vpack.c.bf16 %v1886, %v1882
        %v2395 = vpack.c.bf16 %v1888, %v1884
        %v2396 = vpack.c.bf16 %v1959, %v1955
        %v2397 = vpack.c.bf16 %v1961, %v1957
        %v2398 = vpack.c.bf16 %v2032, %v2028
        %v2399 = vpack.c.bf16 %v2034, %v2030
        %v2400 = vpack.c.bf16 %v2105, %v2101
        %v2401 = vpack.c.bf16 %v2107, %v2103
        %v2402 = vpack.c.bf16 %v2178, %v2174
        %v2403 = vpack.c.bf16 %v2180, %v2176
        %v2404 = vpack.c.bf16 %v2251, %v2247
        %v2405 = vpack.c.bf16 %v2253, %v2249
        %v2406 = vpack.c.bf16 %v2324, %v2320
        %v2407 = vpack.c.bf16 %v2326, %v2322
        %v2408 = vxor.u32 %v2328, 2147516416
        %v2409 = vxor.u32 %v2329, 2147516416
        %v2410 = vxor.u32 %v2330, 2147516416
        %v2411 = vxor.u32 %v2331, 2147516416
        %v2412 = vxor.u32 %v2332, 2147516416
        %v2413 = vxor.u32 %v2333, 2147516416
        %v2414 = vxor.u32 %v2334, 2147516416
        %v2415 = vxor.u32 %v2335, 2147516416
        %v2416 = vxor.u32 %v2336, 2147516416
        %v2417 = vxor.u32 %v2337, 2147516416
        %v2418 = vxor.u32 %v2338, 2147516416
        %v2419 = vxor.u32 %v2339, 2147516416
        %v2420 = vxor.u32 %v2340, 2147516416
        %v2421 = vxor.u32 %v2341, 2147516416
        %v2422 = vxor.u32 %v2342, 2147516416
        %v2423 = vxor.u32 %v2343, 2147516416
        %v2424 = vxor.u32 %v2344, 2147516416
        %v2425 = vxor.u32 %v2345, 2147516416
        %v2426 = vxor.u32 %v2346, 2147516416
        %v2427 = vxor.u32 %v2347, 2147516416
        %v2428 = vxor.u32 %v2348, 2147516416
        %v2429 = vxor.u32 %v2349, 2147516416
        %v2430 = vxor.u32 %v2350, 2147516416
        %v2431 = vxor.u32 %v2351, 2147516416
        %v2432 = vxor.u32 %v2352, 2147516416
        %v2433 = vxor.u32 %v2353, 2147516416
        %v2434 = vxor.u32 %v2354, 2147516416
        %v2435 = vxor.u32 %v2355, 2147516416
        %v2436 = vxor.u32 %v2356, 2147516416
        %v2437 = vxor.u32 %v2357, 2147516416
        %v2438 = vxor.u32 %v2358, 2147516416
        %v2439 = vxor.u32 %v2359, 2147516416
        %v2440 = vxor.u32 %v2360, 2147516416
        %v2441 = vxor.u32 %v2361, 2147516416
        %v2442 = vxor.u32 %v2362, 2147516416
        %v2443 = vxor.u32 %v2363, 2147516416
        %v2444 = vxor.u32 %v2364, 2147516416
        %v2445 = vxor.u32 %v2365, 2147516416
        %v2446 = vxor.u32 %v2366, 2147516416
        %v2447 = vxor.u32 %v2367, 2147516416
        %v2448 = vxor.u32 %v2368, 2147516416
        %v2449 = vxor.u32 %v2369, 2147516416
        %v2450 = vxor.u32 %v2370, 2147516416
        %v2451 = vxor.u32 %v2371, 2147516416
        %v2452 = vxor.u32 %v2372, 2147516416
        %v2453 = vxor.u32 %v2373, 2147516416
        %v2454 = vxor.u32 %v2374, 2147516416
        %v2455 = vxor.u32 %v2375, 2147516416
        %v2456 = vxor.u32 %v2376, 2147516416
        %v2457 = vxor.u32 %v2377, 2147516416
        %v2458 = vxor.u32 %v2378, 2147516416
        %v2459 = vxor.u32 %v2379, 2147516416
        %v2460 = vxor.u32 %v2380, 2147516416
        %v2461 = vxor.u32 %v2381, 2147516416
        %v2462 = vxor.u32 %v2382, 2147516416
        %v2463 = vxor.u32 %v2383, 2147516416
        %v2464 = vxor.u32 %v2384, 2147516416
        %v2465 = vxor.u32 %v2385, 2147516416
        %v2466 = vxor.u32 %v2386, 2147516416
        %v2467 = vxor.u32 %v2387, 2147516416
        %v2468 = vxor.u32 %v2388, 2147516416
        %v2469 = vxor.u32 %v2389, 2147516416
        %v2470 = vxor.u32 %v2390, 2147516416
        %v2471 = vxor.u32 %v2391, 2147516416
        %v2472 = vxor.u32 %v2392, 2147516416
        %v2473 = vxor.u32 %v2393, 2147516416
        %v2474 = vxor.u32 %v2394, 2147516416
        %v2475 = vxor.u32 %v2395, 2147516416
        %v2476 = vxor.u32 %v2396, 2147516416
        %v2477 = vxor.u32 %v2397, 2147516416
        %v2478 = vxor.u32 %v2398, 2147516416
        %v2479 = vxor.u32 %v2399, 2147516416
        %v2480 = vxor.u32 %v2400, 2147516416
        %v2481 = vxor.u32 %v2401, 2147516416
        %v2482 = vxor.u32 %v2402, 2147516416
        %v2483 = vxor.u32 %v2403, 2147516416
        %v2484 = vxor.u32 %v2404, 2147516416
        %v2485 = vxor.u32 %v2405, 2147516416
        %v2486 = vxor.u32 %v2406, 2147516416
        %v2487 = vxor.u32 %v2407, 2147516416
        %v2489 = vmul.bf16 %v2408, 1069105081
        %v2490 = vpow.bf16.pop %v2489
        %v2492 = vmul.bf16 %v2409, 1069105081
        %v2493 = vpow.bf16.pop %v2492
        %v2495 = vmul.bf16 %v2410, 1069105081
        %v2496 = vpow.bf16.pop %v2495
        %v2498 = vmul.bf16 %v2411, 1069105081
        %v2499 = vpow.bf16.pop %v2498
        %v2501 = vmul.bf16 %v2412, 1069105081
        %v2502 = vpow.bf16.pop %v2501
        %v2504 = vmul.bf16 %v2413, 1069105081
        %v2505 = vpow.bf16.pop %v2504
        %v2507 = vmul.bf16 %v2414, 1069105081
        %v2508 = vpow.bf16.pop %v2507
        %v2510 = vmul.bf16 %v2415, 1069105081
        %v2511 = vpow.bf16.pop %v2510
        %v2513 = vmul.bf16 %v2416, 1069105081
        %v2514 = vpow.bf16.pop %v2513
        %v2516 = vmul.bf16 %v2417, 1069105081
        %v2517 = vpow.bf16.pop %v2516
        %v2519 = vmul.bf16 %v2418, 1069105081
        %v2520 = vpow.bf16.pop %v2519
        %v2522 = vmul.bf16 %v2419, 1069105081
        %v2523 = vpow.bf16.pop %v2522
        %v2525 = vmul.bf16 %v2420, 1069105081
        %v2526 = vpow.bf16.pop %v2525
        %v2528 = vmul.bf16 %v2421, 1069105081
        %v2529 = vpow.bf16.pop %v2528
        %v2531 = vmul.bf16 %v2422, 1069105081
        %v2532 = vpow.bf16.pop %v2531
        %v2534 = vmul.bf16 %v2423, 1069105081
        %v2535 = vpow.bf16.pop %v2534
        %v2537 = vmul.bf16 %v2424, 1069105081
        %v2538 = vpow.bf16.pop %v2537
        %v2540 = vmul.bf16 %v2425, 1069105081
        %v2541 = vpow.bf16.pop %v2540
        %v2543 = vmul.bf16 %v2426, 1069105081
        %v2544 = vpow.bf16.pop %v2543
        %v2546 = vmul.bf16 %v2427, 1069105081
        %v2547 = vpow.bf16.pop %v2546
        %v2549 = vmul.bf16 %v2428, 1069105081
        %v2550 = vpow.bf16.pop %v2549
        %v2552 = vmul.bf16 %v2429, 1069105081
        %v2553 = vpow.bf16.pop %v2552
        %v2555 = vmul.bf16 %v2430, 1069105081
        %v2556 = vpow.bf16.pop %v2555
        %v2558 = vmul.bf16 %v2431, 1069105081
        %v2559 = vpow.bf16.pop %v2558
        %v2561 = vmul.bf16 %v2432, 1069105081
        %v2562 = vpow.bf16.pop %v2561
        %v2564 = vmul.bf16 %v2433, 1069105081
        %v2565 = vpow.bf16.pop %v2564
        %v2567 = vmul.bf16 %v2434, 1069105081
        %v2568 = vpow.bf16.pop %v2567
        %v2570 = vmul.bf16 %v2435, 1069105081
        %v2571 = vpow.bf16.pop %v2570
        %v2573 = vmul.bf16 %v2436, 1069105081
        %v2574 = vpow.bf16.pop %v2573
        %v2576 = vmul.bf16 %v2437, 1069105081
        %v2577 = vpow.bf16.pop %v2576
        %v2579 = vmul.bf16 %v2438, 1069105081
        %v2580 = vpow.bf16.pop %v2579
        %v2582 = vmul.bf16 %v2439, 1069105081
        %v2583 = vpow.bf16.pop %v2582
        %v2585 = vmul.bf16 %v2440, 1069105081
        %v2586 = vpow.bf16.pop %v2585
        %v2588 = vmul.bf16 %v2441, 1069105081
        %v2589 = vpow.bf16.pop %v2588
        %v2591 = vmul.bf16 %v2442, 1069105081
        %v2592 = vpow.bf16.pop %v2591
        %v2594 = vmul.bf16 %v2443, 1069105081
        %v2595 = vpow.bf16.pop %v2594
        %v2597 = vmul.bf16 %v2444, 1069105081
        %v2598 = vpow.bf16.pop %v2597
        %v2600 = vmul.bf16 %v2445, 1069105081
        %v2601 = vpow.bf16.pop %v2600
        %v2603 = vmul.bf16 %v2446, 1069105081
        %v2604 = vpow.bf16.pop %v2603
        %v2606 = vmul.bf16 %v2447, 1069105081
        %v2607 = vpow.bf16.pop %v2606
        %v2609 = vmul.bf16 %v2448, 1069105081
        %v2610 = vpow.bf16.pop %v2609
        %v2612 = vmul.bf16 %v2449, 1069105081
        %v2613 = vpow.bf16.pop %v2612
        %v2615 = vmul.bf16 %v2450, 1069105081
        %v2616 = vpow.bf16.pop %v2615
        %v2618 = vmul.bf16 %v2451, 1069105081
        %v2619 = vpow.bf16.pop %v2618
        %v2621 = vmul.bf16 %v2452, 1069105081
        %v2622 = vpow.bf16.pop %v2621
        %v2624 = vmul.bf16 %v2453, 1069105081
        %v2625 = vpow.bf16.pop %v2624
        %v2627 = vmul.bf16 %v2454, 1069105081
        %v2628 = vpow.bf16.pop %v2627
        %v2630 = vmul.bf16 %v2455, 1069105081
        %v2631 = vpow.bf16.pop %v2630
        %v2633 = vmul.bf16 %v2456, 1069105081
        %v2634 = vpow.bf16.pop %v2633
        %v2636 = vmul.bf16 %v2457, 1069105081
        %v2637 = vpow.bf16.pop %v2636
        %v2639 = vmul.bf16 %v2458, 1069105081
        %v2640 = vpow.bf16.pop %v2639
        %v2642 = vmul.bf16 %v2459, 1069105081
        %v2643 = vpow.bf16.pop %v2642
        %v2645 = vmul.bf16 %v2460, 1069105081
        %v2646 = vpow.bf16.pop %v2645
        %v2648 = vmul.bf16 %v2461, 1069105081
        %v2649 = vpow.bf16.pop %v2648
        %v2651 = vmul.bf16 %v2462, 1069105081
        %v2652 = vpow.bf16.pop %v2651
        %v2654 = vmul.bf16 %v2463, 1069105081
        %v2655 = vpow.bf16.pop %v2654
        %v2657 = vmul.bf16 %v2464, 1069105081
        %v2658 = vpow.bf16.pop %v2657
        %v2660 = vmul.bf16 %v2465, 1069105081
        %v2661 = vpow.bf16.pop %v2660
        %v2663 = vmul.bf16 %v2466, 1069105081
        %v2664 = vpow.bf16.pop %v2663
        %v2666 = vmul.bf16 %v2467, 1069105081
        %v2667 = vpow.bf16.pop %v2666
        %v2669 = vmul.bf16 %v2468, 1069105081
        %v2670 = vpow.bf16.pop %v2669
        %v2672 = vmul.bf16 %v2469, 1069105081
        %v2673 = vpow.bf16.pop %v2672
        %v2675 = vmul.bf16 %v2470, 1069105081
        %v2676 = vpow.bf16.pop %v2675
        %v2678 = vmul.bf16 %v2471, 1069105081
        %v2679 = vpow.bf16.pop %v2678
        %v2681 = vmul.bf16 %v2472, 1069105081
        %v2682 = vpow.bf16.pop %v2681
        %v2684 = vmul.bf16 %v2473, 1069105081
        %v2685 = vpow.bf16.pop %v2684
        %v2687 = vmul.bf16 %v2474, 1069105081
        %v2688 = vpow.bf16.pop %v2687
        %v2690 = vmul.bf16 %v2475, 1069105081
        %v2691 = vpow.bf16.pop %v2690
        %v2693 = vmul.bf16 %v2476, 1069105081
        %v2694 = vpow.bf16.pop %v2693
        %v2696 = vmul.bf16 %v2477, 1069105081
        %v2697 = vpow.bf16.pop %v2696
        %v2699 = vmul.bf16 %v2478, 1069105081
        %v2700 = vpow.bf16.pop %v2699
        %v2702 = vmul.bf16 %v2479, 1069105081
        %v2703 = vpow.bf16.pop %v2702
        %v2705 = vmul.bf16 %v2480, 1069105081
        %v2706 = vpow.bf16.pop %v2705
        %v2708 = vmul.bf16 %v2481, 1069105081
        %v2709 = vpow.bf16.pop %v2708
        %v2711 = vmul.bf16 %v2482, 1069105081
        %v2712 = vpow.bf16.pop %v2711
        %v2714 = vmul.bf16 %v2483, 1069105081
        %v2715 = vpow.bf16.pop %v2714
        %v2717 = vmul.bf16 %v2484, 1069105081
        %v2718 = vpow.bf16.pop %v2717
        %v2720 = vmul.bf16 %v2485, 1069105081
        %v2721 = vpow.bf16.pop %v2720
        %v2723 = vmul.bf16 %v2486, 1069105081
        %v2724 = vpow.bf16.pop %v2723
        %v2726 = vmul.bf16 %v2487, 1069105081
        %v2727 = vpow.bf16.pop %v2726
        %v2728 = vadd.bf16 %v2490, 1065369472
        %v2729 = vadd.bf16 %v2493, 1065369472
        %v2730 = vadd.bf16 %v2496, 1065369472
        %v2731 = vadd.bf16 %v2499, 1065369472
        %v2732 = vadd.bf16 %v2502, 1065369472
        %v2733 = vadd.bf16 %v2505, 1065369472
        %v2734 = vadd.bf16 %v2508, 1065369472
        %v2735 = vadd.bf16 %v2511, 1065369472
        %v2736 = vadd.bf16 %v2514, 1065369472
        %v2737 = vadd.bf16 %v2517, 1065369472
        %v2738 = vadd.bf16 %v2520, 1065369472
        %v2739 = vadd.bf16 %v2523, 1065369472
        %v2740 = vadd.bf16 %v2526, 1065369472
        %v2741 = vadd.bf16 %v2529, 1065369472
        %v2742 = vadd.bf16 %v2532, 1065369472
        %v2743 = vadd.bf16 %v2535, 1065369472
        %v2744 = vadd.bf16 %v2538, 1065369472
        %v2745 = vadd.bf16 %v2541, 1065369472
        %v2746 = vadd.bf16 %v2544, 1065369472
        %v2747 = vadd.bf16 %v2547, 1065369472
        %v2748 = vadd.bf16 %v2550, 1065369472
        %v2749 = vadd.bf16 %v2553, 1065369472
        %v2750 = vadd.bf16 %v2556, 1065369472
        %v2751 = vadd.bf16 %v2559, 1065369472
        %v2752 = vadd.bf16 %v2562, 1065369472
        %v2753 = vadd.bf16 %v2565, 1065369472
        %v2754 = vadd.bf16 %v2568, 1065369472
        %v2755 = vadd.bf16 %v2571, 1065369472
        %v2756 = vadd.bf16 %v2574, 1065369472
        %v2757 = vadd.bf16 %v2577, 1065369472
        %v2758 = vadd.bf16 %v2580, 1065369472
        %v2759 = vadd.bf16 %v2583, 1065369472
        %v2760 = vadd.bf16 %v2586, 1065369472
        %v2761 = vadd.bf16 %v2589, 1065369472
        %v2762 = vadd.bf16 %v2592, 1065369472
        %v2763 = vadd.bf16 %v2595, 1065369472
        %v2764 = vadd.bf16 %v2598, 1065369472
        %v2765 = vadd.bf16 %v2601, 1065369472
        %v2766 = vadd.bf16 %v2604, 1065369472
        %v2767 = vadd.bf16 %v2607, 1065369472
        %v2768 = vadd.bf16 %v2610, 1065369472
        %v2769 = vadd.bf16 %v2613, 1065369472
        %v2770 = vadd.bf16 %v2616, 1065369472
        %v2771 = vadd.bf16 %v2619, 1065369472
        %v2772 = vadd.bf16 %v2622, 1065369472
        %v2773 = vadd.bf16 %v2625, 1065369472
        %v2774 = vadd.bf16 %v2628, 1065369472
        %v2775 = vadd.bf16 %v2631, 1065369472
        %v2776 = vadd.bf16 %v2634, 1065369472
        %v2777 = vadd.bf16 %v2637, 1065369472
        %v2778 = vadd.bf16 %v2640, 1065369472
        %v2779 = vadd.bf16 %v2643, 1065369472
        %v2780 = vadd.bf16 %v2646, 1065369472
        %v2781 = vadd.bf16 %v2649, 1065369472
        %v2782 = vadd.bf16 %v2652, 1065369472
        %v2783 = vadd.bf16 %v2655, 1065369472
        %v2784 = vadd.bf16 %v2658, 1065369472
        %v2785 = vadd.bf16 %v2661, 1065369472
        %v2786 = vadd.bf16 %v2664, 1065369472
        %v2787 = vadd.bf16 %v2667, 1065369472
        %v2788 = vadd.bf16 %v2670, 1065369472
        %v2789 = vadd.bf16 %v2673, 1065369472
        %v2790 = vadd.bf16 %v2676, 1065369472
        %v2791 = vadd.bf16 %v2679, 1065369472
        %v2792 = vadd.bf16 %v2682, 1065369472
        %v2793 = vadd.bf16 %v2685, 1065369472
        %v2794 = vadd.bf16 %v2688, 1065369472
        %v2795 = vadd.bf16 %v2691, 1065369472
        %v2796 = vadd.bf16 %v2694, 1065369472
        %v2797 = vadd.bf16 %v2697, 1065369472
        %v2798 = vadd.bf16 %v2700, 1065369472
        %v2799 = vadd.bf16 %v2703, 1065369472
        %v2800 = vadd.bf16 %v2706, 1065369472
        %v2801 = vadd.bf16 %v2709, 1065369472
        %v2802 = vadd.bf16 %v2712, 1065369472
        %v2803 = vadd.bf16 %v2715, 1065369472
        %v2804 = vadd.bf16 %v2718, 1065369472
        %v2805 = vadd.bf16 %v2721, 1065369472
        %v2806 = vadd.bf16 %v2724, 1065369472
        %v2807 = vadd.bf16 %v2727, 1065369472
        %v2808 = vrcp.bf16.pop %v2728
        %v2809 = vmul.bf16 1065369472, %v2808
        %v2810 = vrcp.bf16.pop %v2729
        %v2811 = vmul.bf16 1065369472, %v2810
        %v2812 = vrcp.bf16.pop %v2730
        %v2813 = vmul.bf16 1065369472, %v2812
        %v2814 = vrcp.bf16.pop %v2731
        %v2815 = vmul.bf16 1065369472, %v2814
        %v2816 = vrcp.bf16.pop %v2732
        %v2817 = vmul.bf16 1065369472, %v2816
        %v2818 = vrcp.bf16.pop %v2733
        %v2819 = vmul.bf16 1065369472, %v2818
        %v2820 = vrcp.bf16.pop %v2734
        %v2821 = vmul.bf16 1065369472, %v2820
        %v2822 = vrcp.bf16.pop %v2735
        %v2823 = vmul.bf16 1065369472, %v2822
        %v2824 = vrcp.bf16.pop %v2736
        %v2825 = vmul.bf16 1065369472, %v2824
        %v2826 = vrcp.bf16.pop %v2737
        %v2827 = vmul.bf16 1065369472, %v2826
        %v2828 = vrcp.bf16.pop %v2738
        %v2829 = vmul.bf16 1065369472, %v2828
        %v2830 = vrcp.bf16.pop %v2739
        %v2831 = vmul.bf16 1065369472, %v2830
        %v2832 = vrcp.bf16.pop %v2740
        %v2833 = vmul.bf16 1065369472, %v2832
        %v2834 = vrcp.bf16.pop %v2741
        %v2835 = vmul.bf16 1065369472, %v2834
        %v2836 = vrcp.bf16.pop %v2742
        %v2837 = vmul.bf16 1065369472, %v2836
        %v2838 = vrcp.bf16.pop %v2743
        %v2839 = vmul.bf16 1065369472, %v2838
        %v2840 = vrcp.bf16.pop %v2744
        %v2841 = vmul.bf16 1065369472, %v2840
        %v2842 = vrcp.bf16.pop %v2745
        %v2843 = vmul.bf16 1065369472, %v2842
        %v2844 = vrcp.bf16.pop %v2746
        %v2845 = vmul.bf16 1065369472, %v2844
        %v2846 = vrcp.bf16.pop %v2747
        %v2847 = vmul.bf16 1065369472, %v2846
        %v2848 = vrcp.bf16.pop %v2748
        %v2849 = vmul.bf16 1065369472, %v2848
        %v2850 = vrcp.bf16.pop %v2749
        %v2851 = vmul.bf16 1065369472, %v2850
        %v2852 = vrcp.bf16.pop %v2750
        %v2853 = vmul.bf16 1065369472, %v2852
        %v2854 = vrcp.bf16.pop %v2751
        %v2855 = vmul.bf16 1065369472, %v2854
        %v2856 = vrcp.bf16.pop %v2752
        %v2857 = vmul.bf16 1065369472, %v2856
        %v2858 = vrcp.bf16.pop %v2753
        %v2859 = vmul.bf16 1065369472, %v2858
        %v2860 = vrcp.bf16.pop %v2754
        %v2861 = vmul.bf16 1065369472, %v2860
        %v2862 = vrcp.bf16.pop %v2755
        %v2863 = vmul.bf16 1065369472, %v2862
        %v2864 = vrcp.bf16.pop %v2756
        %v2865 = vmul.bf16 1065369472, %v2864
        %v2866 = vrcp.bf16.pop %v2757
        %v2867 = vmul.bf16 1065369472, %v2866
        %v2868 = vrcp.bf16.pop %v2758
        %v2869 = vmul.bf16 1065369472, %v2868
        %v2870 = vrcp.bf16.pop %v2759
        %v2871 = vmul.bf16 1065369472, %v2870
        %v2872 = vrcp.bf16.pop %v2760
        %v2873 = vmul.bf16 1065369472, %v2872
        %v2874 = vrcp.bf16.pop %v2761
        %v2875 = vmul.bf16 1065369472, %v2874
        %v2876 = vrcp.bf16.pop %v2762
        %v2877 = vmul.bf16 1065369472, %v2876
        %v2878 = vrcp.bf16.pop %v2763
        %v2879 = vmul.bf16 1065369472, %v2878
        %v2880 = vrcp.bf16.pop %v2764
        %v2881 = vmul.bf16 1065369472, %v2880
        %v2882 = vrcp.bf16.pop %v2765
        %v2883 = vmul.bf16 1065369472, %v2882
        %v2884 = vrcp.bf16.pop %v2766
        %v2885 = vmul.bf16 1065369472, %v2884
        %v2886 = vrcp.bf16.pop %v2767
        %v2887 = vmul.bf16 1065369472, %v2886
        %v2888 = vrcp.bf16.pop %v2768
        %v2889 = vmul.bf16 1065369472, %v2888
        %v2890 = vrcp.bf16.pop %v2769
        %v2891 = vmul.bf16 1065369472, %v2890
        %v2892 = vrcp.bf16.pop %v2770
        %v2893 = vmul.bf16 1065369472, %v2892
        %v2894 = vrcp.bf16.pop %v2771
        %v2895 = vmul.bf16 1065369472, %v2894
        %v2896 = vrcp.bf16.pop %v2772
        %v2897 = vmul.bf16 1065369472, %v2896
        %v2898 = vrcp.bf16.pop %v2773
        %v2899 = vmul.bf16 1065369472, %v2898
        %v2900 = vrcp.bf16.pop %v2774
        %v2901 = vmul.bf16 1065369472, %v2900
        %v2902 = vrcp.bf16.pop %v2775
        %v2903 = vmul.bf16 1065369472, %v2902
        %v2904 = vrcp.bf16.pop %v2776
        %v2905 = vmul.bf16 1065369472, %v2904
        %v2906 = vrcp.bf16.pop %v2777
        %v2907 = vmul.bf16 1065369472, %v2906
        %v2908 = vrcp.bf16.pop %v2778
        %v2909 = vmul.bf16 1065369472, %v2908
        %v2910 = vrcp.bf16.pop %v2779
        %v2911 = vmul.bf16 1065369472, %v2910
        %v2912 = vrcp.bf16.pop %v2780
        %v2913 = vmul.bf16 1065369472, %v2912
        %v2914 = vrcp.bf16.pop %v2781
        %v2915 = vmul.bf16 1065369472, %v2914
        %v2916 = vrcp.bf16.pop %v2782
        %v2917 = vmul.bf16 1065369472, %v2916
        %v2918 = vrcp.bf16.pop %v2783
        %v2919 = vmul.bf16 1065369472, %v2918
        %v2920 = vrcp.bf16.pop %v2784
        %v2921 = vmul.bf16 1065369472, %v2920
        %v2922 = vrcp.bf16.pop %v2785
        %v2923 = vmul.bf16 1065369472, %v2922
        %v2924 = vrcp.bf16.pop %v2786
        %v2925 = vmul.bf16 1065369472, %v2924
        %v2926 = vrcp.bf16.pop %v2787
        %v2927 = vmul.bf16 1065369472, %v2926
        %v2928 = vrcp.bf16.pop %v2788
        %v2929 = vmul.bf16 1065369472, %v2928
        %v2930 = vrcp.bf16.pop %v2789
        %v2931 = vmul.bf16 1065369472, %v2930
        %v2932 = vrcp.bf16.pop %v2790
        %v2933 = vmul.bf16 1065369472, %v2932
        %v2934 = vrcp.bf16.pop %v2791
        %v2935 = vmul.bf16 1065369472, %v2934
        %v2936 = vrcp.bf16.pop %v2792
        %v2937 = vmul.bf16 1065369472, %v2936
        %v2938 = vrcp.bf16.pop %v2793
        %v2939 = vmul.bf16 1065369472, %v2938
        %v2940 = vrcp.bf16.pop %v2794
        %v2941 = vmul.bf16 1065369472, %v2940
        %v2942 = vrcp.bf16.pop %v2795
        %v2943 = vmul.bf16 1065369472, %v2942
        %v2944 = vrcp.bf16.pop %v2796
        %v2945 = vmul.bf16 1065369472, %v2944
        %v2946 = vrcp.bf16.pop %v2797
        %v2947 = vmul.bf16 1065369472, %v2946
        %v2948 = vrcp.bf16.pop %v2798
        %v2949 = vmul.bf16 1065369472, %v2948
        %v2950 = vrcp.bf16.pop %v2799
        %v2951 = vmul.bf16 1065369472, %v2950
        %v2952 = vrcp.bf16.pop %v2800
        %v2953 = vmul.bf16 1065369472, %v2952
        %v2954 = vrcp.bf16.pop %v2801
        %v2955 = vmul.bf16 1065369472, %v2954
        %v2956 = vrcp.bf16.pop %v2802
        %v2957 = vmul.bf16 1065369472, %v2956
        %v2958 = vrcp.bf16.pop %v2803
        %v2959 = vmul.bf16 1065369472, %v2958
        %v2960 = vrcp.bf16.pop %v2804
        %v2961 = vmul.bf16 1065369472, %v2960
        %v2962 = vrcp.bf16.pop %v2805
        %v2963 = vmul.bf16 1065369472, %v2962
        %v2964 = vrcp.bf16.pop %v2806
        %v2965 = vmul.bf16 1065369472, %v2964
        %v2966 = vrcp.bf16.pop %v2807
        %v2967 = vmul.bf16 1065369472, %v2966
        %v2968 = vmul.bf16 %v2328, %v2809
        %v2969 = vmul.bf16 %v2329, %v2811
        %v2970 = vmul.bf16 %v2330, %v2813
        %v2971 = vmul.bf16 %v2331, %v2815
        %v2972 = vmul.bf16 %v2332, %v2817
        %v2973 = vmul.bf16 %v2333, %v2819
        %v2974 = vmul.bf16 %v2334, %v2821
        %v2975 = vmul.bf16 %v2335, %v2823
        %v2976 = vmul.bf16 %v2336, %v2825
        %v2977 = vmul.bf16 %v2337, %v2827
        %v2978 = vmul.bf16 %v2338, %v2829
        %v2979 = vmul.bf16 %v2339, %v2831
        %v2980 = vmul.bf16 %v2340, %v2833
        %v2981 = vmul.bf16 %v2341, %v2835
        %v2982 = vmul.bf16 %v2342, %v2837
        %v2983 = vmul.bf16 %v2343, %v2839
        %v2984 = vmul.bf16 %v2344, %v2841
        %v2985 = vmul.bf16 %v2345, %v2843
        %v2986 = vmul.bf16 %v2346, %v2845
        %v2987 = vmul.bf16 %v2347, %v2847
        %v2988 = vmul.bf16 %v2348, %v2849
        %v2989 = vmul.bf16 %v2349, %v2851
        %v2990 = vmul.bf16 %v2350, %v2853
        %v2991 = vmul.bf16 %v2351, %v2855
        %v2992 = vmul.bf16 %v2352, %v2857
        %v2993 = vmul.bf16 %v2353, %v2859
        %v2994 = vmul.bf16 %v2354, %v2861
        %v2995 = vmul.bf16 %v2355, %v2863
        %v2996 = vmul.bf16 %v2356, %v2865
        %v2997 = vmul.bf16 %v2357, %v2867
        %v2998 = vmul.bf16 %v2358, %v2869
        %v2999 = vmul.bf16 %v2359, %v2871
        %v3000 = vmul.bf16 %v2360, %v2873
        %v3001 = vmul.bf16 %v2361, %v2875
        %v3002 = vmul.bf16 %v2362, %v2877
        %v3003 = vmul.bf16 %v2363, %v2879
        %v3004 = vmul.bf16 %v2364, %v2881
        %v3005 = vmul.bf16 %v2365, %v2883
        %v3006 = vmul.bf16 %v2366, %v2885
        %v3007 = vmul.bf16 %v2367, %v2887
        %v3008 = vmul.bf16 %v2368, %v2889
        %v3009 = vmul.bf16 %v2369, %v2891
        %v3010 = vmul.bf16 %v2370, %v2893
        %v3011 = vmul.bf16 %v2371, %v2895
        %v3012 = vmul.bf16 %v2372, %v2897
        %v3013 = vmul.bf16 %v2373, %v2899
        %v3014 = vmul.bf16 %v2374, %v2901
        %v3015 = vmul.bf16 %v2375, %v2903
        %v3016 = vmul.bf16 %v2376, %v2905
        %v3017 = vmul.bf16 %v2377, %v2907
        %v3018 = vmul.bf16 %v2378, %v2909
        %v3019 = vmul.bf16 %v2379, %v2911
        %v3020 = vmul.bf16 %v2380, %v2913
        %v3021 = vmul.bf16 %v2381, %v2915
        %v3022 = vmul.bf16 %v2382, %v2917
        %v3023 = vmul.bf16 %v2383, %v2919
        %v3024 = vmul.bf16 %v2384, %v2921
        %v3025 = vmul.bf16 %v2385, %v2923
        %v3026 = vmul.bf16 %v2386, %v2925
        %v3027 = vmul.bf16 %v2387, %v2927
        %v3028 = vmul.bf16 %v2388, %v2929
        %v3029 = vmul.bf16 %v2389, %v2931
        %v3030 = vmul.bf16 %v2390, %v2933
        %v3031 = vmul.bf16 %v2391, %v2935
        %v3032 = vmul.bf16 %v2392, %v2937
        %v3033 = vmul.bf16 %v2393, %v2939
        %v3034 = vmul.bf16 %v2394, %v2941
        %v3035 = vmul.bf16 %v2395, %v2943
        %v3036 = vmul.bf16 %v2396, %v2945
        %v3037 = vmul.bf16 %v2397, %v2947
        %v3038 = vmul.bf16 %v2398, %v2949
        %v3039 = vmul.bf16 %v2399, %v2951
        %v3040 = vmul.bf16 %v2400, %v2953
        %v3041 = vmul.bf16 %v2401, %v2955
        %v3042 = vmul.bf16 %v2402, %v2957
        %v3043 = vmul.bf16 %v2403, %v2959
        %v3044 = vmul.bf16 %v2404, %v2961
        %v3045 = vmul.bf16 %v2405, %v2963
        %v3046 = vmul.bf16 %v2406, %v2965
        %v3047 = vmul.bf16 %v2407, %v2967
        %s3048 = sadd.s32 %s25, %s26
        %s3049 = smul.u32 %s3048, 64
        %v3050 = vlaneseq
        %v3051 = vand.u32 %v3050, 127
        %v3052 = vstv %s3049
        %v3053 = vadd.s32 %v3052, %v3051
        %vm3054 = vcmp.lt.s32.totalorder %v3053, 64
        %v3055 = vsel %vm3054, 1.0, 0.0
        %v3056 = vpack.c.bf16 %v3055, %v3055
        %vm3057 = vcmask 523264
        %v3059 = vsel %vm3057, %v3056, 0
        %3061 = vmatprep.subr.bf16.mxu0 %v2969
        %3062 = vmatpush1.bf16.msra.mxu0 %v2968
        %3063 = vmatprep.subr.bf16.mxu0 %v2989
        %3064 = vmatpush1.bf16.msra.mxu0 %v2988
        %3065 = vmatprep.subr.bf16.mxu0 %v3009
        %3066 = vmatpush1.bf16.msra.mxu0 %v3008
        %3067 = vmatprep.subr.bf16.mxu0 %v3029
        %3068 = vmatpush1.bf16.msra.mxu0 %v3028
        %3069 = vmatprep.subr.bf16.mxu0 0
        %3070 = vmatpush1.bf16.msra.mxu0 0
        %3071 = vmatprep.subr.bf16.mxu0 0
        %3072 = vmatpush1.bf16.msra.mxu0 0
        %3073 = vmatprep.subr.bf16.mxu0 0
        %3074 = vmatpush1.bf16.msra.mxu0 0
        %3075 = vmatprep.subr.bf16.mxu0 0
        %3076 = vmatpush1.bf16.msra.mxu0 0
        %3077 = vmatprep.subr.bf16.mxu0 0
        %3078 = vmatpush1.bf16.msra.mxu0 0
        %3079 = vmatprep.subr.bf16.mxu0 0
        %3080 = vmatpush1.bf16.msra.mxu0 0
        %3081 = vmatprep.subr.bf16.mxu0 0
        %3082 = vmatpush1.bf16.msra.mxu0 0
        %3083 = vmatprep.subr.bf16.mxu0 0
        %3084 = vmatpush1.bf16.msra.mxu0 0
        %3085 = vmatprep.subr.bf16.mxu0 0
        %3086 = vmatpush1.bf16.msra.mxu0 0
        %3087 = vmatprep.subr.bf16.mxu0 0
        %3088 = vmatpush1.bf16.msra.mxu0 0
        %3089 = vmatprep.subr.bf16.mxu0 0
        %3090 = vmatpush1.bf16.msra.mxu0 0
        %3091 = vmatprep.subr.bf16.mxu0 0
        %3092 = vmatpush1.bf16.msra.mxu0 0
        %3093 = vmatprep.mubr.bf16.mxu0 0
        %3094 = vmatmul.mubr.bf16.gmra.mrb[0].mxu0 %v3059
        %v3095 = vpop.f32.mrb[0].mxu0
        %v3096 = vadd.f32 0.0, %v3095
        %v3097 = vpop.f32.mrb[0].mxu0
        %v3098 = vadd.f32 0.0, %v3097
        %v3099 = vpop.f32.mrb[0].mxu0
        %v3100 = vpop.f32.mrb[0].mxu0
        %3101 = vdwg.mxu0
        %3102 = vmatprep.subr.bf16.mxu0 %v2971
        %3103 = vmatpush1.bf16.msra.mxu0 %v2970
        %3104 = vmatprep.subr.bf16.mxu0 %v2991
        %3105 = vmatpush1.bf16.msra.mxu0 %v2990
        %3106 = vmatprep.subr.bf16.mxu0 %v3011
        %3107 = vmatpush1.bf16.msra.mxu0 %v3010
        %3108 = vmatprep.subr.bf16.mxu0 %v3031
        %3109 = vmatpush1.bf16.msra.mxu0 %v3030
        %3110 = vmatprep.subr.bf16.mxu0 0
        %3111 = vmatpush1.bf16.msra.mxu0 0
        %3112 = vmatprep.subr.bf16.mxu0 0
        %3113 = vmatpush1.bf16.msra.mxu0 0
        %3114 = vmatprep.subr.bf16.mxu0 0
        %3115 = vmatpush1.bf16.msra.mxu0 0
        %3116 = vmatprep.subr.bf16.mxu0 0
        %3117 = vmatpush1.bf16.msra.mxu0 0
        %3118 = vmatprep.subr.bf16.mxu0 0
        %3119 = vmatpush1.bf16.msra.mxu0 0
        %3120 = vmatprep.subr.bf16.mxu0 0
        %3121 = vmatpush1.bf16.msra.mxu0 0
        %3122 = vmatprep.subr.bf16.mxu0 0
        %3123 = vmatpush1.bf16.msra.mxu0 0
        %3124 = vmatprep.subr.bf16.mxu0 0
        %3125 = vmatpush1.bf16.msra.mxu0 0
        %3126 = vmatprep.subr.bf16.mxu0 0
        %3127 = vmatpush1.bf16.msra.mxu0 0
        %3128 = vmatprep.subr.bf16.mxu0 0
        %3129 = vmatpush1.bf16.msra.mxu0 0
        %3130 = vmatprep.subr.bf16.mxu0 0
        %3131 = vmatpush1.bf16.msra.mxu0 0
        %3132 = vmatprep.subr.bf16.mxu0 0
        %3133 = vmatpush1.bf16.msra.mxu0 0
        %3134 = vmatprep.mubr.bf16.mxu0 0
        %3135 = vmatmul.mubr.bf16.gmra.mrb[0].mxu0 %v3059
        %v3136 = vpop.f32.mrb[0].mxu0
        %v3137 = vadd.f32 0.0, %v3136
        %v3138 = vpop.f32.mrb[0].mxu0
        %v3139 = vadd.f32 0.0, %v3138
        %v3140 = vpop.f32.mrb[0].mxu0
        %v3141 = vpop.f32.mrb[0].mxu0
        %3142 = vdwg.mxu0
        %3143 = vmatprep.subr.bf16.mxu0 %v2973
        %3144 = vmatpush1.bf16.msra.mxu0 %v2972
        %3145 = vmatprep.subr.bf16.mxu0 %v2993
        %3146 = vmatpush1.bf16.msra.mxu0 %v2992
        %3147 = vmatprep.subr.bf16.mxu0 %v3013
        %3148 = vmatpush1.bf16.msra.mxu0 %v3012
        %3149 = vmatprep.subr.bf16.mxu0 %v3033
        %3150 = vmatpush1.bf16.msra.mxu0 %v3032
        %3151 = vmatprep.subr.bf16.mxu0 0
        %3152 = vmatpush1.bf16.msra.mxu0 0
        %3153 = vmatprep.subr.bf16.mxu0 0
        %3154 = vmatpush1.bf16.msra.mxu0 0
        %3155 = vmatprep.subr.bf16.mxu0 0
        %3156 = vmatpush1.bf16.msra.mxu0 0
        %3157 = vmatprep.subr.bf16.mxu0 0
        %3158 = vmatpush1.bf16.msra.mxu0 0
        %3159 = vmatprep.subr.bf16.mxu0 0
        %3160 = vmatpush1.bf16.msra.mxu0 0
        %3161 = vmatprep.subr.bf16.mxu0 0
        %3162 = vmatpush1.bf16.msra.mxu0 0
        %3163 = vmatprep.subr.bf16.mxu0 0
        %3164 = vmatpush1.bf16.msra.mxu0 0
        %3165 = vmatprep.subr.bf16.mxu0 0
        %3166 = vmatpush1.bf16.msra.mxu0 0
        %3167 = vmatprep.subr.bf16.mxu0 0
        %3168 = vmatpush1.bf16.msra.mxu0 0
        %3169 = vmatprep.subr.bf16.mxu0 0
        %3170 = vmatpush1.bf16.msra.mxu0 0
        %3171 = vmatprep.subr.bf16.mxu0 0
        %3172 = vmatpush1.bf16.msra.mxu0 0
        %3173 = vmatprep.subr.bf16.mxu0 0
        %3174 = vmatpush1.bf16.msra.mxu0 0
        %3175 = vmatprep.mubr.bf16.mxu0 0
        %3176 = vmatmul.mubr.bf16.gmra.mrb[0].mxu0 %v3059
        %v3177 = vpop.f32.mrb[0].mxu0
        %v3178 = vadd.f32 0.0, %v3177
        %v3179 = vpop.f32.mrb[0].mxu0
        %v3180 = vadd.f32 0.0, %v3179
        %v3181 = vpop.f32.mrb[0].mxu0
        %v3182 = vpop.f32.mrb[0].mxu0
        %3183 = vdwg.mxu0
        %3184 = vmatprep.subr.bf16.mxu0 %v2975
        %3185 = vmatpush1.bf16.msra.mxu0 %v2974
        %3186 = vmatprep.subr.bf16.mxu0 %v2995
        %3187 = vmatpush1.bf16.msra.mxu0 %v2994
        %3188 = vmatprep.subr.bf16.mxu0 %v3015
        %3189 = vmatpush1.bf16.msra.mxu0 %v3014
        %3190 = vmatprep.subr.bf16.mxu0 %v3035
        %3191 = vmatpush1.bf16.msra.mxu0 %v3034
        %3192 = vmatprep.subr.bf16.mxu0 0
        %3193 = vmatpush1.bf16.msra.mxu0 0
        %3194 = vmatprep.subr.bf16.mxu0 0
        %3195 = vmatpush1.bf16.msra.mxu0 0
        %3196 = vmatprep.subr.bf16.mxu0 0
        %3197 = vmatpush1.bf16.msra.mxu0 0
        %3198 = vmatprep.subr.bf16.mxu0 0
        %3199 = vmatpush1.bf16.msra.mxu0 0
        %3200 = vmatprep.subr.bf16.mxu0 0
        %3201 = vmatpush1.bf16.msra.mxu0 0
        %3202 = vmatprep.subr.bf16.mxu0 0
        %3203 = vmatpush1.bf16.msra.mxu0 0
        %3204 = vmatprep.subr.bf16.mxu0 0
        %3205 = vmatpush1.bf16.msra.mxu0 0
        %3206 = vmatprep.subr.bf16.mxu0 0
        %3207 = vmatpush1.bf16.msra.mxu0 0
        %3208 = vmatprep.subr.bf16.mxu0 0
        %3209 = vmatpush1.bf16.msra.mxu0 0
        %3210 = vmatprep.subr.bf16.mxu0 0
        %3211 = vmatpush1.bf16.msra.mxu0 0
        %3212 = vmatprep.subr.bf16.mxu0 0
        %3213 = vmatpush1.bf16.msra.mxu0 0
        %3214 = vmatprep.subr.bf16.mxu0 0
        %3215 = vmatpush1.bf16.msra.mxu0 0
        %3216 = vmatprep.mubr.bf16.mxu0 0
        %3217 = vmatmul.mubr.bf16.gmra.mrb[0].mxu0 %v3059
        %v3218 = vpop.f32.mrb[0].mxu0
        %v3219 = vadd.f32 0.0, %v3218
        %v3220 = vpop.f32.mrb[0].mxu0
        %v3221 = vadd.f32 0.0, %v3220
        %v3222 = vpop.f32.mrb[0].mxu0
        %v3223 = vpop.f32.mrb[0].mxu0
        %3224 = vdwg.mxu0
        %3225 = vmatprep.subr.bf16.mxu0 %v2977
        %3226 = vmatpush1.bf16.msra.mxu0 %v2976
        %3227 = vmatprep.subr.bf16.mxu0 %v2997
        %3228 = vmatpush1.bf16.msra.mxu0 %v2996
        %3229 = vmatprep.subr.bf16.mxu0 %v3017
        %3230 = vmatpush1.bf16.msra.mxu0 %v3016
        %3231 = vmatprep.subr.bf16.mxu0 %v3037
        %3232 = vmatpush1.bf16.msra.mxu0 %v3036
        %3233 = vmatprep.subr.bf16.mxu0 0
        %3234 = vmatpush1.bf16.msra.mxu0 0
        %3235 = vmatprep.subr.bf16.mxu0 0
        %3236 = vmatpush1.bf16.msra.mxu0 0
        %3237 = vmatprep.subr.bf16.mxu0 0
        %3238 = vmatpush1.bf16.msra.mxu0 0
        %3239 = vmatprep.subr.bf16.mxu0 0
        %3240 = vmatpush1.bf16.msra.mxu0 0
        %3241 = vmatprep.subr.bf16.mxu0 0
        %3242 = vmatpush1.bf16.msra.mxu0 0
        %3243 = vmatprep.subr.bf16.mxu0 0
        %3244 = vmatpush1.bf16.msra.mxu0 0
        %3245 = vmatprep.subr.bf16.mxu0 0
        %3246 = vmatpush1.bf16.msra.mxu0 0
        %3247 = vmatprep.subr.bf16.mxu0 0
        %3248 = vmatpush1.bf16.msra.mxu0 0
        %3249 = vmatprep.subr.bf16.mxu0 0
        %3250 = vmatpush1.bf16.msra.mxu0 0
        %3251 = vmatprep.subr.bf16.mxu0 0
        %3252 = vmatpush1.bf16.msra.mxu0 0
        %3253 = vmatprep.subr.bf16.mxu0 0
        %3254 = vmatpush1.bf16.msra.mxu0 0
        %3255 = vmatprep.subr.bf16.mxu0 0
        %3256 = vmatpush1.bf16.msra.mxu0 0
        %3257 = vmatprep.mubr.bf16.mxu0 0
        %3258 = vmatmul.mubr.bf16.gmra.mrb[0].mxu0 %v3059
        %v3259 = vpop.f32.mrb[0].mxu0
        %v3260 = vadd.f32 0.0, %v3259
        %v3261 = vpop.f32.mrb[0].mxu0
        %v3262 = vadd.f32 0.0, %v3261
        %v3263 = vpop.f32.mrb[0].mxu0
        %v3264 = vpop.f32.mrb[0].mxu0
        %3265 = vdwg.mxu0
        %3266 = vmatprep.subr.bf16.mxu0 %v2979
        %3267 = vmatpush1.bf16.msra.mxu0 %v2978
        %3268 = vmatprep.subr.bf16.mxu0 %v2999
        %3269 = vmatpush1.bf16.msra.mxu0 %v2998
        %3270 = vmatprep.subr.bf16.mxu0 %v3019
        %3271 = vmatpush1.bf16.msra.mxu0 %v3018
        %3272 = vmatprep.subr.bf16.mxu0 %v3039
        %3273 = vmatpush1.bf16.msra.mxu0 %v3038
        %3274 = vmatprep.subr.bf16.mxu0 0
        %3275 = vmatpush1.bf16.msra.mxu0 0
        %3276 = vmatprep.subr.bf16.mxu0 0
        %3277 = vmatpush1.bf16.msra.mxu0 0
        %3278 = vmatprep.subr.bf16.mxu0 0
        %3279 = vmatpush1.bf16.msra.mxu0 0
        %3280 = vmatprep.subr.bf16.mxu0 0
        %3281 = vmatpush1.bf16.msra.mxu0 0
        %3282 = vmatprep.subr.bf16.mxu0 0
        %3283 = vmatpush1.bf16.msra.mxu0 0
        %3284 = vmatprep.subr.bf16.mxu0 0
        %3285 = vmatpush1.bf16.msra.mxu0 0
        %3286 = vmatprep.subr.bf16.mxu0 0
        %3287 = vmatpush1.bf16.msra.mxu0 0
        %3288 = vmatprep.subr.bf16.mxu0 0
        %3289 = vmatpush1.bf16.msra.mxu0 0
        %3290 = vmatprep.subr.bf16.mxu0 0
        %3291 = vmatpush1.bf16.msra.mxu0 0
        %3292 = vmatprep.subr.bf16.mxu0 0
        %3293 = vmatpush1.bf16.msra.mxu0 0
        %3294 = vmatprep.subr.bf16.mxu0 0
        %3295 = vmatpush1.bf16.msra.mxu0 0
        %3296 = vmatprep.subr.bf16.mxu0 0
        %3297 = vmatpush1.bf16.msra.mxu0 0
        %3298 = vmatprep.mubr.bf16.mxu0 0
        %3299 = vmatmul.mubr.bf16.gmra.mrb[0].mxu0 %v3059
        %v3300 = vpop.f32.mrb[0].mxu0
        %v3301 = vadd.f32 0.0, %v3300
        %v3302 = vpop.f32.mrb[0].mxu0
        %v3303 = vadd.f32 0.0, %v3302
        %v3304 = vpop.f32.mrb[0].mxu0
        %v3305 = vpop.f32.mrb[0].mxu0
        %3306 = vdwg.mxu0
        %3307 = vmatprep.subr.bf16.mxu0 %v2981
        %3308 = vmatpush1.bf16.msra.mxu0 %v2980
        %3309 = vmatprep.subr.bf16.mxu0 %v3001
        %3310 = vmatpush1.bf16.msra.mxu0 %v3000
        %3311 = vmatprep.subr.bf16.mxu0 %v3021
        %3312 = vmatpush1.bf16.msra.mxu0 %v3020
        %3313 = vmatprep.subr.bf16.mxu0 %v3041
        %3314 = vmatpush1.bf16.msra.mxu0 %v3040
        %3315 = vmatprep.subr.bf16.mxu0 0
        %3316 = vmatpush1.bf16.msra.mxu0 0
        %3317 = vmatprep.subr.bf16.mxu0 0
        %3318 = vmatpush1.bf16.msra.mxu0 0
        %3319 = vmatprep.subr.bf16.mxu0 0
        %3320 = vmatpush1.bf16.msra.mxu0 0
        %3321 = vmatprep.subr.bf16.mxu0 0
        %3322 = vmatpush1.bf16.msra.mxu0 0
        %3323 = vmatprep.subr.bf16.mxu0 0
        %3324 = vmatpush1.bf16.msra.mxu0 0
        %3325 = vmatprep.subr.bf16.mxu0 0
        %3326 = vmatpush1.bf16.msra.mxu0 0
        %3327 = vmatprep.subr.bf16.mxu0 0
        %3328 = vmatpush1.bf16.msra.mxu0 0
        %3329 = vmatprep.subr.bf16.mxu0 0
        %3330 = vmatpush1.bf16.msra.mxu0 0
        %3331 = vmatprep.subr.bf16.mxu0 0
        %3332 = vmatpush1.bf16.msra.mxu0 0
        %3333 = vmatprep.subr.bf16.mxu0 0
        %3334 = vmatpush1.bf16.msra.mxu0 0
        %3335 = vmatprep.subr.bf16.mxu0 0
        %3336 = vmatpush1.bf16.msra.mxu0 0
        %3337 = vmatprep.subr.bf16.mxu0 0
        %3338 = vmatpush1.bf16.msra.mxu0 0
        %3339 = vmatprep.mubr.bf16.mxu0 0
        %3340 = vmatmul.mubr.bf16.gmra.mrb[0].mxu0 %v3059
        %v3341 = vpop.f32.mrb[0].mxu0
        %v3342 = vadd.f32 0.0, %v3341
        %v3343 = vpop.f32.mrb[0].mxu0
        %v3344 = vadd.f32 0.0, %v3343
        %v3345 = vpop.f32.mrb[0].mxu0
        %v3346 = vpop.f32.mrb[0].mxu0
        %3347 = vdwg.mxu0
        %3348 = vmatprep.subr.bf16.mxu0 %v2983
        %3349 = vmatpush1.bf16.msra.mxu0 %v2982
        %3350 = vmatprep.subr.bf16.mxu0 %v3003
        %3351 = vmatpush1.bf16.msra.mxu0 %v3002
        %3352 = vmatprep.subr.bf16.mxu0 %v3023
        %3353 = vmatpush1.bf16.msra.mxu0 %v3022
        %3354 = vmatprep.subr.bf16.mxu0 %v3043
        %3355 = vmatpush1.bf16.msra.mxu0 %v3042
        %3356 = vmatprep.subr.bf16.mxu0 0
        %3357 = vmatpush1.bf16.msra.mxu0 0
        %3358 = vmatprep.subr.bf16.mxu0 0
        %3359 = vmatpush1.bf16.msra.mxu0 0
        %3360 = vmatprep.subr.bf16.mxu0 0
        %3361 = vmatpush1.bf16.msra.mxu0 0
        %3362 = vmatprep.subr.bf16.mxu0 0
        %3363 = vmatpush1.bf16.msra.mxu0 0
        %3364 = vmatprep.subr.bf16.mxu0 0
        %3365 = vmatpush1.bf16.msra.mxu0 0
        %3366 = vmatprep.subr.bf16.mxu0 0
        %3367 = vmatpush1.bf16.msra.mxu0 0
        %3368 = vmatprep.subr.bf16.mxu0 0
        %3369 = vmatpush1.bf16.msra.mxu0 0
        %3370 = vmatprep.subr.bf16.mxu0 0
        %3371 = vmatpush1.bf16.msra.mxu0 0
        %3372 = vmatprep.subr.bf16.mxu0 0
        %3373 = vmatpush1.bf16.msra.mxu0 0
        %3374 = vmatprep.subr.bf16.mxu0 0
        %3375 = vmatpush1.bf16.msra.mxu0 0
        %3376 = vmatprep.subr.bf16.mxu0 0
        %3377 = vmatpush1.bf16.msra.mxu0 0
        %3378 = vmatprep.subr.bf16.mxu0 0
        %3379 = vmatpush1.bf16.msra.mxu0 0
        %3380 = vmatprep.mubr.bf16.mxu0 0
        %3381 = vmatmul.mubr.bf16.gmra.mrb[0].mxu0 %v3059
        %v3382 = vpop.f32.mrb[0].mxu0
        %v3383 = vadd.f32 0.0, %v3382
        %v3384 = vpop.f32.mrb[0].mxu0
        %v3385 = vadd.f32 0.0, %v3384
        %v3386 = vpop.f32.mrb[0].mxu0
        %v3387 = vpop.f32.mrb[0].mxu0
        %3388 = vdwg.mxu0
        %3389 = vmatprep.subr.bf16.mxu0 %v2985
        %3390 = vmatpush1.bf16.msra.mxu0 %v2984
        %3391 = vmatprep.subr.bf16.mxu0 %v3005
        %3392 = vmatpush1.bf16.msra.mxu0 %v3004
        %3393 = vmatprep.subr.bf16.mxu0 %v3025
        %3394 = vmatpush1.bf16.msra.mxu0 %v3024
        %3395 = vmatprep.subr.bf16.mxu0 %v3045
        %3396 = vmatpush1.bf16.msra.mxu0 %v3044
        %3397 = vmatprep.subr.bf16.mxu0 0
        %3398 = vmatpush1.bf16.msra.mxu0 0
        %3399 = vmatprep.subr.bf16.mxu0 0
        %3400 = vmatpush1.bf16.msra.mxu0 0
        %3401 = vmatprep.subr.bf16.mxu0 0
        %3402 = vmatpush1.bf16.msra.mxu0 0
        %3403 = vmatprep.subr.bf16.mxu0 0
        %3404 = vmatpush1.bf16.msra.mxu0 0
        %3405 = vmatprep.subr.bf16.mxu0 0
        %3406 = vmatpush1.bf16.msra.mxu0 0
        %3407 = vmatprep.subr.bf16.mxu0 0
        %3408 = vmatpush1.bf16.msra.mxu0 0
        %3409 = vmatprep.subr.bf16.mxu0 0
        %3410 = vmatpush1.bf16.msra.mxu0 0
        %3411 = vmatprep.subr.bf16.mxu0 0
        %3412 = vmatpush1.bf16.msra.mxu0 0
        %3413 = vmatprep.subr.bf16.mxu0 0
        %3414 = vmatpush1.bf16.msra.mxu0 0
        %3415 = vmatprep.subr.bf16.mxu0 0
        %3416 = vmatpush1.bf16.msra.mxu0 0
        %3417 = vmatprep.subr.bf16.mxu0 0
        %3418 = vmatpush1.bf16.msra.mxu0 0
        %3419 = vmatprep.subr.bf16.mxu0 0
        %3420 = vmatpush1.bf16.msra.mxu0 0
        %3421 = vmatprep.mubr.bf16.mxu0 0
        %3422 = vmatmul.mubr.bf16.gmra.mrb[0].mxu0 %v3059
        %v3423 = vpop.f32.mrb[0].mxu0
        %v3424 = vadd.f32 0.0, %v3423
        %v3425 = vpop.f32.mrb[0].mxu0
        %v3426 = vadd.f32 0.0, %v3425
        %v3427 = vpop.f32.mrb[0].mxu0
        %v3428 = vpop.f32.mrb[0].mxu0
        %3429 = vdwg.mxu0
        %3430 = vmatprep.subr.bf16.mxu0 %v2987
        %3431 = vmatpush1.bf16.msra.mxu0 %v2986
        %3432 = vmatprep.subr.bf16.mxu0 %v3007
        %3433 = vmatpush1.bf16.msra.mxu0 %v3006
        %3434 = vmatprep.subr.bf16.mxu0 %v3027
        %3435 = vmatpush1.bf16.msra.mxu0 %v3026
        %3436 = vmatprep.subr.bf16.mxu0 %v3047
        %3437 = vmatpush1.bf16.msra.mxu0 %v3046
        %3438 = vmatprep.subr.bf16.mxu0 0
        %3439 = vmatpush1.bf16.msra.mxu0 0
        %3440 = vmatprep.subr.bf16.mxu0 0
        %3441 = vmatpush1.bf16.msra.mxu0 0
        %3442 = vmatprep.subr.bf16.mxu0 0
        %3443 = vmatpush1.bf16.msra.mxu0 0
        %3444 = vmatprep.subr.bf16.mxu0 0
        %3445 = vmatpush1.bf16.msra.mxu0 0
        %3446 = vmatprep.subr.bf16.mxu0 0
        %3447 = vmatpush1.bf16.msra.mxu0 0
        %3448 = vmatprep.subr.bf16.mxu0 0
        %3449 = vmatpush1.bf16.msra.mxu0 0
        %3450 = vmatprep.subr.bf16.mxu0 0
        %3451 = vmatpush1.bf16.msra.mxu0 0
        %3452 = vmatprep.subr.bf16.mxu0 0
        %3453 = vmatpush1.bf16.msra.mxu0 0
        %3454 = vmatprep.subr.bf16.mxu0 0
        %3455 = vmatpush1.bf16.msra.mxu0 0
        %3456 = vmatprep.subr.bf16.mxu0 0
        %3457 = vmatpush1.bf16.msra.mxu0 0
        %3458 = vmatprep.subr.bf16.mxu0 0
        %3459 = vmatpush1.bf16.msra.mxu0 0
        %3460 = vmatprep.subr.bf16.mxu0 0
        %3461 = vmatpush1.bf16.msra.mxu0 0
        %3462 = vmatprep.mubr.bf16.mxu0 0
        %3463 = vmatmul.mubr.bf16.gmra.mrb[0].mxu0 %v3059
        %v3464 = vpop.f32.mrb[0].mxu0
        %v3465 = vadd.f32 0.0, %v3464
        %v3466 = vpop.f32.mrb[0].mxu0
        %v3467 = vadd.f32 0.0, %v3466
        %v3468 = vpop.f32.mrb[0].mxu0
        %v3469 = vpop.f32.mrb[0].mxu0
        %3470 = vdwg.mxu0
        %v3471 = vld [vmem:[%s329] sm:$0xff]
        %v3472 = vld [vmem:[%s329 + $0x8] sm:$0xff]
        %v3473 = vld [vmem:[%s329 + $0x10] sm:$0xf]
        %v3494 = vcombine.low %v3096, %v3098
        %v3495 = vcombine.low %v3137, %v3139
        %v3496 = vcombine.low %v3178, %v3180
        %v3497 = vcombine.low %v3219, %v3221
        %v3499 = vunpack.c.l.s4 1966171168
        %v3500 = vunpack.c.0.s8 %v3499
        %v3501 = vlaneseq
        %v3502 = vshrl.u32 %v3501, 7
        %v3503 = vsub.s32 %v3500, %v3502
        %v3504 = vrot.slane %v3494, %v3503
        %v3506 = vunpack.c.l.s4 1966171168
        %v3507 = vunpack.c.0.s8 %v3506
        %v3508 = vlaneseq
        %v3509 = vshrl.u32 %v3508, 7
        %v3510 = vsub.s32 %v3507, %v3509
        %v3511 = vrot.slane %v3495, %v3510
        %v3513 = vunpack.c.l.s4 1966171168
        %v3514 = vunpack.c.0.s8 %v3513
        %v3515 = vlaneseq
        %v3516 = vshrl.u32 %v3515, 7
        %v3517 = vsub.s32 %v3514, %v3516
        %v3518 = vrot.slane %v3496, %v3517
        %v3520 = vunpack.c.l.s4 1966171168
        %v3521 = vunpack.c.0.s8 %v3520
        %v3522 = vlaneseq
        %v3523 = vshrl.u32 %v3522, 7
        %v3524 = vsub.s32 %v3521, %v3523
        %v3525 = vrot.slane %v3497, %v3524
        %v3526 = vcombine.low %v3504, %v3511
        %v3527 = vcombine.low %v3518, %v3525
        %v3529 = vunpack.c.l.s4 1966171168
        %v3530 = vunpack.c.0.s8 %v3529
        %v3531 = vlaneseq
        %v3532 = vshrl.u32 %v3531, 7
        %v3533 = vsub.s32 %v3530, %v3532
        %v3534 = vrot.slane %v3526, %v3533
        %v3536 = vunpack.c.l.s4 1966171168
        %v3537 = vunpack.c.0.s8 %v3536
        %v3538 = vlaneseq
        %v3539 = vshrl.u32 %v3538, 7
        %v3540 = vsub.s32 %v3537, %v3539
        %v3541 = vrot.slane %v3527, %v3540
        %v3542 = vcombine.low %v3534, %v3541
        %v3543 = vcombine.low %v3260, %v3262
        %v3544 = vcombine.low %v3301, %v3303
        %v3545 = vcombine.low %v3342, %v3344
        %v3546 = vcombine.low %v3383, %v3385
        %v3548 = vunpack.c.l.s4 1966171168
        %v3549 = vunpack.c.0.s8 %v3548
        %v3550 = vlaneseq
        %v3551 = vshrl.u32 %v3550, 7
        %v3552 = vsub.s32 %v3549, %v3551
        %v3553 = vrot.slane %v3543, %v3552
        %v3555 = vunpack.c.l.s4 1966171168
        %v3556 = vunpack.c.0.s8 %v3555
        %v3557 = vlaneseq
        %v3558 = vshrl.u32 %v3557, 7
        %v3559 = vsub.s32 %v3556, %v3558
        %v3560 = vrot.slane %v3544, %v3559
        %v3562 = vunpack.c.l.s4 1966171168
        %v3563 = vunpack.c.0.s8 %v3562
        %v3564 = vlaneseq
        %v3565 = vshrl.u32 %v3564, 7
        %v3566 = vsub.s32 %v3563, %v3565
        %v3567 = vrot.slane %v3545, %v3566
        %v3569 = vunpack.c.l.s4 1966171168
        %v3570 = vunpack.c.0.s8 %v3569
        %v3571 = vlaneseq
        %v3572 = vshrl.u32 %v3571, 7
        %v3573 = vsub.s32 %v3570, %v3572
        %v3574 = vrot.slane %v3546, %v3573
        %v3575 = vcombine.low %v3553, %v3560
        %v3576 = vcombine.low %v3567, %v3574
        %v3578 = vunpack.c.l.s4 1966171168
        %v3579 = vunpack.c.0.s8 %v3578
        %v3580 = vlaneseq
        %v3581 = vshrl.u32 %v3580, 7
        %v3582 = vsub.s32 %v3579, %v3581
        %v3583 = vrot.slane %v3575, %v3582
        %v3585 = vunpack.c.l.s4 1966171168
        %v3586 = vunpack.c.0.s8 %v3585
        %v3587 = vlaneseq
        %v3588 = vshrl.u32 %v3587, 7
        %v3589 = vsub.s32 %v3586, %v3588
        %v3590 = vrot.slane %v3576, %v3589
        %v3591 = vcombine.low %v3583, %v3590
        %v3592 = vcombine.low %v3424, %v3426
        %v3593 = vcombine.low %v3465, %v3467
        %v3595 = vunpack.c.l.s4 1966171168
        %v3596 = vunpack.c.0.s8 %v3595
        %v3597 = vlaneseq
        %v3598 = vshrl.u32 %v3597, 7
        %v3599 = vsub.s32 %v3596, %v3598
        %v3600 = vrot.slane %v3592, %v3599
        %v3602 = vunpack.c.l.s4 1966171168
        %v3603 = vunpack.c.0.s8 %v3602
        %v3604 = vlaneseq
        %v3605 = vshrl.u32 %v3604, 7
        %v3606 = vsub.s32 %v3603, %v3605
        %v3607 = vrot.slane %v3593, %v3606
        %v3608 = vcombine.low %v3600, %v3607
        %v3610 = vunpack.c.l.s4 1966171168
        %v3611 = vunpack.c.0.s8 %v3610
        %v3612 = vlaneseq
        %v3613 = vshrl.u32 %v3612, 7
        %v3614 = vsub.s32 %v3611, %v3613
        %v3615 = vrot.slane %v3608, %v3614
        %v3619 = vadd.f32 %v3471, %v3542
        %v3620 = vadd.f32 %v3472, %v3591
        %v3621 = vadd.f32 %v3473, %v3615
        %3622 = vst [vmem:[%s329] sm:$0xff] %v3619
        %3623 = vst [vmem:[%s329 + $0x8] sm:$0xff] %v3620
        %v3624 = vlaneseq
        %vm3625 = vcmp.ge.s32.totalorder %v3624, 0
        %vm3626 = vcmp.lt.s32.totalorder %v3624, 512
        %vm3627 = vmand %vm3625, %vm3626
        %3628 = vst.msk [vmem:[%s329 + $0x10] sm:$0xf] %vm3627, %v3621
        // Predicated region
        $region61: #{efficient_network_forward.2} parent=39 // pred_check
          %p3629 = pneg %p332
        $region62: #{efficient_network_forward.2} parent=39 // pred_check_branch
          %3631 = sbr.rel (%p3629) target = $region64
        $region63: #{efficient_network_forward.2} parent=39 // pred_region
          %v3632 = vld [vmem:[%s329] sm:$0xff]
          %v3633 = vld [vmem:[%s329 + $0x8] sm:$0xff]
          %v3634 = vld [vmem:[%s329 + $0x10] sm:$0xf]
          %v3635 = vmul.f32 %v3632, 0.015625
          %v3636 = vmul.f32 %v3633, 0.015625
          %v3637 = vmul.f32 %v3634, 0.015625
          %3638 = vst [vmem:[%s329] sm:$0xff] %v3635
          %3639 = vst [vmem:[%s329 + $0x8] sm:$0xff] %v3636
          %3640 = vst.msk [vmem:[%s329 + $0x10] sm:$0xf] %vm3627, %v3637
        $region64: #{efficient_network_forward.2} parent=39 // pred_fallthru
          _
        %p3641 = scmp.lt.s32.totalorder %s25, 1
        %s3642 = scalar_select %p3641, %s25, 1
        %p3643 = scmp.lt.s32.totalorder %s24, 1
        %s3644 = scalar_select %p3643, %s24, 1
        %s3645 = smul.addr %s3644, 20
        %s3646 = smul.addr %s3642, 40
        %s3647 = sadd.s32 %s3645, %s3646
        %s3648 = scalar_lea.vmem %s5, %s3647
        // Predicated region
        $region65: #{efficient_network_forward.2} parent=39 // pred_check
          %p3649 = pneg %p172
        $region66: #{efficient_network_forward.2} parent=39 // pred_check_branch
          %3651 = sbr.rel (%p3649) target = $region68
        $region67: #{efficient_network_forward.2} parent=39 // pred_region
          _
        $region68: #{efficient_network_forward.2} parent=39 // pred_fallthru
          _
      $region40: #{efficient_network_forward.2} parent=5 // pred_fallthru
        _
      %p3652 = scmp.le.s32.totalorder 2, %s14
      // Predicated region
      $region69: #{efficient_network_forward.2} parent=5 // pred_check
        %p3653 = pneg %p3652
      $region70: #{efficient_network_forward.2} parent=5 // pred_check_branch
        %3655 = sbr.rel (%p3653) target = $region72
      $region71: #{efficient_network_forward.2} parent=5 // pred_region
        %s3656 = ssub.s32 %s14, 2
        // Predicated region
        $region73: #{efficient_network_forward.2} parent=71 // pred_check
          %p3657 = pneg %p178
        $region74: #{efficient_network_forward.2} parent=71 // pred_check_branch
          %3659 = sbr.rel (%p3657) target = $region76
        $region75: #{efficient_network_forward.2} parent=71 // pred_region
          %p3660 = scmp.lt.s32.totalorder %s28, 1
          %s3661 = scalar_select %p3660, %s28, 1
          %p3662 = scmp.lt.s32.totalorder %s27, 1
          %s3663 = scalar_select %p3662, %s27, 1
          %s3664 = smul.addr %s3663, 20
          %s3665 = smul.addr %s3661, 40
          %s3666 = sadd.s32 %s3664, %s3665
          %s3667 = scalar_lea.vmem %s5, %s3666
        $region76: #{efficient_network_forward.2} parent=71 // pred_fallthru
          _
      $region72: #{efficient_network_forward.2} parent=5 // pred_fallthru
        _
    $region6: #{efficient_network_forward.2} parent=1 // loop_footer
      %s18 = sadd.s32 1, %s14
    $region7: #{efficient_network_forward.2} parent=1 // loop_footer_branch
      %13 = sbr.rel target = $region3
    $region8: #{efficient_network_forward.2} parent=1 // loop_exit
      _
    %3668 = vsyncpa [#allocation3], 1
    %s3669 = scalar_lea.sflag [#allocation3], 1
    %3670 = vsyncpa %s3669, 1
    %3671 = vsyncpa [#allocation5], 1
    %3672 = vsyncpa [#allocation8], 1

</llo_original>
